<compile_context>
chip_gen: v5e
topology: v5e:2x2
jax: 0.10.0
libtpu: 0.0.40
codegen_flags: <defaults>
</compile_context>

<pallas_src>
import math

import jax
import jax.numpy as jnp
from jax.experimental import pallas as pl
from jax.experimental.pallas import tpu as pltpu

# ---------------- small config (structurally identical to the real model) ----------------
BATCH = 2
CHANNELS = 3
IMAGE = 32
PATCH = 16
DIM = 128
DEPTH = 2
HEADS = 4
DIM_HEAD = DIM // HEADS          # 32   (original: dim // heads)
INNER = HEADS * DIM_HEAD         # 128  (== DIM, like the original 12*16 == 192)
MLP_DIM = 2 * DIM                # 256  (original: 2 * 192)
NPATCH = (IMAGE // PATCH) ** 2   # 4
SEQ = NPATCH + 1                 # 5    (cls token + patches)
SEQ_PAD = 8                      # sequence padded to the 8-sublane tile
IMGS_PER_STEP = 2                # one siamese pair per grid step
ROWS = IMGS_PER_STEP * SEQ_PAD   # 16 token rows per grid step
PATCH_DIM = PATCH * PATCH * CHANNELS  # 768
CLS_HIDDEN = 256
OUT_PAD = 128                    # lane-dense classifier output (col 0 is the real logit)
EPS = 1e-5                       # torch.nn.LayerNorm default eps
NEG_INF = -1e9


# ---------------- elementwise helpers (run inside the kernel) ----------------
def _layernorm(x, g, b):
    mu = jnp.mean(x, axis=-1, keepdims=True)
    var = jnp.mean(jnp.square(x - mu), axis=-1, keepdims=True)
    return (x - mu) * jax.lax.rsqrt(var + EPS) * g + b


# erf via Abramowitz–Stegun 7.1.26 (|err| < 1.5e-7): keeps parity with torch's exact-erf
# GELU; the exp goes to the EUP slot, the small polynomial rides the VALU slack.
_A1, _A2, _A3, _A4, _A5 = 0.254829592, -0.284496736, 1.421413741, -1.453152027, 1.061405429
_P = 0.3275911


def _erf(x):
    ax = jnp.abs(x)
    t = 1.0 / (1.0 + _P * ax)
    poly = ((((_A5 * t + _A4) * t + _A3) * t + _A2) * t + _A1) * t
    y = 1.0 - poly * jnp.exp(-ax * ax)
    return jnp.where(x >= 0, y, -y)


def _gelu_exact(x):
    return 0.5 * x * (1.0 + _erf(x * (1.0 / math.sqrt(2.0))))


# ---------------- fused siamese ViT + classifier kernel (one pair per grid step) ----------------
def siamese_kernel(patches_ref, base_ref, w_pe_ref,
                   ln1_g_ref, ln1_b_ref, w_qkv_ref, w_o_ref, b_o_ref,
                   ln2_g_ref, ln2_b_ref, w_ff1_ref, b_ff1_ref, w_ff2_ref, b_ff2_ref,
                   cg_ref, cb_ref, w1_ref, b1_ref, w2_ref, b2_ref,
                   out_ref):
    # Patch embedding for both images of the pair in one (ROWS, PATCH_DIM) matmul.
    # Rows 0 and SEQ..7 of each image are zero padding -> contribute 0 to the matmul.
    patches = patches_ref[0]                                            # (ROWS, PATCH_DIM)
    tok = jnp.dot(patches, w_pe_ref[...], preferred_element_type=jnp.float32)  # (ROWS, DIM)

    # Per-image additive base (row0: cls+pos[0]; rows 1..NPATCH: pos+bias; pad rows: 0)
    # broadcast over the two images of the pair -> no in-kernel sublane concat.
    x = tok.reshape(IMGS_PER_STEP, SEQ_PAD, DIM) + base_ref[...][None, :, :]
    x = x.reshape(ROWS, DIM)

    # Additive key mask so the softmax ignores padded key positions (>= SEQ).
    col = jax.lax.broadcasted_iota(jnp.int32, (SEQ_PAD, SEQ_PAD), 1)
    neg_mask = jnp.where(col < SEQ, 0.0, NEG_INF).astype(jnp.float32)   # (SEQ_PAD, SEQ_PAD)

    scale = DIM_HEAD ** -0.5
    for l in range(DEPTH):
        # ---- PreNorm multi-head attention + residual ----
        h = _layernorm(x, ln1_g_ref[l].reshape(1, DIM), ln1_b_ref[l].reshape(1, DIM))
        qkv = jnp.dot(h, w_qkv_ref[l], preferred_element_type=jnp.float32)   # (ROWS, 3*INNER)

        outs = []
        for img in range(IMGS_PER_STEP):
            r0 = img * SEQ_PAD
            q = qkv[r0:r0 + SEQ_PAD, 0:INNER].reshape(SEQ_PAD, HEADS, DIM_HEAD)
            k = qkv[r0:r0 + SEQ_PAD, INNER:2 * INNER].reshape(SEQ_PAD, HEADS, DIM_HEAD)
            v = qkv[r0:r0 + SEQ_PAD, 2 * INNER:3 * INNER].reshape(SEQ_PAD, HEADS, DIM_HEAD)
            # one relayout to head-major, then two head-batched contractions
            q = pltpu.einshape("shd->hsd", q)                           # (HEADS, SEQ_PAD, DH)
            k = pltpu.einshape("shd->hsd", k)
            v = pltpu.einshape("shd->hsd", v)
            s = jnp.einsum("hqd,hkd->hqk", q, k,
                           preferred_element_type=jnp.float32) * scale  # (HEADS, S, S)
            s = s + neg_mask[None, :, :]
            s = s - jnp.max(s, axis=-1, keepdims=True)
            e = jnp.exp(s)
            a = e * pl.reciprocal(jnp.sum(e, axis=-1, keepdims=True), approx=True)
            o = jnp.einsum("hqk,hkd->hqd", a, v,
                           preferred_element_type=jnp.float32)          # (HEADS, S, DH)
            outs.append(pltpu.einshape("hsd->shd", o).reshape(SEQ_PAD, INNER))
        o_all = jnp.concatenate(outs, axis=0)                           # (ROWS, INNER)
        o_all = jnp.dot(o_all, w_o_ref[l],
                        preferred_element_type=jnp.float32) + b_o_ref[l].reshape(1, DIM)
        x = x + o_all

        # ---- PreNorm feed-forward (GELU) + residual ----
        h = _layernorm(x, ln2_g_ref[l].reshape(1, DIM), ln2_b_ref[l].reshape(1, DIM))
        h1 = jnp.dot(h, w_ff1_ref[l],
                     preferred_element_type=jnp.float32) + b_ff1_ref[l].reshape(1, MLP_DIM)
        h1 = _gelu_exact(h1)
        h2 = jnp.dot(h1, w_ff2_ref[l],
                     preferred_element_type=jnp.float32) + b_ff2_ref[l].reshape(1, DIM)
        x = x + h2

    # ---- fused classifier on the pair's two cls tokens ----
    feat = jnp.concatenate([x[0:1, :], x[SEQ_PAD:SEQ_PAD + 1, :]], axis=1)   # (1, 2*DIM)
    f = _layernorm(feat, cg_ref[...], cb_ref[...])
    f = jnp.dot(f, w1_ref[...], preferred_element_type=jnp.float32) + b1_ref[...]
    f = jnp.maximum(f, 0.0)                                             # ReLU
    logit = jnp.dot(f, w2_ref[...], preferred_element_type=jnp.float32) + b2_ref[...]
    out_ref[0] = 1.0 / (1.0 + jnp.exp(-logit))                          # exact sigmoid


def _const_spec(shape):
    nd = len(shape)
    return pl.BlockSpec(shape, lambda i, _nd=nd: (0,) * _nd)


def siamese_pallas(patches_pad, base, vit_p, clf_p):
    B = patches_pad.shape[0]
    # lane-dense final Linear: pad (CLS_HIDDEN, 1) -> (CLS_HIDDEN, OUT_PAD) with zeros
    w2p = jnp.pad(clf_p["w2"], ((0, 0), (0, OUT_PAD - clf_p["w2"].shape[1])))
    b2p = jnp.pad(clf_p["b2"], ((0, 0), (0, OUT_PAD - clf_p["b2"].shape[1])))
    weights = (base, vit_p["w_pe"],
               vit_p["ln1_g"], vit_p["ln1_b"], vit_p["w_qkv"], vit_p["w_o"], vit_p["b_o"],
               vit_p["ln2_g"], vit_p["ln2_b"], vit_p["w_ff1"], vit_p["b_ff1"],
               vit_p["w_ff2"], vit_p["b_ff2"],
               clf_p["ln_g"], clf_p["ln_b"], clf_p["w1"], clf_p["b1"], w2p, b2p)
    out = pl.pallas_call(
        siamese_kernel,
        out_shape=jax.ShapeDtypeStruct((B, 1, OUT_PAD), jnp.float32),
        grid=(B,),
        in_specs=[pl.BlockSpec((1, ROWS, PATCH_DIM), lambda i: (i, 0, 0))]
                 + [_const_spec(w.shape) for w in weights],
        out_specs=pl.BlockSpec((1, 1, OUT_PAD), lambda i: (i, 0, 0)),
        compiler_params=pltpu.CompilerParams(dimension_semantics=("parallel",)),
    )(patches_pad, *weights)
    return out[:, 0, :1]                                                # (B, 1)


# ---------------- glue: patch rearrange + padding + full siamese forward ----------------
def to_patches(x):
    # 'b c (h p1) (w p2) -> b (h w) (p1 p2 c)'
    B, C, H, W = x.shape
    h, w = H // PATCH, W // PATCH
    x = x.reshape(B, C, h, PATCH, w, PATCH)
    x = x.transpose(0, 2, 4, 3, 5, 1)
    return x.reshape(B, h * w, PATCH * PATCH * C)


@jax.jit
def siamese_forward(img1, img2, vit_p, clf_p):
    B = img1.shape[0]
    p1 = to_patches(img1)                                               # (B, NPATCH, PATCH_DIM)
    p2 = to_patches(img2)
    # one siamese pair per grid step; row 0 (cls slot) and rows SEQ..7 are zero padding.
    pp = jnp.stack([p1, p2], axis=1)                                    # (B, 2, NPATCH, PD)
    pp = jnp.pad(pp, ((0, 0), (0, 0), (1, SEQ_PAD - SEQ), (0, 0)))      # (B, 2, SEQ_PAD, PD)
    pp = pp.reshape(B, ROWS, PATCH_DIM)
    # per-image additive base: row0 = cls + pos[0]; rows 1..NPATCH = pos + patch-embed bias;
    # padding rows = 0.  (parameter-only preprocessing, folded once under jit)
    base = jnp.concatenate(
        [vit_p["cls"] + vit_p["pos"][0:1],
         vit_p["pos"][1:SEQ] + vit_p["b_pe"],
         jnp.zeros((SEQ_PAD - SEQ, DIM), jnp.float32)], axis=0)         # (SEQ_PAD, DIM)
    return siamese_pallas(pp, base, vit_p, clf_p)


# ---------------- deterministic parameter init (mirrors init_weights) ----------------
def init_params(key):
    def xavier(k, shape):
        fan_in, fan_out = shape[-2], shape[-1]
        std = math.sqrt(2.0 / (fan_in + fan_out))
        return (std * jax.random.normal(k, shape)).astype(jnp.float32)

    ks = iter(jax.random.split(key, 16))
    vit = dict(
        w_pe=xavier(next(ks), (PATCH_DIM, DIM)),
        b_pe=jnp.zeros((1, DIM), jnp.float32),
        cls=jax.random.normal(next(ks), (1, DIM), jnp.float32),          # torch.randn cls_token
        pos=jax.random.normal(next(ks), (SEQ, DIM), jnp.float32),        # torch.randn pos_embedding
        ln1_g=jnp.ones((DEPTH, DIM), jnp.float32),
        ln1_b=jnp.zeros((DEPTH, DIM), jnp.float32),
        w_qkv=xavier(next(ks), (DEPTH, DIM, 3 * INNER)),                 # to_qkv (no bias)
        w_o=xavier(next(ks), (DEPTH, INNER, DIM)),
        b_o=jnp.zeros((DEPTH, DIM), jnp.float32),
        ln2_g=jnp.ones((DEPTH, DIM), jnp.float32),
        ln2_b=jnp.zeros((DEPTH, DIM), jnp.float32),
        w_ff1=xavier(next(ks), (DEPTH, DIM, MLP_DIM)),
        b_ff1=jnp.zeros((DEPTH, MLP_DIM), jnp.float32),
        w_ff2=xavier(next(ks), (DEPTH, MLP_DIM, DIM)),
        b_ff2=jnp.zeros((DEPTH, DIM), jnp.float32),
    )
    clf = dict(
        ln_g=jnp.ones((1, 2 * DIM), jnp.float32),
        ln_b=jnp.zeros((1, 2 * DIM), jnp.float32),
        w1=xavier(next(ks), (2 * DIM, CLS_HIDDEN)),
        b1=jnp.zeros((1, CLS_HIDDEN), jnp.float32),
        w2=xavier(next(ks), (CLS_HIDDEN, 1)),
        b2=jnp.zeros((1, 1), jnp.float32),
    )
    return vit, clf


if __name__ == "__main__":
    key = jax.random.PRNGKey(0)
    k_img1, k_img2, k_par = jax.random.split(key, 3)
    vit_p, clf_p = init_params(k_par)
    img1 = jax.random.normal(k_img1, (BATCH, CHANNELS, IMAGE, IMAGE), jnp.float32)
    img2 = jax.random.normal(k_img2, (BATCH, CHANNELS, IMAGE, IMAGE), jnp.float32)

    out = siamese_forward(img1, img2, vit_p, clf_p)
    out = jax.block_until_ready(out)

    assert out.shape == (BATCH, 1), out.shape
    assert bool(jnp.all(jnp.isfinite(out)))
    assert bool(jnp.all((out >= 0.0) & (out <= 1.0)))
    print("KERNEL_OK")
</pallas_src>

<mosaic_0001>
module attributes {stable_mosaic.version = 11 : i64} {
  func.func @siamese_kernel(%arg0: i32, %arg1: memref<1x16x768xf32, #tpu.memory_space<vmem>>, %arg2: memref<8x128xf32, #tpu.memory_space<vmem>>, %arg3: memref<768x128xf32, #tpu.memory_space<vmem>>, %arg4: memref<2x128xf32, #tpu.memory_space<vmem>>, %arg5: memref<2x128xf32, #tpu.memory_space<vmem>>, %arg6: memref<2x128x384xf32, #tpu.memory_space<vmem>>, %arg7: memref<2x128x128xf32, #tpu.memory_space<vmem>>, %arg8: memref<2x128xf32, #tpu.memory_space<vmem>>, %arg9: memref<2x128xf32, #tpu.memory_space<vmem>>, %arg10: memref<2x128xf32, #tpu.memory_space<vmem>>, %arg11: memref<2x128x256xf32, #tpu.memory_space<vmem>>, %arg12: memref<2x256xf32, #tpu.memory_space<vmem>>, %arg13: memref<2x256x128xf32, #tpu.memory_space<vmem>>, %arg14: memref<2x128xf32, #tpu.memory_space<vmem>>, %arg15: memref<1x256xf32, #tpu.memory_space<vmem>>, %arg16: memref<1x256xf32, #tpu.memory_space<vmem>>, %arg17: memref<256x256xf32, #tpu.memory_space<vmem>>, %arg18: memref<1x256xf32, #tpu.memory_space<vmem>>, %arg19: memref<256x128xf32, #tpu.memory_space<vmem>>, %arg20: memref<1x128xf32, #tpu.memory_space<vmem>>, %arg21: memref<1x1x128xf32, #tpu.memory_space<vmem>>) attributes {dimension_semantics = [#tpu.dimension_semantics<parallel>], iteration_bounds = array<i64: 2>, scalar_prefetch = 0 : i64, scratch_operands = 0 : i64, tpu.core_type = #tpu.core_type<tc>, window_params = [{transform_indices = @transform_0, window_bounds = array<i64: 1, 16, 768>}, {pipeline_mode = #tpu.pipeline_mode<synchronous>, transform_indices = @transform_1, window_bounds = array<i64: 8, 128>}, {pipeline_mode = #tpu.pipeline_mode<synchronous>, transform_indices = @transform_2, window_bounds = array<i64: 768, 128>}, {pipeline_mode = #tpu.pipeline_mode<synchronous>, transform_indices = @transform_3, window_bounds = array<i64: 2, 128>}, {pipeline_mode = #tpu.pipeline_mode<synchronous>, transform_indices = @transform_4, window_bounds = array<i64: 2, 128>}, {pipeline_mode = #tpu.pipeline_mode<synchronous>, transform_indices = @transform_5, window_bounds = array<i64: 2, 128, 384>}, {pipeline_mode = #tpu.pipeline_mode<synchronous>, transform_indices = @transform_6, window_bounds = array<i64: 2, 128, 128>}, {pipeline_mode = #tpu.pipeline_mode<synchronous>, transform_indices = @transform_7, window_bounds = array<i64: 2, 128>}, {pipeline_mode = #tpu.pipeline_mode<synchronous>, transform_indices = @transform_8, window_bounds = array<i64: 2, 128>}, {pipeline_mode = #tpu.pipeline_mode<synchronous>, transform_indices = @transform_9, window_bounds = array<i64: 2, 128>}, {pipeline_mode = #tpu.pipeline_mode<synchronous>, transform_indices = @transform_10, window_bounds = array<i64: 2, 128, 256>}, {pipeline_mode = #tpu.pipeline_mode<synchronous>, transform_indices = @transform_11, window_bounds = array<i64: 2, 256>}, {pipeline_mode = #tpu.pipeline_mode<synchronous>, transform_indices = @transform_12, window_bounds = array<i64: 2, 256, 128>}, {pipeline_mode = #tpu.pipeline_mode<synchronous>, transform_indices = @transform_13, window_bounds = array<i64: 2, 128>}, {pipeline_mode = #tpu.pipeline_mode<synchronous>, transform_indices = @transform_14, window_bounds = array<i64: 1, 256>}, {pipeline_mode = #tpu.pipeline_mode<synchronous>, transform_indices = @transform_15, window_bounds = array<i64: 1, 256>}, {pipeline_mode = #tpu.pipeline_mode<synchronous>, transform_indices = @transform_16, window_bounds = array<i64: 256, 256>}, {pipeline_mode = #tpu.pipeline_mode<synchronous>, transform_indices = @transform_17, window_bounds = array<i64: 1, 256>}, {pipeline_mode = #tpu.pipeline_mode<synchronous>, transform_indices = @transform_18, window_bounds = array<i64: 256, 128>}, {pipeline_mode = #tpu.pipeline_mode<synchronous>, transform_indices = @transform_19, window_bounds = array<i64: 1, 128>}, {transform_indices = @transform_20, window_bounds = array<i64: 1, 1, 128>}]} {
    %c0 = arith.constant 0 : index
    %c0_0 = arith.constant 0 : index
    %c0_1 = arith.constant 0 : index
    %0 = vector.load %arg1[%c0, %c0_0, %c0_1] : memref<1x16x768xf32, #tpu.memory_space<vmem>>, vector<1x16x768xf32>
    %1 = vector.shape_cast %0 : vector<1x16x768xf32> to vector<16x768xf32>
    %c0_2 = arith.constant 0 : index
    %c0_3 = arith.constant 0 : index
    %2 = vector.load %arg3[%c0_2, %c0_3] : memref<768x128xf32, #tpu.memory_space<vmem>>, vector<768x128xf32>
    %cst = arith.constant dense<0.000000e+00> : vector<16x128xf32>
    %3 = tpu.matmul %1, %2, %cst {dimension_numbers = #tpu.dot_dimension_numbers<[1], [0], [0], [1], [0, 0, 1, 1], [], []>} : vector<16x768xf32>, vector<768x128xf32>, vector<16x128xf32> -> vector<16x128xf32>
    %4 = vector.shape_cast %3 : vector<16x128xf32> to vector<2x8x128xf32>
    %c0_4 = arith.constant 0 : index
    %c0_5 = arith.constant 0 : index
    %5 = vector.load %arg2[%c0_4, %c0_5] : memref<8x128xf32, #tpu.memory_space<vmem>>, vector<8x128xf32>
    %6 = vector.shape_cast %5 : vector<8x128xf32> to vector<1x8x128xf32>
    %7 = vector.broadcast %6 : vector<1x8x128xf32> to vector<2x8x128xf32>
    %8 = arith.addf %4, %7 : vector<2x8x128xf32>
    %9 = vector.shape_cast %8 : vector<2x8x128xf32> to vector<16x128xf32>
    %10 = tpu.iota {dimensions = array<i32: 1>} : vector<8x8xi32>
    %c5_i32 = arith.constant 5 : i32
    %11 = vector.broadcast %c5_i32 : i32 to vector<8x8xi32>
    %12 = arith.cmpi slt, %10, %11 : vector<8x8xi32>
    %cst_6 = arith.constant 0.000000e+00 : f32
    %cst_7 = arith.constant -1.000000e+09 : f32
    %13 = vector.broadcast %cst_6 : f32 to vector<8x8xf32>
    %14 = vector.broadcast %cst_7 : f32 to vector<8x8xf32>
    %15 = arith.select %12, %13, %14 : vector<8x8xi1>, vector<8x8xf32>
    %c0_8 = arith.constant 0 : index
    %c0_9 = arith.constant 0 : index
    %16 = vector.load %arg4[%c0_8, %c0_9] : memref<2x128xf32, #tpu.memory_space<vmem>>, vector<1x128xf32>
    %17 = vector.shape_cast %16 : vector<1x128xf32> to vector<128xf32>
    %18 = vector.shape_cast %17 : vector<128xf32> to vector<1x128xf32>
    %c0_10 = arith.constant 0 : index
    %c0_11 = arith.constant 0 : index
    %19 = vector.load %arg5[%c0_10, %c0_11] : memref<2x128xf32, #tpu.memory_space<vmem>>, vector<1x128xf32>
    %20 = vector.shape_cast %19 : vector<1x128xf32> to vector<128xf32>
    %21 = vector.shape_cast %20 : vector<128xf32> to vector<1x128xf32>
    %cst_12 = arith.constant dense<0.000000e+00> : vector<16xf32>
    %22 = vector.multi_reduction <add>, %9, %cst_12 [1] : vector<16x128xf32> to vector<16xf32>
    %23 = vector.shape_cast %22 : vector<16xf32> to vector<16x1xf32>
    %cst_13 = arith.constant 1.280000e+02 : f32
    %24 = vector.broadcast %cst_13 : f32 to vector<16x1xf32>
    %25 = arith.divf %23, %24 : vector<16x1xf32>
    %26 = vector.broadcast %25 : vector<16x1xf32> to vector<16x128xf32>
    %27 = arith.subf %9, %26 : vector<16x128xf32>
    %28 = arith.mulf %27, %27 : vector<16x128xf32>
    %cst_14 = arith.constant dense<0.000000e+00> : vector<16xf32>
    %29 = vector.multi_reduction <add>, %28, %cst_14 [1] : vector<16x128xf32> to vector<16xf32>
    %30 = vector.shape_cast %29 : vector<16xf32> to vector<16x1xf32>
    %cst_15 = arith.constant 1.280000e+02 : f32
    %31 = vector.broadcast %cst_15 : f32 to vector<16x1xf32>
    %32 = arith.divf %30, %31 : vector<16x1xf32>
    %33 = vector.broadcast %25 : vector<16x1xf32> to vector<16x128xf32>
    %34 = arith.subf %9, %33 : vector<16x128xf32>
    %cst_16 = arith.constant 9.99999974E-6 : f32
    %35 = vector.broadcast %cst_16 : f32 to vector<16x1xf32>
    %36 = arith.addf %32, %35 : vector<16x1xf32>
    %37 = math.rsqrt %36 : vector<16x1xf32>
    %38 = vector.broadcast %37 : vector<16x1xf32> to vector<16x128xf32>
    %39 = arith.mulf %34, %38 : vector<16x128xf32>
    %40 = vector.broadcast %18 : vector<1x128xf32> to vector<16x128xf32>
    %41 = arith.mulf %39, %40 : vector<16x128xf32>
    %42 = vector.broadcast %21 : vector<1x128xf32> to vector<16x128xf32>
    %43 = arith.addf %41, %42 : vector<16x128xf32>
    %c0_17 = arith.constant 0 : index
    %c0_18 = arith.constant 0 : index
    %c0_19 = arith.constant 0 : index
    %44 = vector.load %arg6[%c0_17, %c0_18, %c0_19] : memref<2x128x384xf32, #tpu.memory_space<vmem>>, vector<1x128x384xf32>
    %45 = vector.shape_cast %44 : vector<1x128x384xf32> to vector<128x384xf32>
    %cst_20 = arith.constant dense<0.000000e+00> : vector<16x384xf32>
    %46 = tpu.matmul %43, %45, %cst_20 {dimension_numbers = #tpu.dot_dimension_numbers<[1], [0], [0], [1], [0, 0, 1, 1], [], []>} : vector<16x128xf32>, vector<128x384xf32>, vector<16x384xf32> -> vector<16x384xf32>
    %47 = vector.extract_strided_slice %46 {offsets = [0, 0], sizes = [8, 128], strides = [1, 1]} : vector<16x384xf32> to vector<8x128xf32>
    %48 = vector.shape_cast %47 : vector<8x128xf32> to vector<8x4x32xf32>
    %49 = vector.extract_strided_slice %46 {offsets = [0, 128], sizes = [8, 128], strides = [1, 1]} : vector<16x384xf32> to vector<8x128xf32>
    %50 = vector.shape_cast %49 : vector<8x128xf32> to vector<8x4x32xf32>
    %51 = vector.extract_strided_slice %46 {offsets = [0, 256], sizes = [8, 128], strides = [1, 1]} : vector<16x384xf32> to vector<8x128xf32>
    %52 = vector.shape_cast %51 : vector<8x128xf32> to vector<8x4x32xf32>
    %53 = tpu.transpose %48, [1, 0, 2] : vector<8x4x32xf32> -> vector<4x8x32xf32>
    %54 = tpu.transpose %50, [1, 0, 2] : vector<8x4x32xf32> -> vector<4x8x32xf32>
    %55 = tpu.transpose %52, [1, 0, 2] : vector<8x4x32xf32> -> vector<4x8x32xf32>
    "tpu.trace_start"() <{level = 10 : i32, message = "hqd,hkd->hqk"}> : () -> ()
    %cst_21 = arith.constant dense<0.000000e+00> : vector<4x8x8xf32>
    %56 = tpu.matmul %53, %54, %cst_21 {dimension_numbers = #tpu.dot_dimension_numbers<[2], [2], [1], [1], [0, 0, 0, 1, 1, 1], [0], [0]>} : vector<4x8x32xf32>, vector<4x8x32xf32>, vector<4x8x8xf32> -> vector<4x8x8xf32>
    "tpu.trace_stop"() : () -> ()
    %cst_22 = arith.constant 0.176776692 : f32
    %57 = vector.broadcast %cst_22 : f32 to vector<4x8x8xf32>
    %58 = arith.mulf %56, %57 : vector<4x8x8xf32>
    %59 = vector.shape_cast %15 : vector<8x8xf32> to vector<1x8x8xf32>
    %60 = vector.broadcast %59 : vector<1x8x8xf32> to vector<4x8x8xf32>
    %61 = arith.addf %58, %60 : vector<4x8x8xf32>
    %cst_23 = arith.constant dense<0xFF800000> : vector<4x8xf32>
    %62 = vector.multi_reduction <maximumf>, %61, %cst_23 [2] : vector<4x8x8xf32> to vector<4x8xf32>
    %63 = vector.shape_cast %62 : vector<4x8xf32> to vector<4x8x1xf32>
    %64 = vector.broadcast %63 : vector<4x8x1xf32> to vector<4x8x8xf32>
    %65 = arith.subf %61, %64 : vector<4x8x8xf32>
    %66 = math.exp %65 : vector<4x8x8xf32>
    %cst_24 = arith.constant dense<0.000000e+00> : vector<4x8xf32>
    %67 = vector.multi_reduction <add>, %66, %cst_24 [2] : vector<4x8x8xf32> to vector<4x8xf32>
    %68 = vector.shape_cast %67 : vector<4x8xf32> to vector<4x8x1xf32>
    %69 = tpu.reciprocal %68 {approx = true} : vector<4x8x1xf32> -> vector<4x8x1xf32>
    %70 = vector.broadcast %69 : vector<4x8x1xf32> to vector<4x8x8xf32>
    %71 = arith.mulf %66, %70 : vector<4x8x8xf32>
    "tpu.trace_start"() <{level = 10 : i32, message = "hqk,hkd->hqd"}> : () -> ()
    %cst_25 = arith.constant dense<0.000000e+00> : vector<4x8x32xf32>
    %72 = tpu.matmul %71, %55, %cst_25 {dimension_numbers = #tpu.dot_dimension_numbers<[2], [1], [1], [2], [0, 0, 0, 1, 1, 2], [0], [0]>} : vector<4x8x8xf32>, vector<4x8x32xf32>, vector<4x8x32xf32> -> vector<4x8x32xf32>
    "tpu.trace_stop"() : () -> ()
    %73 = tpu.transpose %72, [1, 0, 2] : vector<4x8x32xf32> -> vector<8x4x32xf32>
    %74 = vector.shape_cast %73 : vector<8x4x32xf32> to vector<8x128xf32>
    %75 = vector.extract_strided_slice %46 {offsets = [8, 0], sizes = [8, 128], strides = [1, 1]} : vector<16x384xf32> to vector<8x128xf32>
    %76 = vector.shape_cast %75 : vector<8x128xf32> to vector<8x4x32xf32>
    %77 = vector.extract_strided_slice %46 {offsets = [8, 128], sizes = [8, 128], strides = [1, 1]} : vector<16x384xf32> to vector<8x128xf32>
    %78 = vector.shape_cast %77 : vector<8x128xf32> to vector<8x4x32xf32>
    %79 = vector.extract_strided_slice %46 {offsets = [8, 256], sizes = [8, 128], strides = [1, 1]} : vector<16x384xf32> to vector<8x128xf32>
    %80 = vector.shape_cast %79 : vector<8x128xf32> to vector<8x4x32xf32>
    %81 = tpu.transpose %76, [1, 0, 2] : vector<8x4x32xf32> -> vector<4x8x32xf32>
    %82 = tpu.transpose %78, [1, 0, 2] : vector<8x4x32xf32> -> vector<4x8x32xf32>
    %83 = tpu.transpose %80, [1, 0, 2] : vector<8x4x32xf32> -> vector<4x8x32xf32>
    "tpu.trace_start"() <{level = 10 : i32, message = "hqd,hkd->hqk"}> : () -> ()
    %cst_26 = arith.constant dense<0.000000e+00> : vector<4x8x8xf32>
    %84 = tpu.matmul %81, %82, %cst_26 {dimension_numbers = #tpu.dot_dimension_numbers<[2], [2], [1], [1], [0, 0, 0, 1, 1, 1], [0], [0]>} : vector<4x8x32xf32>, vector<4x8x32xf32>, vector<4x8x8xf32> -> vector<4x8x8xf32>
    "tpu.trace_stop"() : () -> ()
    %cst_27 = arith.constant 0.176776692 : f32
    %85 = vector.broadcast %cst_27 : f32 to vector<4x8x8xf32>
    %86 = arith.mulf %84, %85 : vector<4x8x8xf32>
    %87 = vector.shape_cast %15 : vector<8x8xf32> to vector<1x8x8xf32>
    %88 = vector.broadcast %87 : vector<1x8x8xf32> to vector<4x8x8xf32>
    %89 = arith.addf %86, %88 : vector<4x8x8xf32>
    %cst_28 = arith.constant dense<0xFF800000> : vector<4x8xf32>
    %90 = vector.multi_reduction <maximumf>, %89, %cst_28 [2] : vector<4x8x8xf32> to vector<4x8xf32>
    %91 = vector.shape_cast %90 : vector<4x8xf32> to vector<4x8x1xf32>
    %92 = vector.broadcast %91 : vector<4x8x1xf32> to vector<4x8x8xf32>
    %93 = arith.subf %89, %92 : vector<4x8x8xf32>
    %94 = math.exp %93 : vector<4x8x8xf32>
    %cst_29 = arith.constant dense<0.000000e+00> : vector<4x8xf32>
    %95 = vector.multi_reduction <add>, %94, %cst_29 [2] : vector<4x8x8xf32> to vector<4x8xf32>
    %96 = vector.shape_cast %95 : vector<4x8xf32> to vector<4x8x1xf32>
    %97 = tpu.reciprocal %96 {approx = true} : vector<4x8x1xf32> -> vector<4x8x1xf32>
    %98 = vector.broadcast %97 : vector<4x8x1xf32> to vector<4x8x8xf32>
    %99 = arith.mulf %94, %98 : vector<4x8x8xf32>
    "tpu.trace_start"() <{level = 10 : i32, message = "hqk,hkd->hqd"}> : () -> ()
    %cst_30 = arith.constant dense<0.000000e+00> : vector<4x8x32xf32>
    %100 = tpu.matmul %99, %83, %cst_30 {dimension_numbers = #tpu.dot_dimension_numbers<[2], [1], [1], [2], [0, 0, 0, 1, 1, 2], [0], [0]>} : vector<4x8x8xf32>, vector<4x8x32xf32>, vector<4x8x32xf32> -> vector<4x8x32xf32>
    "tpu.trace_stop"() : () -> ()
    %101 = tpu.transpose %100, [1, 0, 2] : vector<4x8x32xf32> -> vector<8x4x32xf32>
    %102 = vector.shape_cast %101 : vector<8x4x32xf32> to vector<8x128xf32>
    %103 = tpu.concatenate %74, %102 in 0 : vector<8x128xf32>, vector<8x128xf32> -> vector<16x128xf32>
    %c0_31 = arith.constant 0 : index
    %c0_32 = arith.constant 0 : index
    %c0_33 = arith.constant 0 : index
    %104 = vector.load %arg7[%c0_31, %c0_32, %c0_33] : memref<2x128x128xf32, #tpu.memory_space<vmem>>, vector<1x128x128xf32>
    %105 = vector.shape_cast %104 : vector<1x128x128xf32> to vector<128x128xf32>
    %cst_34 = arith.constant dense<0.000000e+00> : vector<16x128xf32>
    %106 = tpu.matmul %103, %105, %cst_34 {dimension_numbers = #tpu.dot_dimension_numbers<[1], [0], [0], [1], [0, 0, 1, 1], [], []>} : vector<16x128xf32>, vector<128x128xf32>, vector<16x128xf32> -> vector<16x128xf32>
    %c0_35 = arith.constant 0 : index
    %c0_36 = arith.constant 0 : index
    %107 = vector.load %arg8[%c0_35, %c0_36] : memref<2x128xf32, #tpu.memory_space<vmem>>, vector<1x128xf32>
    %108 = vector.shape_cast %107 : vector<1x128xf32> to vector<128xf32>
    %109 = vector.shape_cast %108 : vector<128xf32> to vector<1x128xf32>
    %110 = vector.broadcast %109 : vector<1x128xf32> to vector<16x128xf32>
    %111 = arith.addf %106, %110 : vector<16x128xf32>
    %112 = arith.addf %9, %111 : vector<16x128xf32>
    %c0_37 = arith.constant 0 : index
    %c0_38 = arith.constant 0 : index
    %113 = vector.load %arg9[%c0_37, %c0_38] : memref<2x128xf32, #tpu.memory_space<vmem>>, vector<1x128xf32>
    %114 = vector.shape_cast %113 : vector<1x128xf32> to vector<128xf32>
    %115 = vector.shape_cast %114 : vector<128xf32> to vector<1x128xf32>
    %c0_39 = arith.constant 0 : index
    %c0_40 = arith.constant 0 : index
    %116 = vector.load %arg10[%c0_39, %c0_40] : memref<2x128xf32, #tpu.memory_space<vmem>>, vector<1x128xf32>
    %117 = vector.shape_cast %116 : vector<1x128xf32> to vector<128xf32>
    %118 = vector.shape_cast %117 : vector<128xf32> to vector<1x128xf32>
    %cst_41 = arith.constant dense<0.000000e+00> : vector<16xf32>
    %119 = vector.multi_reduction <add>, %112, %cst_41 [1] : vector<16x128xf32> to vector<16xf32>
    %120 = vector.shape_cast %119 : vector<16xf32> to vector<16x1xf32>
    %cst_42 = arith.constant 1.280000e+02 : f32
    %121 = vector.broadcast %cst_42 : f32 to vector<16x1xf32>
    %122 = arith.divf %120, %121 : vector<16x1xf32>
    %123 = vector.broadcast %122 : vector<16x1xf32> to vector<16x128xf32>
    %124 = arith.subf %112, %123 : vector<16x128xf32>
    %125 = arith.mulf %124, %124 : vector<16x128xf32>
    %cst_43 = arith.constant dense<0.000000e+00> : vector<16xf32>
    %126 = vector.multi_reduction <add>, %125, %cst_43 [1] : vector<16x128xf32> to vector<16xf32>
    %127 = vector.shape_cast %126 : vector<16xf32> to vector<16x1xf32>
    %cst_44 = arith.constant 1.280000e+02 : f32
    %128 = vector.broadcast %cst_44 : f32 to vector<16x1xf32>
    %129 = arith.divf %127, %128 : vector<16x1xf32>
    %130 = vector.broadcast %122 : vector<16x1xf32> to vector<16x128xf32>
    %131 = arith.subf %112, %130 : vector<16x128xf32>
    %cst_45 = arith.constant 9.99999974E-6 : f32
    %132 = vector.broadcast %cst_45 : f32 to vector<16x1xf32>
    %133 = arith.addf %129, %132 : vector<16x1xf32>
    %134 = math.rsqrt %133 : vector<16x1xf32>
    %135 = vector.broadcast %134 : vector<16x1xf32> to vector<16x128xf32>
    %136 = arith.mulf %131, %135 : vector<16x128xf32>
    %137 = vector.broadcast %115 : vector<1x128xf32> to vector<16x128xf32>
    %138 = arith.mulf %136, %137 : vector<16x128xf32>
    %139 = vector.broadcast %118 : vector<1x128xf32> to vector<16x128xf32>
    %140 = arith.addf %138, %139 : vector<16x128xf32>
    %c0_46 = arith.constant 0 : index
    %c0_47 = arith.constant 0 : index
    %c0_48 = arith.constant 0 : index
    %141 = vector.load %arg11[%c0_46, %c0_47, %c0_48] : memref<2x128x256xf32, #tpu.memory_space<vmem>>, vector<1x128x256xf32>
    %142 = vector.shape_cast %141 : vector<1x128x256xf32> to vector<128x256xf32>
    %cst_49 = arith.constant dense<0.000000e+00> : vector<16x256xf32>
    %143 = tpu.matmul %140, %142, %cst_49 {dimension_numbers = #tpu.dot_dimension_numbers<[1], [0], [0], [1], [0, 0, 1, 1], [], []>} : vector<16x128xf32>, vector<128x256xf32>, vector<16x256xf32> -> vector<16x256xf32>
    %c0_50 = arith.constant 0 : index
    %c0_51 = arith.constant 0 : index
    %144 = vector.load %arg12[%c0_50, %c0_51] : memref<2x256xf32, #tpu.memory_space<vmem>>, vector<1x256xf32>
    %145 = vector.shape_cast %144 : vector<1x256xf32> to vector<256xf32>
    %146 = vector.shape_cast %145 : vector<256xf32> to vector<1x256xf32>
    %147 = vector.broadcast %146 : vector<1x256xf32> to vector<16x256xf32>
    %148 = arith.addf %143, %147 : vector<16x256xf32>
    %cst_52 = arith.constant 5.000000e-01 : f32
    %149 = vector.broadcast %cst_52 : f32 to vector<16x256xf32>
    %150 = arith.mulf %149, %148 : vector<16x256xf32>
    %cst_53 = arith.constant 0.707106769 : f32
    %151 = vector.broadcast %cst_53 : f32 to vector<16x256xf32>
    %152 = arith.mulf %148, %151 : vector<16x256xf32>
    %153 = math.absf %152 : vector<16x256xf32>
    %cst_54 = arith.constant 0.327591091 : f32
    %154 = vector.broadcast %cst_54 : f32 to vector<16x256xf32>
    %155 = arith.mulf %154, %153 : vector<16x256xf32>
    %cst_55 = arith.constant 1.000000e+00 : f32
    %156 = vector.broadcast %cst_55 : f32 to vector<16x256xf32>
    %157 = arith.addf %156, %155 : vector<16x256xf32>
    %cst_56 = arith.constant 1.000000e+00 : f32
    %158 = vector.broadcast %cst_56 : f32 to vector<16x256xf32>
    %159 = arith.divf %158, %157 : vector<16x256xf32>
    %cst_57 = arith.constant 1.06140542 : f32
    %160 = vector.broadcast %cst_57 : f32 to vector<16x256xf32>
    %161 = arith.mulf %160, %159 : vector<16x256xf32>
    %cst_58 = arith.constant -1.45315206 : f32
    %162 = vector.broadcast %cst_58 : f32 to vector<16x256xf32>
    %163 = arith.addf %161, %162 : vector<16x256xf32>
    %164 = arith.mulf %163, %159 : vector<16x256xf32>
    %cst_59 = arith.constant 1.42141378 : f32
    %165 = vector.broadcast %cst_59 : f32 to vector<16x256xf32>
    %166 = arith.addf %164, %165 : vector<16x256xf32>
    %167 = arith.mulf %166, %159 : vector<16x256xf32>
    %cst_60 = arith.constant -0.284496725 : f32
    %168 = vector.broadcast %cst_60 : f32 to vector<16x256xf32>
    %169 = arith.addf %167, %168 : vector<16x256xf32>
    %170 = arith.mulf %169, %159 : vector<16x256xf32>
    %cst_61 = arith.constant 0.254829586 : f32
    %171 = vector.broadcast %cst_61 : f32 to vector<16x256xf32>
    %172 = arith.addf %170, %171 : vector<16x256xf32>
    %173 = arith.mulf %172, %159 : vector<16x256xf32>
    %cst_62 = arith.constant 0.000000e+00 : f32
    %174 = vector.broadcast %cst_62 : f32 to vector<16x256xf32>
    %175 = arith.subf %174, %153 : vector<16x256xf32>
    %176 = arith.mulf %175, %153 : vector<16x256xf32>
    %177 = math.exp %176 : vector<16x256xf32>
    %178 = arith.mulf %173, %177 : vector<16x256xf32>
    %cst_63 = arith.constant 1.000000e+00 : f32
    %179 = vector.broadcast %cst_63 : f32 to vector<16x256xf32>
    %180 = arith.subf %179, %178 : vector<16x256xf32>
    %cst_64 = arith.constant 0.000000e+00 : f32
    %181 = vector.broadcast %cst_64 : f32 to vector<16x256xf32>
    %182 = arith.cmpf oge, %152, %181 : vector<16x256xf32>
    %cst_65 = arith.constant 0.000000e+00 : f32
    %183 = vector.broadcast %cst_65 : f32 to vector<16x256xf32>
    %184 = arith.subf %183, %180 : vector<16x256xf32>
    %185 = arith.select %182, %180, %184 : vector<16x256xi1>, vector<16x256xf32>
    %cst_66 = arith.constant 1.000000e+00 : f32
    %186 = vector.broadcast %cst_66 : f32 to vector<16x256xf32>
    %187 = arith.addf %186, %185 : vector<16x256xf32>
    %188 = arith.mulf %150, %187 : vector<16x256xf32>
    %c0_67 = arith.constant 0 : index
    %c0_68 = arith.constant 0 : index
    %c0_69 = arith.constant 0 : index
    %189 = vector.load %arg13[%c0_67, %c0_68, %c0_69] : memref<2x256x128xf32, #tpu.memory_space<vmem>>, vector<1x256x128xf32>
    %190 = vector.shape_cast %189 : vector<1x256x128xf32> to vector<256x128xf32>
    %cst_70 = arith.constant dense<0.000000e+00> : vector<16x128xf32>
    %191 = tpu.matmul %188, %190, %cst_70 {dimension_numbers = #tpu.dot_dimension_numbers<[1], [0], [0], [1], [0, 0, 1, 1], [], []>} : vector<16x256xf32>, vector<256x128xf32>, vector<16x128xf32> -> vector<16x128xf32>
    %c0_71 = arith.constant 0 : index
    %c0_72 = arith.constant 0 : index
    %192 = vector.load %arg14[%c0_71, %c0_72] : memref<2x128xf32, #tpu.memory_space<vmem>>, vector<1x128xf32>
    %193 = vector.shape_cast %192 : vector<1x128xf32> to vector<128xf32>
    %194 = vector.shape_cast %193 : vector<128xf32> to vector<1x128xf32>
    %195 = vector.broadcast %194 : vector<1x128xf32> to vector<16x128xf32>
    %196 = arith.addf %191, %195 : vector<16x128xf32>
    %197 = arith.addf %112, %196 : vector<16x128xf32>
    %c1 = arith.constant 1 : index
    %c0_73 = arith.constant 0 : index
    %198 = vector.load %arg4[%c1, %c0_73] : memref<2x128xf32, #tpu.memory_space<vmem>>, vector<1x128xf32>
    %199 = vector.shape_cast %198 : vector<1x128xf32> to vector<128xf32>
    %200 = vector.shape_cast %199 : vector<128xf32> to vector<1x128xf32>
    %c1_74 = arith.constant 1 : index
    %c0_75 = arith.constant 0 : index
    %201 = vector.load %arg5[%c1_74, %c0_75] : memref<2x128xf32, #tpu.memory_space<vmem>>, vector<1x128xf32>
    %202 = vector.shape_cast %201 : vector<1x128xf32> to vector<128xf32>
    %203 = vector.shape_cast %202 : vector<128xf32> to vector<1x128xf32>
    %cst_76 = arith.constant dense<0.000000e+00> : vector<16xf32>
    %204 = vector.multi_reduction <add>, %197, %cst_76 [1] : vector<16x128xf32> to vector<16xf32>
    %205 = vector.shape_cast %204 : vector<16xf32> to vector<16x1xf32>
    %cst_77 = arith.constant 1.280000e+02 : f32
    %206 = vector.broadcast %cst_77 : f32 to vector<16x1xf32>
    %207 = arith.divf %205, %206 : vector<16x1xf32>
    %208 = vector.broadcast %207 : vector<16x1xf32> to vector<16x128xf32>
    %209 = arith.subf %197, %208 : vector<16x128xf32>
    %210 = arith.mulf %209, %209 : vector<16x128xf32>
    %cst_78 = arith.constant dense<0.000000e+00> : vector<16xf32>
    %211 = vector.multi_reduction <add>, %210, %cst_78 [1] : vector<16x128xf32> to vector<16xf32>
    %212 = vector.shape_cast %211 : vector<16xf32> to vector<16x1xf32>
    %cst_79 = arith.constant 1.280000e+02 : f32
    %213 = vector.broadcast %cst_79 : f32 to vector<16x1xf32>
    %214 = arith.divf %212, %213 : vector<16x1xf32>
    %215 = vector.broadcast %207 : vector<16x1xf32> to vector<16x128xf32>
    %216 = arith.subf %197, %215 : vector<16x128xf32>
    %cst_80 = arith.constant 9.99999974E-6 : f32
    %217 = vector.broadcast %cst_80 : f32 to vector<16x1xf32>
    %218 = arith.addf %214, %217 : vector<16x1xf32>
    %219 = math.rsqrt %218 : vector<16x1xf32>
    %220 = vector.broadcast %219 : vector<16x1xf32> to vector<16x128xf32>
    %221 = arith.mulf %216, %220 : vector<16x128xf32>
    %222 = vector.broadcast %200 : vector<1x128xf32> to vector<16x128xf32>
    %223 = arith.mulf %221, %222 : vector<16x128xf32>
    %224 = vector.broadcast %203 : vector<1x128xf32> to vector<16x128xf32>
    %225 = arith.addf %223, %224 : vector<16x128xf32>
    %c1_81 = arith.constant 1 : index
    %c0_82 = arith.constant 0 : index
    %c0_83 = arith.constant 0 : index
    %226 = vector.load %arg6[%c1_81, %c0_82, %c0_83] : memref<2x128x384xf32, #tpu.memory_space<vmem>>, vector<1x128x384xf32>
    %227 = vector.shape_cast %226 : vector<1x128x384xf32> to vector<128x384xf32>
    %cst_84 = arith.constant dense<0.000000e+00> : vector<16x384xf32>
    %228 = tpu.matmul %225, %227, %cst_84 {dimension_numbers = #tpu.dot_dimension_numbers<[1], [0], [0], [1], [0, 0, 1, 1], [], []>} : vector<16x128xf32>, vector<128x384xf32>, vector<16x384xf32> -> vector<16x384xf32>
    %229 = vector.extract_strided_slice %228 {offsets = [0, 0], sizes = [8, 128], strides = [1, 1]} : vector<16x384xf32> to vector<8x128xf32>
    %230 = vector.shape_cast %229 : vector<8x128xf32> to vector<8x4x32xf32>
    %231 = vector.extract_strided_slice %228 {offsets = [0, 128], sizes = [8, 128], strides = [1, 1]} : vector<16x384xf32> to vector<8x128xf32>
    %232 = vector.shape_cast %231 : vector<8x128xf32> to vector<8x4x32xf32>
    %233 = vector.extract_strided_slice %228 {offsets = [0, 256], sizes = [8, 128], strides = [1, 1]} : vector<16x384xf32> to vector<8x128xf32>
    %234 = vector.shape_cast %233 : vector<8x128xf32> to vector<8x4x32xf32>
    %235 = tpu.transpose %230, [1, 0, 2] : vector<8x4x32xf32> -> vector<4x8x32xf32>
    %236 = tpu.transpose %232, [1, 0, 2] : vector<8x4x32xf32> -> vector<4x8x32xf32>
    %237 = tpu.transpose %234, [1, 0, 2] : vector<8x4x32xf32> -> vector<4x8x32xf32>
    "tpu.trace_start"() <{level = 10 : i32, message = "hqd,hkd->hqk"}> : () -> ()
    %cst_85 = arith.constant dense<0.000000e+00> : vector<4x8x8xf32>
    %238 = tpu.matmul %235, %236, %cst_85 {dimension_numbers = #tpu.dot_dimension_numbers<[2], [2], [1], [1], [0, 0, 0, 1, 1, 1], [0], [0]>} : vector<4x8x32xf32>, vector<4x8x32xf32>, vector<4x8x8xf32> -> vector<4x8x8xf32>
    "tpu.trace_stop"() : () -> ()
    %cst_86 = arith.constant 0.176776692 : f32
    %239 = vector.broadcast %cst_86 : f32 to vector<4x8x8xf32>
    %240 = arith.mulf %238, %239 : vector<4x8x8xf32>
    %241 = vector.shape_cast %15 : vector<8x8xf32> to vector<1x8x8xf32>
    %242 = vector.broadcast %241 : vector<1x8x8xf32> to vector<4x8x8xf32>
    %243 = arith.addf %240, %242 : vector<4x8x8xf32>
    %cst_87 = arith.constant dense<0xFF800000> : vector<4x8xf32>
    %244 = vector.multi_reduction <maximumf>, %243, %cst_87 [2] : vector<4x8x8xf32> to vector<4x8xf32>
    %245 = vector.shape_cast %244 : vector<4x8xf32> to vector<4x8x1xf32>
    %246 = vector.broadcast %245 : vector<4x8x1xf32> to vector<4x8x8xf32>
    %247 = arith.subf %243, %246 : vector<4x8x8xf32>
    %248 = math.exp %247 : vector<4x8x8xf32>
    %cst_88 = arith.constant dense<0.000000e+00> : vector<4x8xf32>
    %249 = vector.multi_reduction <add>, %248, %cst_88 [2] : vector<4x8x8xf32> to vector<4x8xf32>
    %250 = vector.shape_cast %249 : vector<4x8xf32> to vector<4x8x1xf32>
    %251 = tpu.reciprocal %250 {approx = true} : vector<4x8x1xf32> -> vector<4x8x1xf32>
    %252 = vector.broadcast %251 : vector<4x8x1xf32> to vector<4x8x8xf32>
    %253 = arith.mulf %248, %252 : vector<4x8x8xf32>
    "tpu.trace_start"() <{level = 10 : i32, message = "hqk,hkd->hqd"}> : () -> ()
    %cst_89 = arith.constant dense<0.000000e+00> : vector<4x8x32xf32>
    %254 = tpu.matmul %253, %237, %cst_89 {dimension_numbers = #tpu.dot_dimension_numbers<[2], [1], [1], [2], [0, 0, 0, 1, 1, 2], [0], [0]>} : vector<4x8x8xf32>, vector<4x8x32xf32>, vector<4x8x32xf32> -> vector<4x8x32xf32>
    "tpu.trace_stop"() : () -> ()
    %255 = tpu.transpose %254, [1, 0, 2] : vector<4x8x32xf32> -> vector<8x4x32xf32>
    %256 = vector.shape_cast %255 : vector<8x4x32xf32> to vector<8x128xf32>
    %257 = vector.extract_strided_slice %228 {offsets = [8, 0], sizes = [8, 128], strides = [1, 1]} : vector<16x384xf32> to vector<8x128xf32>
    %258 = vector.shape_cast %257 : vector<8x128xf32> to vector<8x4x32xf32>
    %259 = vector.extract_strided_slice %228 {offsets = [8, 128], sizes = [8, 128], strides = [1, 1]} : vector<16x384xf32> to vector<8x128xf32>
    %260 = vector.shape_cast %259 : vector<8x128xf32> to vector<8x4x32xf32>
    %261 = vector.extract_strided_slice %228 {offsets = [8, 256], sizes = [8, 128], strides = [1, 1]} : vector<16x384xf32> to vector<8x128xf32>
    %262 = vector.shape_cast %261 : vector<8x128xf32> to vector<8x4x32xf32>
    %263 = tpu.transpose %258, [1, 0, 2] : vector<8x4x32xf32> -> vector<4x8x32xf32>
    %264 = tpu.transpose %260, [1, 0, 2] : vector<8x4x32xf32> -> vector<4x8x32xf32>
    %265 = tpu.transpose %262, [1, 0, 2] : vector<8x4x32xf32> -> vector<4x8x32xf32>
    "tpu.trace_start"() <{level = 10 : i32, message = "hqd,hkd->hqk"}> : () -> ()
    %cst_90 = arith.constant dense<0.000000e+00> : vector<4x8x8xf32>
    %266 = tpu.matmul %263, %264, %cst_90 {dimension_numbers = #tpu.dot_dimension_numbers<[2], [2], [1], [1], [0, 0, 0, 1, 1, 1], [0], [0]>} : vector<4x8x32xf32>, vector<4x8x32xf32>, vector<4x8x8xf32> -> vector<4x8x8xf32>
    "tpu.trace_stop"() : () -> ()
    %cst_91 = arith.constant 0.176776692 : f32
    %267 = vector.broadcast %cst_91 : f32 to vector<4x8x8xf32>
    %268 = arith.mulf %266, %267 : vector<4x8x8xf32>
    %269 = vector.shape_cast %15 : vector<8x8xf32> to vector<1x8x8xf32>
    %270 = vector.broadcast %269 : vector<1x8x8xf32> to vector<4x8x8xf32>
    %271 = arith.addf %268, %270 : vector<4x8x8xf32>
    %cst_92 = arith.constant dense<0xFF800000> : vector<4x8xf32>
    %272 = vector.multi_reduction <maximumf>, %271, %cst_92 [2] : vector<4x8x8xf32> to vector<4x8xf32>
    %273 = vector.shape_cast %272 : vector<4x8xf32> to vector<4x8x1xf32>
    %274 = vector.broadcast %273 : vector<4x8x1xf32> to vector<4x8x8xf32>
    %275 = arith.subf %271, %274 : vector<4x8x8xf32>
    %276 = math.exp %275 : vector<4x8x8xf32>
    %cst_93 = arith.constant dense<0.000000e+00> : vector<4x8xf32>
    %277 = vector.multi_reduction <add>, %276, %cst_93 [2] : vector<4x8x8xf32> to vector<4x8xf32>
    %278 = vector.shape_cast %277 : vector<4x8xf32> to vector<4x8x1xf32>
    %279 = tpu.reciprocal %278 {approx = true} : vector<4x8x1xf32> -> vector<4x8x1xf32>
    %280 = vector.broadcast %279 : vector<4x8x1xf32> to vector<4x8x8xf32>
    %281 = arith.mulf %276, %280 : vector<4x8x8xf32>
    "tpu.trace_start"() <{level = 10 : i32, message = "hqk,hkd->hqd"}> : () -> ()
    %cst_94 = arith.constant dense<0.000000e+00> : vector<4x8x32xf32>
    %282 = tpu.matmul %281, %265, %cst_94 {dimension_numbers = #tpu.dot_dimension_numbers<[2], [1], [1], [2], [0, 0, 0, 1, 1, 2], [0], [0]>} : vector<4x8x8xf32>, vector<4x8x32xf32>, vector<4x8x32xf32> -> vector<4x8x32xf32>
    "tpu.trace_stop"() : () -> ()
    %283 = tpu.transpose %282, [1, 0, 2] : vector<4x8x32xf32> -> vector<8x4x32xf32>
    %284 = vector.shape_cast %283 : vector<8x4x32xf32> to vector<8x128xf32>
    %285 = tpu.concatenate %256, %284 in 0 : vector<8x128xf32>, vector<8x128xf32> -> vector<16x128xf32>
    %c1_95 = arith.constant 1 : index
    %c0_96 = arith.constant 0 : index
    %c0_97 = arith.constant 0 : index
    %286 = vector.load %arg7[%c1_95, %c0_96, %c0_97] : memref<2x128x128xf32, #tpu.memory_space<vmem>>, vector<1x128x128xf32>
    %287 = vector.shape_cast %286 : vector<1x128x128xf32> to vector<128x128xf32>
    %cst_98 = arith.constant dense<0.000000e+00> : vector<16x128xf32>
    %288 = tpu.matmul %285, %287, %cst_98 {dimension_numbers = #tpu.dot_dimension_numbers<[1], [0], [0], [1], [0, 0, 1, 1], [], []>} : vector<16x128xf32>, vector<128x128xf32>, vector<16x128xf32> -> vector<16x128xf32>
    %c1_99 = arith.constant 1 : index
    %c0_100 = arith.constant 0 : index
    %289 = vector.load %arg8[%c1_99, %c0_100] : memref<2x128xf32, #tpu.memory_space<vmem>>, vector<1x128xf32>
    %290 = vector.shape_cast %289 : vector<1x128xf32> to vector<128xf32>
    %291 = vector.shape_cast %290 : vector<128xf32> to vector<1x128xf32>
    %292 = vector.broadcast %291 : vector<1x128xf32> to vector<16x128xf32>
    %293 = arith.addf %288, %292 : vector<16x128xf32>
    %294 = arith.addf %197, %293 : vector<16x128xf32>
    %c1_101 = arith.constant 1 : index
    %c0_102 = arith.constant 0 : index
    %295 = vector.load %arg9[%c1_101, %c0_102] : memref<2x128xf32, #tpu.memory_space<vmem>>, vector<1x128xf32>
    %296 = vector.shape_cast %295 : vector<1x128xf32> to vector<128xf32>
    %297 = vector.shape_cast %296 : vector<128xf32> to vector<1x128xf32>
    %c1_103 = arith.constant 1 : index
    %c0_104 = arith.constant 0 : index
    %298 = vector.load %arg10[%c1_103, %c0_104] : memref<2x128xf32, #tpu.memory_space<vmem>>, vector<1x128xf32>
    %299 = vector.shape_cast %298 : vector<1x128xf32> to vector<128xf32>
    %300 = vector.shape_cast %299 : vector<128xf32> to vector<1x128xf32>
    %cst_105 = arith.constant dense<0.000000e+00> : vector<16xf32>
    %301 = vector.multi_reduction <add>, %294, %cst_105 [1] : vector<16x128xf32> to vector<16xf32>
    %302 = vector.shape_cast %301 : vector<16xf32> to vector<16x1xf32>
    %cst_106 = arith.constant 1.280000e+02 : f32
    %303 = vector.broadcast %cst_106 : f32 to vector<16x1xf32>
    %304 = arith.divf %302, %303 : vector<16x1xf32>
    %305 = vector.broadcast %304 : vector<16x1xf32> to vector<16x128xf32>
    %306 = arith.subf %294, %305 : vector<16x128xf32>
    %307 = arith.mulf %306, %306 : vector<16x128xf32>
    %cst_107 = arith.constant dense<0.000000e+00> : vector<16xf32>
    %308 = vector.multi_reduction <add>, %307, %cst_107 [1] : vector<16x128xf32> to vector<16xf32>
    %309 = vector.shape_cast %308 : vector<16xf32> to vector<16x1xf32>
    %cst_108 = arith.constant 1.280000e+02 : f32
    %310 = vector.broadcast %cst_108 : f32 to vector<16x1xf32>
    %311 = arith.divf %309, %310 : vector<16x1xf32>
    %312 = vector.broadcast %304 : vector<16x1xf32> to vector<16x128xf32>
    %313 = arith.subf %294, %312 : vector<16x128xf32>
    %cst_109 = arith.constant 9.99999974E-6 : f32
    %314 = vector.broadcast %cst_109 : f32 to vector<16x1xf32>
    %315 = arith.addf %311, %314 : vector<16x1xf32>
    %316 = math.rsqrt %315 : vector<16x1xf32>
    %317 = vector.broadcast %316 : vector<16x1xf32> to vector<16x128xf32>
    %318 = arith.mulf %313, %317 : vector<16x128xf32>
    %319 = vector.broadcast %297 : vector<1x128xf32> to vector<16x128xf32>
    %320 = arith.mulf %318, %319 : vector<16x128xf32>
    %321 = vector.broadcast %300 : vector<1x128xf32> to vector<16x128xf32>
    %322 = arith.addf %320, %321 : vector<16x128xf32>
    %c1_110 = arith.constant 1 : index
    %c0_111 = arith.constant 0 : index
    %c0_112 = arith.constant 0 : index
    %323 = vector.load %arg11[%c1_110, %c0_111, %c0_112] : memref<2x128x256xf32, #tpu.memory_space<vmem>>, vector<1x128x256xf32>
    %324 = vector.shape_cast %323 : vector<1x128x256xf32> to vector<128x256xf32>
    %cst_113 = arith.constant dense<0.000000e+00> : vector<16x256xf32>
    %325 = tpu.matmul %322, %324, %cst_113 {dimension_numbers = #tpu.dot_dimension_numbers<[1], [0], [0], [1], [0, 0, 1, 1], [], []>} : vector<16x128xf32>, vector<128x256xf32>, vector<16x256xf32> -> vector<16x256xf32>
    %c1_114 = arith.constant 1 : index
    %c0_115 = arith.constant 0 : index
    %326 = vector.load %arg12[%c1_114, %c0_115] : memref<2x256xf32, #tpu.memory_space<vmem>>, vector<1x256xf32>
    %327 = vector.shape_cast %326 : vector<1x256xf32> to vector<256xf32>
    %328 = vector.shape_cast %327 : vector<256xf32> to vector<1x256xf32>
    %329 = vector.broadcast %328 : vector<1x256xf32> to vector<16x256xf32>
    %330 = arith.addf %325, %329 : vector<16x256xf32>
    %cst_116 = arith.constant 5.000000e-01 : f32
    %331 = vector.broadcast %cst_116 : f32 to vector<16x256xf32>
    %332 = arith.mulf %331, %330 : vector<16x256xf32>
    %cst_117 = arith.constant 0.707106769 : f32
    %333 = vector.broadcast %cst_117 : f32 to vector<16x256xf32>
    %334 = arith.mulf %330, %333 : vector<16x256xf32>
    %335 = math.absf %334 : vector<16x256xf32>
    %cst_118 = arith.constant 0.327591091 : f32
    %336 = vector.broadcast %cst_118 : f32 to vector<16x256xf32>
    %337 = arith.mulf %336, %335 : vector<16x256xf32>
    %cst_119 = arith.constant 1.000000e+00 : f32
    %338 = vector.broadcast %cst_119 : f32 to vector<16x256xf32>
    %339 = arith.addf %338, %337 : vector<16x256xf32>
    %cst_120 = arith.constant 1.000000e+00 : f32
    %340 = vector.broadcast %cst_120 : f32 to vector<16x256xf32>
    %341 = arith.divf %340, %339 : vector<16x256xf32>
    %cst_121 = arith.constant 1.06140542 : f32
    %342 = vector.broadcast %cst_121 : f32 to vector<16x256xf32>
    %343 = arith.mulf %342, %341 : vector<16x256xf32>
    %cst_122 = arith.constant -1.45315206 : f32
    %344 = vector.broadcast %cst_122 : f32 to vector<16x256xf32>
    %345 = arith.addf %343, %344 : vector<16x256xf32>
    %346 = arith.mulf %345, %341 : vector<16x256xf32>
    %cst_123 = arith.constant 1.42141378 : f32
    %347 = vector.broadcast %cst_123 : f32 to vector<16x256xf32>
    %348 = arith.addf %346, %347 : vector<16x256xf32>
    %349 = arith.mulf %348, %341 : vector<16x256xf32>
    %cst_124 = arith.constant -0.284496725 : f32
    %350 = vector.broadcast %cst_124 : f32 to vector<16x256xf32>
    %351 = arith.addf %349, %350 : vector<16x256xf32>
    %352 = arith.mulf %351, %341 : vector<16x256xf32>
    %cst_125 = arith.constant 0.254829586 : f32
    %353 = vector.broadcast %cst_125 : f32 to vector<16x256xf32>
    %354 = arith.addf %352, %353 : vector<16x256xf32>
    %355 = arith.mulf %354, %341 : vector<16x256xf32>
    %cst_126 = arith.constant 0.000000e+00 : f32
    %356 = vector.broadcast %cst_126 : f32 to vector<16x256xf32>
    %357 = arith.subf %356, %335 : vector<16x256xf32>
    %358 = arith.mulf %357, %335 : vector<16x256xf32>
    %359 = math.exp %358 : vector<16x256xf32>
    %360 = arith.mulf %355, %359 : vector<16x256xf32>
    %cst_127 = arith.constant 1.000000e+00 : f32
    %361 = vector.broadcast %cst_127 : f32 to vector<16x256xf32>
    %362 = arith.subf %361, %360 : vector<16x256xf32>
    %cst_128 = arith.constant 0.000000e+00 : f32
    %363 = vector.broadcast %cst_128 : f32 to vector<16x256xf32>
    %364 = arith.cmpf oge, %334, %363 : vector<16x256xf32>
    %cst_129 = arith.constant 0.000000e+00 : f32
    %365 = vector.broadcast %cst_129 : f32 to vector<16x256xf32>
    %366 = arith.subf %365, %362 : vector<16x256xf32>
    %367 = arith.select %364, %362, %366 : vector<16x256xi1>, vector<16x256xf32>
    %cst_130 = arith.constant 1.000000e+00 : f32
    %368 = vector.broadcast %cst_130 : f32 to vector<16x256xf32>
    %369 = arith.addf %368, %367 : vector<16x256xf32>
    %370 = arith.mulf %332, %369 : vector<16x256xf32>
    %c1_131 = arith.constant 1 : index
    %c0_132 = arith.constant 0 : index
    %c0_133 = arith.constant 0 : index
    %371 = vector.load %arg13[%c1_131, %c0_132, %c0_133] : memref<2x256x128xf32, #tpu.memory_space<vmem>>, vector<1x256x128xf32>
    %372 = vector.shape_cast %371 : vector<1x256x128xf32> to vector<256x128xf32>
    %cst_134 = arith.constant dense<0.000000e+00> : vector<16x128xf32>
    %373 = tpu.matmul %370, %372, %cst_134 {dimension_numbers = #tpu.dot_dimension_numbers<[1], [0], [0], [1], [0, 0, 1, 1], [], []>} : vector<16x256xf32>, vector<256x128xf32>, vector<16x128xf32> -> vector<16x128xf32>
    %c1_135 = arith.constant 1 : index
    %c0_136 = arith.constant 0 : index
    %374 = vector.load %arg14[%c1_135, %c0_136] : memref<2x128xf32, #tpu.memory_space<vmem>>, vector<1x128xf32>
    %375 = vector.shape_cast %374 : vector<1x128xf32> to vector<128xf32>
    %376 = vector.shape_cast %375 : vector<128xf32> to vector<1x128xf32>
    %377 = vector.broadcast %376 : vector<1x128xf32> to vector<16x128xf32>
    %378 = arith.addf %373, %377 : vector<16x128xf32>
    %379 = arith.addf %294, %378 : vector<16x128xf32>
    %380 = vector.extract_strided_slice %379 {offsets = [0, 0], sizes = [1, 128], strides = [1, 1]} : vector<16x128xf32> to vector<1x128xf32>
    %381 = vector.extract_strided_slice %379 {offsets = [8, 0], sizes = [1, 128], strides = [1, 1]} : vector<16x128xf32> to vector<1x128xf32>
    %382 = tpu.concatenate %380, %381 in 1 : vector<1x128xf32>, vector<1x128xf32> -> vector<1x256xf32>
    %c0_137 = arith.constant 0 : index
    %c0_138 = arith.constant 0 : index
    %383 = vector.load %arg15[%c0_137, %c0_138] : memref<1x256xf32, #tpu.memory_space<vmem>>, vector<1x256xf32>
    %c0_139 = arith.constant 0 : index
    %c0_140 = arith.constant 0 : index
    %384 = vector.load %arg16[%c0_139, %c0_140] : memref<1x256xf32, #tpu.memory_space<vmem>>, vector<1x256xf32>
    %cst_141 = arith.constant dense<0.000000e+00> : vector<1xf32>
    %385 = vector.multi_reduction <add>, %382, %cst_141 [1] : vector<1x256xf32> to vector<1xf32>
    %386 = vector.shape_cast %385 : vector<1xf32> to vector<1x1xf32>
    %cst_142 = arith.constant 2.560000e+02 : f32
    %387 = vector.broadcast %cst_142 : f32 to vector<1x1xf32>
    %388 = arith.divf %386, %387 : vector<1x1xf32>
    %389 = vector.broadcast %388 : vector<1x1xf32> to vector<1x256xf32>
    %390 = arith.subf %382, %389 : vector<1x256xf32>
    %391 = arith.mulf %390, %390 : vector<1x256xf32>
    %cst_143 = arith.constant dense<0.000000e+00> : vector<1xf32>
    %392 = vector.multi_reduction <add>, %391, %cst_143 [1] : vector<1x256xf32> to vector<1xf32>
    %393 = vector.shape_cast %392 : vector<1xf32> to vector<1x1xf32>
    %cst_144 = arith.constant 2.560000e+02 : f32
    %394 = vector.broadcast %cst_144 : f32 to vector<1x1xf32>
    %395 = arith.divf %393, %394 : vector<1x1xf32>
    %396 = vector.broadcast %388 : vector<1x1xf32> to vector<1x256xf32>
    %397 = arith.subf %382, %396 : vector<1x256xf32>
    %cst_145 = arith.constant 9.99999974E-6 : f32
    %398 = vector.broadcast %cst_145 : f32 to vector<1x1xf32>
    %399 = arith.addf %395, %398 : vector<1x1xf32>
    %400 = math.rsqrt %399 : vector<1x1xf32>
    %401 = vector.broadcast %400 : vector<1x1xf32> to vector<1x256xf32>
    %402 = arith.mulf %397, %401 : vector<1x256xf32>
    %403 = arith.mulf %402, %383 : vector<1x256xf32>
    %404 = arith.addf %403, %384 : vector<1x256xf32>
    %c0_146 = arith.constant 0 : index
    %c0_147 = arith.constant 0 : index
    %405 = vector.load %arg17[%c0_146, %c0_147] : memref<256x256xf32, #tpu.memory_space<vmem>>, vector<256x256xf32>
    %cst_148 = arith.constant dense<0.000000e+00> : vector<1x256xf32>
    %406 = tpu.matmul %404, %405, %cst_148 {dimension_numbers = #tpu.dot_dimension_numbers<[1], [0], [0], [1], [0, 0, 1, 1], [], []>} : vector<1x256xf32>, vector<256x256xf32>, vector<1x256xf32> -> vector<1x256xf32>
    %c0_149 = arith.constant 0 : index
    %c0_150 = arith.constant 0 : index
    %407 = vector.load %arg18[%c0_149, %c0_150] : memref<1x256xf32, #tpu.memory_space<vmem>>, vector<1x256xf32>
    %408 = arith.addf %406, %407 : vector<1x256xf32>
    %cst_151 = arith.constant 0.000000e+00 : f32
    %409 = vector.broadcast %cst_151 : f32 to vector<1x256xf32>
    %410 = arith.maximumf %408, %409 : vector<1x256xf32>
    %c0_152 = arith.constant 0 : index
    %c0_153 = arith.constant 0 : index
    %411 = vector.load %arg19[%c0_152, %c0_153] : memref<256x128xf32, #tpu.memory_space<vmem>>, vector<256x128xf32>
    %cst_154 = arith.constant dense<0.000000e+00> : vector<1x128xf32>
    %412 = tpu.matmul %410, %411, %cst_154 {dimension_numbers = #tpu.dot_dimension_numbers<[1], [0], [0], [1], [0, 0, 1, 1], [], []>} : vector<1x256xf32>, vector<256x128xf32>, vector<1x128xf32> -> vector<1x128xf32>
    %c0_155 = arith.constant 0 : index
    %c0_156 = arith.constant 0 : index
    %413 = vector.load %arg20[%c0_155, %c0_156] : memref<1x128xf32, #tpu.memory_space<vmem>>, vector<1x128xf32>
    %414 = arith.addf %412, %413 : vector<1x128xf32>
    %cst_157 = arith.constant 0.000000e+00 : f32
    %415 = vector.broadcast %cst_157 : f32 to vector<1x128xf32>
    %416 = arith.subf %415, %414 : vector<1x128xf32>
    %417 = math.exp %416 : vector<1x128xf32>
    %cst_158 = arith.constant 1.000000e+00 : f32
    %418 = vector.broadcast %cst_158 : f32 to vector<1x128xf32>
    %419 = arith.addf %418, %417 : vector<1x128xf32>
    %cst_159 = arith.constant 1.000000e+00 : f32
    %420 = vector.broadcast %cst_159 : f32 to vector<1x128xf32>
    %421 = arith.divf %420, %419 : vector<1x128xf32>
    %c0_160 = arith.constant 0 : index
    %c0_161 = arith.constant 0 : index
    %c0_162 = arith.constant 0 : index
    %422 = vector.load %arg21[%c0_160, %c0_161, %c0_162] : memref<1x1x128xf32, #tpu.memory_space<vmem>>, vector<1x1x128xf32>
    %423 = vector.shape_cast %422 : vector<1x1x128xf32> to vector<1x128xf32>
    %424 = vector.shape_cast %421 : vector<1x128xf32> to vector<1x1x128xf32>
    tpu.vector_store %arg21[%c0_160, %c0_161, %c0_162], %424 {strides = array<i32>} : memref<1x1x128xf32, #tpu.memory_space<vmem>>, vector<1x1x128xf32>,
    return
  }
  func.func @transform_0(%arg0: i32) -> (i32, i32, i32) {
    %c0_i32 = arith.constant 0 : i32
    %c0_i32_0 = arith.constant 0 : i32
    %c0_i32_1 = arith.constant 0 : i32
    return %arg0, %c0_i32, %c0_i32_0 : i32, i32, i32
  }
  func.func @transform_1(%arg0: i32) -> (i32, i32) {
    %c0_i32 = arith.constant 0 : i32
    %c0_i32_0 = arith.constant 0 : i32
    %c0_i32_1 = arith.constant 0 : i32
    return %c0_i32, %c0_i32_0 : i32, i32
  }
  func.func @transform_2(%arg0: i32) -> (i32, i32) {
    %c0_i32 = arith.constant 0 : i32
    %c0_i32_0 = arith.constant 0 : i32
    %c0_i32_1 = arith.constant 0 : i32
    return %c0_i32, %c0_i32_0 : i32, i32
  }
  func.func @transform_3(%arg0: i32) -> (i32, i32) {
    %c0_i32 = arith.constant 0 : i32
    %c0_i32_0 = arith.constant 0 : i32
    %c0_i32_1 = arith.constant 0 : i32
    return %c0_i32, %c0_i32_0 : i32, i32
  }
  func.func @transform_4(%arg0: i32) -> (i32, i32) {
    %c0_i32 = arith.constant 0 : i32
    %c0_i32_0 = arith.constant 0 : i32
    %c0_i32_1 = arith.constant 0 : i32
    return %c0_i32, %c0_i32_0 : i32, i32
  }
  func.func @transform_5(%arg0: i32) -> (i32, i32, i32) {
    %c0_i32 = arith.constant 0 : i32
    %c0_i32_0 = arith.constant 0 : i32
    %c0_i32_1 = arith.constant 0 : i32
    %c0_i32_2 = arith.constant 0 : i32
    return %c0_i32, %c0_i32_0, %c0_i32_1 : i32, i32, i32
  }
  func.func @transform_6(%arg0: i32) -> (i32, i32, i32) {
    %c0_i32 = arith.constant 0 : i32
    %c0_i32_0 = arith.constant 0 : i32
    %c0_i32_1 = arith.constant 0 : i32
    %c0_i32_2 = arith.constant 0 : i32
    return %c0_i32, %c0_i32_0, %c0_i32_1 : i32, i32, i32
  }
  func.func @transform_7(%arg0: i32) -> (i32, i32) {
    %c0_i32 = arith.constant 0 : i32
    %c0_i32_0 = arith.constant 0 : i32
    %c0_i32_1 = arith.constant 0 : i32
    return %c0_i32, %c0_i32_0 : i32, i32
  }
  func.func @transform_8(%arg0: i32) -> (i32, i32) {
    %c0_i32 = arith.constant 0 : i32
    %c0_i32_0 = arith.constant 0 : i32
    %c0_i32_1 = arith.constant 0 : i32
    return %c0_i32, %c0_i32_0 : i32, i32
  }
  func.func @transform_9(%arg0: i32) -> (i32, i32) {
    %c0_i32 = arith.constant 0 : i32
    %c0_i32_0 = arith.constant 0 : i32
    %c0_i32_1 = arith.constant 0 : i32
    return %c0_i32, %c0_i32_0 : i32, i32
  }
  func.func @transform_10(%arg0: i32) -> (i32, i32, i32) {
    %c0_i32 = arith.constant 0 : i32
    %c0_i32_0 = arith.constant 0 : i32
    %c0_i32_1 = arith.constant 0 : i32
    %c0_i32_2 = arith.constant 0 : i32
    return %c0_i32, %c0_i32_0, %c0_i32_1 : i32, i32, i32
  }
  func.func @transform_11(%arg0: i32) -> (i32, i32) {
    %c0_i32 = arith.constant 0 : i32
    %c0_i32_0 = arith.constant 0 : i32
    %c0_i32_1 = arith.constant 0 : i32
    return %c0_i32, %c0_i32_0 : i32, i32
  }
  func.func @transform_12(%arg0: i32) -> (i32, i32, i32) {
    %c0_i32 = arith.constant 0 : i32
    %c0_i32_0 = arith.constant 0 : i32
    %c0_i32_1 = arith.constant 0 : i32
    %c0_i32_2 = arith.constant 0 : i32
    return %c0_i32, %c0_i32_0, %c0_i32_1 : i32, i32, i32
  }
  func.func @transform_13(%arg0: i32) -> (i32, i32) {
    %c0_i32 = arith.constant 0 : i32
    %c0_i32_0 = arith.constant 0 : i32
    %c0_i32_1 = arith.constant 0 : i32
    return %c0_i32, %c0_i32_0 : i32, i32
  }
  func.func @transform_14(%arg0: i32) -> (i32, i32) {
    %c0_i32 = arith.constant 0 : i32
    %c0_i32_0 = arith.constant 0 : i32
    %c0_i32_1 = arith.constant 0 : i32
    return %c0_i32, %c0_i32_0 : i32, i32
  }
  func.func @transform_15(%arg0: i32) -> (i32, i32) {
    %c0_i32 = arith.constant 0 : i32
    %c0_i32_0 = arith.constant 0 : i32
    %c0_i32_1 = arith.constant 0 : i32
    return %c0_i32, %c0_i32_0 : i32, i32
  }
  func.func @transform_16(%arg0: i32) -> (i32, i32) {
    %c0_i32 = arith.constant 0 : i32
    %c0_i32_0 = arith.constant 0 : i32
    %c0_i32_1 = arith.constant 0 : i32
    return %c0_i32, %c0_i32_0 : i32, i32
  }
  func.func @transform_17(%arg0: i32) -> (i32, i32) {
    %c0_i32 = arith.constant 0 : i32
    %c0_i32_0 = arith.constant 0 : i32
    %c0_i32_1 = arith.constant 0 : i32
    return %c0_i32, %c0_i32_0 : i32, i32
  }
  func.func @transform_18(%arg0: i32) -> (i32, i32) {
    %c0_i32 = arith.constant 0 : i32
    %c0_i32_0 = arith.constant 0 : i32
    %c0_i32_1 = arith.constant 0 : i32
    return %c0_i32, %c0_i32_0 : i32, i32
  }
  func.func @transform_19(%arg0: i32) -> (i32, i32) {
    %c0_i32 = arith.constant 0 : i32
    %c0_i32_0 = arith.constant 0 : i32
    %c0_i32_1 = arith.constant 0 : i32
    return %c0_i32, %c0_i32_0 : i32, i32
  }
  func.func @transform_20(%arg0: i32) -> (i32, i32, i32) {
    %c0_i32 = arith.constant 0 : i32
    %c0_i32_0 = arith.constant 0 : i32
    %c0_i32_1 = arith.constant 0 : i32
    return %arg0, %c0_i32, %c0_i32_0 : i32, i32, i32
  }
}

</mosaic_0001>

<llo_original>
// kernel: siamese_forward.1
$region0: #{siamese_forward.1}
  #allocation0 [shape = 'u32[]', space=smem, size = 0x4, offset = 0x4, fixed_abs, tag = 'smem constant byte address 0x4 - core index']
  #allocation1 [shape = 'u32[72,128]{1,0:T(1,128)}', space=vmem, size = 0x9000, scoped, tag = 'internal scratch']
  %s0 = inlined_call_operand.vmem [shape: f32[2,16,768], index: 0, kind: input, shape index: {}]
  %s1 = inlined_call_operand.vmem [shape: f32[8,128], index: 1, kind: input, shape index: {}]
  %s2 = inlined_call_operand.vmem [shape: f32[768,128], index: 2, kind: input, shape index: {}]
  %s3 = inlined_call_operand.vmem [shape: f32[2,128], index: 3, kind: input, shape index: {}]
  %s4 = inlined_call_operand.vmem [shape: f32[2,128], index: 4, kind: input, shape index: {}]
  %s5 = inlined_call_operand.vmem [shape: f32[2,128,384], index: 5, kind: input, shape index: {}]
  %s6 = inlined_call_operand.vmem [shape: f32[2,128,128], index: 6, kind: input, shape index: {}]
  %s7 = inlined_call_operand.vmem [shape: f32[2,128], index: 7, kind: input, shape index: {}]
  %s8 = inlined_call_operand.vmem [shape: f32[2,128], index: 8, kind: input, shape index: {}]
  %s9 = inlined_call_operand.vmem [shape: f32[2,128], index: 9, kind: input, shape index: {}]
  %s10 = inlined_call_operand.vmem [shape: f32[2,128,256], index: 10, kind: input, shape index: {}]
  %s11 = inlined_call_operand.vmem [shape: f32[2,256], index: 11, kind: input, shape index: {}]
  %s12 = inlined_call_operand.vmem [shape: f32[2,256,128], index: 12, kind: input, shape index: {}]
  %s13 = inlined_call_operand.vmem [shape: f32[2,128], index: 13, kind: input, shape index: {}]
  %s14 = inlined_call_operand.vmem [shape: f32[1,256], index: 14, kind: input, shape index: {}]
  %s15 = inlined_call_operand.vmem [shape: f32[1,256], index: 15, kind: input, shape index: {}]
  %s16 = inlined_call_operand.vmem [shape: f32[256,256], index: 16, kind: input, shape index: {}]
  %s17 = inlined_call_operand.vmem [shape: f32[1,256], index: 17, kind: input, shape index: {}]
  %s18 = inlined_call_operand.vmem [shape: f32[256,128], index: 18, kind: input, shape index: {}]
  %s19 = inlined_call_operand.vmem [shape: f32[1,128], index: 19, kind: input, shape index: {}]
  %s20 = inlined_call_operand.vmem [shape: f32[2,1,128], index: 20, kind: output, shape index: {}]
  %s21 = sld [smem:[#allocation0]]
  $region113: #{siamese_forward.1} parent=0
    _
  %s23 = ssub.s32 1, %s21
  %s24 = scalar_select 0, %s23, %s21
  loop: start=0, step=1, limit=4
  $region2: #{siamese_forward.1} parent=0 // loop_pre_header
    _
  $region3: #{siamese_forward.1} parent=0 // loop_header
    %s26 = sphi 0, %s30
    %p27 = scmp.ge.s32.totalorder %s26, 4
    %s36 = sphi 0, %s38
    %s39 = sphi 0, %s36
    %s40 = sphi 0, %s39
    %s56 = sphi 0, %s40
    %s60 = sphi 0, %s60
    %s62 = sphi 0, %s60
    %s63 = sphi 0, %s62
    %s77 = sphi 0, %s63
    %s81 = sphi 0, %s81
    %s83 = sphi 0, %s81
    %s84 = sphi 0, %s83
    %s98 = sphi 0, %s84
    %s102 = sphi 0, %s102
    %s104 = sphi 0, %s102
    %s105 = sphi 0, %s104
    %s119 = sphi 0, %s105
    %s123 = sphi 0, %s123
    %s125 = sphi 0, %s123
    %s126 = sphi 0, %s125
    %s140 = sphi 0, %s126
    %s144 = sphi 0, %s144
    %s146 = sphi 0, %s144
    %s147 = sphi 0, %s146
    %s161 = sphi 0, %s147
    %s165 = sphi 0, %s165
    %s167 = sphi 0, %s165
    %s168 = sphi 0, %s167
    %s182 = sphi 0, %s168
    %s186 = sphi 0, %s186
    %s188 = sphi 0, %s186
    %s189 = sphi 0, %s188
    %s203 = sphi 0, %s189
    %s207 = sphi 0, %s207
    %s209 = sphi 0, %s207
    %s210 = sphi 0, %s209
    %s224 = sphi 0, %s210
    %s228 = sphi 0, %s228
    %s230 = sphi 0, %s228
    %s231 = sphi 0, %s230
    %s245 = sphi 0, %s231
    %s249 = sphi 0, %s249
    %s251 = sphi 0, %s249
    %s252 = sphi 0, %s251
    %s266 = sphi 0, %s252
    %s270 = sphi 0, %s270
    %s272 = sphi 0, %s270
    %s273 = sphi 0, %s272
    %s287 = sphi 0, %s273
    %s291 = sphi 0, %s291
    %s293 = sphi 0, %s291
    %s294 = sphi 0, %s293
    %s308 = sphi 0, %s294
    %s312 = sphi 0, %s312
    %s314 = sphi 0, %s312
    %s315 = sphi 0, %s314
    %s329 = sphi 0, %s315
    %s333 = sphi 0, %s333
    %s335 = sphi 0, %s333
    %s336 = sphi 0, %s335
    %s350 = sphi 0, %s336
    %s354 = sphi 0, %s354
    %s356 = sphi 0, %s354
    %s357 = sphi 0, %s356
    %s371 = sphi 0, %s357
    %s375 = sphi 0, %s375
    %s377 = sphi 0, %s375
    %s378 = sphi 0, %s377
    %s392 = sphi 0, %s378
    %s396 = sphi 0, %s396
    %s398 = sphi 0, %s396
    %s399 = sphi 0, %s398
    %s413 = sphi 0, %s399
    %s417 = sphi 0, %s417
    %s419 = sphi 0, %s417
    %s420 = sphi 0, %s419
    %s434 = sphi 0, %s420
    %s438 = sphi 0, %s438
    %s440 = sphi 0, %s438
    %s441 = sphi 0, %s440
    %s455 = sphi 0, %s441
    %s461 = sphi 0, %s463
    %s464 = sphi 0, %s461
    %s465 = sphi 0, %s464
    %s481 = sphi 0, %s465
  $region4: #{siamese_forward.1} parent=0 // loop_header_branch
    %29 = sbr.rel (%p27) target = $region8
  $region5: #{siamese_forward.1} parent=0 // loop_body
    %s31 = ssub.s32 %s26, 1
    %s32 = ssub.s32 %s26, 2
    %s33 = sadd.s32 %s26, 1
    %s34 = ssub.s32 %s26, %s33
    %p35 = scmp.eq.s32.totalorder %s34, 0
    %s37 = sadd.s32 %s36, 1
    %s38 = scalar_select %p35, %s36, %s37
    %p41 = pneg %p35
    %p42 = scmp.eq.s32.totalorder %s26, 1
    %p43 = por %p41, %p42
    %p44 = scmp.ne.s32.totalorder %s36, %s39
    %p45 = scmp.eq.s32.totalorder %s26, 0
    %p46 = por %p44, %p45
    %p47 = scmp.ne.s32.totalorder %s36, %s39
    %p48 = scmp.eq.s32.totalorder %s31, 1
    %p49 = por %p47, %p48
    %p50 = scmp.ne.s32.totalorder %s39, %s40
    %p51 = scmp.eq.s32.totalorder %s31, 0
    %p52 = por %p50, %p51
    %p53 = scmp.ne.s32.totalorder %s39, %s40
    %p54 = scmp.eq.s32.totalorder %s32, 1
    %p55 = por %p53, %p54
    %p57 = scmp.ne.s32.totalorder %s40, %s56
    %p58 = scmp.eq.s32.totalorder %s32, 0
    %p59 = por %p57, %p58
    %s61 = sadd.s32 %s60, 1
    %p64 = scmp.eq.s32.totalorder %s26, 1
    %p65 = scmp.ne.s32.totalorder %s60, %s62
    %p66 = scmp.eq.s32.totalorder %s26, 0
    %p67 = por %p65, %p66
    %p68 = scmp.ne.s32.totalorder %s60, %s62
    %p69 = scmp.eq.s32.totalorder %s31, 1
    %p70 = por %p68, %p69
    %p71 = scmp.ne.s32.totalorder %s62, %s63
    %p72 = scmp.eq.s32.totalorder %s31, 0
    %p73 = por %p71, %p72
    %p74 = scmp.ne.s32.totalorder %s62, %s63
    %p75 = scmp.eq.s32.totalorder %s32, 1
    %p76 = por %p74, %p75
    %p78 = scmp.ne.s32.totalorder %s63, %s77
    %p79 = scmp.eq.s32.totalorder %s32, 0
    %p80 = por %p78, %p79
    %s82 = sadd.s32 %s81, 1
    %p85 = scmp.eq.s32.totalorder %s26, 1
    %p86 = scmp.ne.s32.totalorder %s81, %s83
    %p87 = scmp.eq.s32.totalorder %s26, 0
    %p88 = por %p86, %p87
    %p89 = scmp.ne.s32.totalorder %s81, %s83
    %p90 = scmp.eq.s32.totalorder %s31, 1
    %p91 = por %p89, %p90
    %p92 = scmp.ne.s32.totalorder %s83, %s84
    %p93 = scmp.eq.s32.totalorder %s31, 0
    %p94 = por %p92, %p93
    %p95 = scmp.ne.s32.totalorder %s83, %s84
    %p96 = scmp.eq.s32.totalorder %s32, 1
    %p97 = por %p95, %p96
    %p99 = scmp.ne.s32.totalorder %s84, %s98
    %p100 = scmp.eq.s32.totalorder %s32, 0
    %p101 = por %p99, %p100
    %s103 = sadd.s32 %s102, 1
    %p106 = scmp.eq.s32.totalorder %s26, 1
    %p107 = scmp.ne.s32.totalorder %s102, %s104
    %p108 = scmp.eq.s32.totalorder %s26, 0
    %p109 = por %p107, %p108
    %p110 = scmp.ne.s32.totalorder %s102, %s104
    %p111 = scmp.eq.s32.totalorder %s31, 1
    %p112 = por %p110, %p111
    %p113 = scmp.ne.s32.totalorder %s104, %s105
    %p114 = scmp.eq.s32.totalorder %s31, 0
    %p115 = por %p113, %p114
    %p116 = scmp.ne.s32.totalorder %s104, %s105
    %p117 = scmp.eq.s32.totalorder %s32, 1
    %p118 = por %p116, %p117
    %p120 = scmp.ne.s32.totalorder %s105, %s119
    %p121 = scmp.eq.s32.totalorder %s32, 0
    %p122 = por %p120, %p121
    %s124 = sadd.s32 %s123, 1
    %p127 = scmp.eq.s32.totalorder %s26, 1
    %p128 = scmp.ne.s32.totalorder %s123, %s125
    %p129 = scmp.eq.s32.totalorder %s26, 0
    %p130 = por %p128, %p129
    %p131 = scmp.ne.s32.totalorder %s123, %s125
    %p132 = scmp.eq.s32.totalorder %s31, 1
    %p133 = por %p131, %p132
    %p134 = scmp.ne.s32.totalorder %s125, %s126
    %p135 = scmp.eq.s32.totalorder %s31, 0
    %p136 = por %p134, %p135
    %p137 = scmp.ne.s32.totalorder %s125, %s126
    %p138 = scmp.eq.s32.totalorder %s32, 1
    %p139 = por %p137, %p138
    %p141 = scmp.ne.s32.totalorder %s126, %s140
    %p142 = scmp.eq.s32.totalorder %s32, 0
    %p143 = por %p141, %p142
    %s145 = sadd.s32 %s144, 1
    %p148 = scmp.eq.s32.totalorder %s26, 1
    %p149 = scmp.ne.s32.totalorder %s144, %s146
    %p150 = scmp.eq.s32.totalorder %s26, 0
    %p151 = por %p149, %p150
    %p152 = scmp.ne.s32.totalorder %s144, %s146
    %p153 = scmp.eq.s32.totalorder %s31, 1
    %p154 = por %p152, %p153
    %p155 = scmp.ne.s32.totalorder %s146, %s147
    %p156 = scmp.eq.s32.totalorder %s31, 0
    %p157 = por %p155, %p156
    %p158 = scmp.ne.s32.totalorder %s146, %s147
    %p159 = scmp.eq.s32.totalorder %s32, 1
    %p160 = por %p158, %p159
    %p162 = scmp.ne.s32.totalorder %s147, %s161
    %p163 = scmp.eq.s32.totalorder %s32, 0
    %p164 = por %p162, %p163
    %s166 = sadd.s32 %s165, 1
    %p169 = scmp.eq.s32.totalorder %s26, 1
    %p170 = scmp.ne.s32.totalorder %s165, %s167
    %p171 = scmp.eq.s32.totalorder %s26, 0
    %p172 = por %p170, %p171
    %p173 = scmp.ne.s32.totalorder %s165, %s167
    %p174 = scmp.eq.s32.totalorder %s31, 1
    %p175 = por %p173, %p174
    %p176 = scmp.ne.s32.totalorder %s167, %s168
    %p177 = scmp.eq.s32.totalorder %s31, 0
    %p178 = por %p176, %p177
    %p179 = scmp.ne.s32.totalorder %s167, %s168
    %p180 = scmp.eq.s32.totalorder %s32, 1
    %p181 = por %p179, %p180
    %p183 = scmp.ne.s32.totalorder %s168, %s182
    %p184 = scmp.eq.s32.totalorder %s32, 0
    %p185 = por %p183, %p184
    %s187 = sadd.s32 %s186, 1
    %p190 = scmp.eq.s32.totalorder %s26, 1
    %p191 = scmp.ne.s32.totalorder %s186, %s188
    %p192 = scmp.eq.s32.totalorder %s26, 0
    %p193 = por %p191, %p192
    %p194 = scmp.ne.s32.totalorder %s186, %s188
    %p195 = scmp.eq.s32.totalorder %s31, 1
    %p196 = por %p194, %p195
    %p197 = scmp.ne.s32.totalorder %s188, %s189
    %p198 = scmp.eq.s32.totalorder %s31, 0
    %p199 = por %p197, %p198
    %p200 = scmp.ne.s32.totalorder %s188, %s189
    %p201 = scmp.eq.s32.totalorder %s32, 1
    %p202 = por %p200, %p201
    %p204 = scmp.ne.s32.totalorder %s189, %s203
    %p205 = scmp.eq.s32.totalorder %s32, 0
    %p206 = por %p204, %p205
    %s208 = sadd.s32 %s207, 1
    %p211 = scmp.eq.s32.totalorder %s26, 1
    %p212 = scmp.ne.s32.totalorder %s207, %s209
    %p213 = scmp.eq.s32.totalorder %s26, 0
    %p214 = por %p212, %p213
    %p215 = scmp.ne.s32.totalorder %s207, %s209
    %p216 = scmp.eq.s32.totalorder %s31, 1
    %p217 = por %p215, %p216
    %p218 = scmp.ne.s32.totalorder %s209, %s210
    %p219 = scmp.eq.s32.totalorder %s31, 0
    %p220 = por %p218, %p219
    %p221 = scmp.ne.s32.totalorder %s209, %s210
    %p222 = scmp.eq.s32.totalorder %s32, 1
    %p223 = por %p221, %p222
    %p225 = scmp.ne.s32.totalorder %s210, %s224
    %p226 = scmp.eq.s32.totalorder %s32, 0
    %p227 = por %p225, %p226
    %s229 = sadd.s32 %s228, 1
    %p232 = scmp.eq.s32.totalorder %s26, 1
    %p233 = scmp.ne.s32.totalorder %s228, %s230
    %p234 = scmp.eq.s32.totalorder %s26, 0
    %p235 = por %p233, %p234
    %p236 = scmp.ne.s32.totalorder %s228, %s230
    %p237 = scmp.eq.s32.totalorder %s31, 1
    %p238 = por %p236, %p237
    %p239 = scmp.ne.s32.totalorder %s230, %s231
    %p240 = scmp.eq.s32.totalorder %s31, 0
    %p241 = por %p239, %p240
    %p242 = scmp.ne.s32.totalorder %s230, %s231
    %p243 = scmp.eq.s32.totalorder %s32, 1
    %p244 = por %p242, %p243
    %p246 = scmp.ne.s32.totalorder %s231, %s245
    %p247 = scmp.eq.s32.totalorder %s32, 0
    %p248 = por %p246, %p247
    %s250 = sadd.s32 %s249, 1
    %p253 = scmp.eq.s32.totalorder %s26, 1
    %p254 = scmp.ne.s32.totalorder %s249, %s251
    %p255 = scmp.eq.s32.totalorder %s26, 0
    %p256 = por %p254, %p255
    %p257 = scmp.ne.s32.totalorder %s249, %s251
    %p258 = scmp.eq.s32.totalorder %s31, 1
    %p259 = por %p257, %p258
    %p260 = scmp.ne.s32.totalorder %s251, %s252
    %p261 = scmp.eq.s32.totalorder %s31, 0
    %p262 = por %p260, %p261
    %p263 = scmp.ne.s32.totalorder %s251, %s252
    %p264 = scmp.eq.s32.totalorder %s32, 1
    %p265 = por %p263, %p264
    %p267 = scmp.ne.s32.totalorder %s252, %s266
    %p268 = scmp.eq.s32.totalorder %s32, 0
    %p269 = por %p267, %p268
    %s271 = sadd.s32 %s270, 1
    %p274 = scmp.eq.s32.totalorder %s26, 1
    %p275 = scmp.ne.s32.totalorder %s270, %s272
    %p276 = scmp.eq.s32.totalorder %s26, 0
    %p277 = por %p275, %p276
    %p278 = scmp.ne.s32.totalorder %s270, %s272
    %p279 = scmp.eq.s32.totalorder %s31, 1
    %p280 = por %p278, %p279
    %p281 = scmp.ne.s32.totalorder %s272, %s273
    %p282 = scmp.eq.s32.totalorder %s31, 0
    %p283 = por %p281, %p282
    %p284 = scmp.ne.s32.totalorder %s272, %s273
    %p285 = scmp.eq.s32.totalorder %s32, 1
    %p286 = por %p284, %p285
    %p288 = scmp.ne.s32.totalorder %s273, %s287
    %p289 = scmp.eq.s32.totalorder %s32, 0
    %p290 = por %p288, %p289
    %s292 = sadd.s32 %s291, 1
    %p295 = scmp.eq.s32.totalorder %s26, 1
    %p296 = scmp.ne.s32.totalorder %s291, %s293
    %p297 = scmp.eq.s32.totalorder %s26, 0
    %p298 = por %p296, %p297
    %p299 = scmp.ne.s32.totalorder %s291, %s293
    %p300 = scmp.eq.s32.totalorder %s31, 1
    %p301 = por %p299, %p300
    %p302 = scmp.ne.s32.totalorder %s293, %s294
    %p303 = scmp.eq.s32.totalorder %s31, 0
    %p304 = por %p302, %p303
    %p305 = scmp.ne.s32.totalorder %s293, %s294
    %p306 = scmp.eq.s32.totalorder %s32, 1
    %p307 = por %p305, %p306
    %p309 = scmp.ne.s32.totalorder %s294, %s308
    %p310 = scmp.eq.s32.totalorder %s32, 0
    %p311 = por %p309, %p310
    %s313 = sadd.s32 %s312, 1
    %p316 = scmp.eq.s32.totalorder %s26, 1
    %p317 = scmp.ne.s32.totalorder %s312, %s314
    %p318 = scmp.eq.s32.totalorder %s26, 0
    %p319 = por %p317, %p318
    %p320 = scmp.ne.s32.totalorder %s312, %s314
    %p321 = scmp.eq.s32.totalorder %s31, 1
    %p322 = por %p320, %p321
    %p323 = scmp.ne.s32.totalorder %s314, %s315
    %p324 = scmp.eq.s32.totalorder %s31, 0
    %p325 = por %p323, %p324
    %p326 = scmp.ne.s32.totalorder %s314, %s315
    %p327 = scmp.eq.s32.totalorder %s32, 1
    %p328 = por %p326, %p327
    %p330 = scmp.ne.s32.totalorder %s315, %s329
    %p331 = scmp.eq.s32.totalorder %s32, 0
    %p332 = por %p330, %p331
    %s334 = sadd.s32 %s333, 1
    %p337 = scmp.eq.s32.totalorder %s26, 1
    %p338 = scmp.ne.s32.totalorder %s333, %s335
    %p339 = scmp.eq.s32.totalorder %s26, 0
    %p340 = por %p338, %p339
    %p341 = scmp.ne.s32.totalorder %s333, %s335
    %p342 = scmp.eq.s32.totalorder %s31, 1
    %p343 = por %p341, %p342
    %p344 = scmp.ne.s32.totalorder %s335, %s336
    %p345 = scmp.eq.s32.totalorder %s31, 0
    %p346 = por %p344, %p345
    %p347 = scmp.ne.s32.totalorder %s335, %s336
    %p348 = scmp.eq.s32.totalorder %s32, 1
    %p349 = por %p347, %p348
    %p351 = scmp.ne.s32.totalorder %s336, %s350
    %p352 = scmp.eq.s32.totalorder %s32, 0
    %p353 = por %p351, %p352
    %s355 = sadd.s32 %s354, 1
    %p358 = scmp.eq.s32.totalorder %s26, 1
    %p359 = scmp.ne.s32.totalorder %s354, %s356
    %p360 = scmp.eq.s32.totalorder %s26, 0
    %p361 = por %p359, %p360
    %p362 = scmp.ne.s32.totalorder %s354, %s356
    %p363 = scmp.eq.s32.totalorder %s31, 1
    %p364 = por %p362, %p363
    %p365 = scmp.ne.s32.totalorder %s356, %s357
    %p366 = scmp.eq.s32.totalorder %s31, 0
    %p367 = por %p365, %p366
    %p368 = scmp.ne.s32.totalorder %s356, %s357
    %p369 = scmp.eq.s32.totalorder %s32, 1
    %p370 = por %p368, %p369
    %p372 = scmp.ne.s32.totalorder %s357, %s371
    %p373 = scmp.eq.s32.totalorder %s32, 0
    %p374 = por %p372, %p373
    %s376 = sadd.s32 %s375, 1
    %p379 = scmp.eq.s32.totalorder %s26, 1
    %p380 = scmp.ne.s32.totalorder %s375, %s377
    %p381 = scmp.eq.s32.totalorder %s26, 0
    %p382 = por %p380, %p381
    %p383 = scmp.ne.s32.totalorder %s375, %s377
    %p384 = scmp.eq.s32.totalorder %s31, 1
    %p385 = por %p383, %p384
    %p386 = scmp.ne.s32.totalorder %s377, %s378
    %p387 = scmp.eq.s32.totalorder %s31, 0
    %p388 = por %p386, %p387
    %p389 = scmp.ne.s32.totalorder %s377, %s378
    %p390 = scmp.eq.s32.totalorder %s32, 1
    %p391 = por %p389, %p390
    %p393 = scmp.ne.s32.totalorder %s378, %s392
    %p394 = scmp.eq.s32.totalorder %s32, 0
    %p395 = por %p393, %p394
    %s397 = sadd.s32 %s396, 1
    %p400 = scmp.eq.s32.totalorder %s26, 1
    %p401 = scmp.ne.s32.totalorder %s396, %s398
    %p402 = scmp.eq.s32.totalorder %s26, 0
    %p403 = por %p401, %p402
    %p404 = scmp.ne.s32.totalorder %s396, %s398
    %p405 = scmp.eq.s32.totalorder %s31, 1
    %p406 = por %p404, %p405
    %p407 = scmp.ne.s32.totalorder %s398, %s399
    %p408 = scmp.eq.s32.totalorder %s31, 0
    %p409 = por %p407, %p408
    %p410 = scmp.ne.s32.totalorder %s398, %s399
    %p411 = scmp.eq.s32.totalorder %s32, 1
    %p412 = por %p410, %p411
    %p414 = scmp.ne.s32.totalorder %s399, %s413
    %p415 = scmp.eq.s32.totalorder %s32, 0
    %p416 = por %p414, %p415
    %s418 = sadd.s32 %s417, 1
    %p421 = scmp.eq.s32.totalorder %s26, 1
    %p422 = scmp.ne.s32.totalorder %s417, %s419
    %p423 = scmp.eq.s32.totalorder %s26, 0
    %p424 = por %p422, %p423
    %p425 = scmp.ne.s32.totalorder %s417, %s419
    %p426 = scmp.eq.s32.totalorder %s31, 1
    %p427 = por %p425, %p426
    %p428 = scmp.ne.s32.totalorder %s419, %s420
    %p429 = scmp.eq.s32.totalorder %s31, 0
    %p430 = por %p428, %p429
    %p431 = scmp.ne.s32.totalorder %s419, %s420
    %p432 = scmp.eq.s32.totalorder %s32, 1
    %p433 = por %p431, %p432
    %p435 = scmp.ne.s32.totalorder %s420, %s434
    %p436 = scmp.eq.s32.totalorder %s32, 0
    %p437 = por %p435, %p436
    %s439 = sadd.s32 %s438, 1
    %p442 = scmp.eq.s32.totalorder %s26, 1
    %p443 = scmp.ne.s32.totalorder %s438, %s440
    %p444 = scmp.eq.s32.totalorder %s26, 0
    %p445 = por %p443, %p444
    %p446 = scmp.ne.s32.totalorder %s438, %s440
    %p447 = scmp.eq.s32.totalorder %s31, 1
    %p448 = por %p446, %p447
    %p449 = scmp.ne.s32.totalorder %s440, %s441
    %p450 = scmp.eq.s32.totalorder %s31, 0
    %p451 = por %p449, %p450
    %p452 = scmp.ne.s32.totalorder %s440, %s441
    %p453 = scmp.eq.s32.totalorder %s32, 1
    %p454 = por %p452, %p453
    %p456 = scmp.ne.s32.totalorder %s441, %s455
    %p457 = scmp.eq.s32.totalorder %s32, 0
    %p458 = por %p456, %p457
    %s459 = ssub.s32 %s26, %s33
    %p460 = scmp.eq.s32.totalorder %s459, 0
    %s462 = sadd.s32 %s461, 1
    %s463 = scalar_select %p460, %s461, %s462
    %p466 = pneg %p460
    %p467 = scmp.eq.s32.totalorder %s26, 1
    %p468 = por %p466, %p467
    %p469 = scmp.ne.s32.totalorder %s461, %s464
    %p470 = scmp.eq.s32.totalorder %s26, 0
    %p471 = por %p469, %p470
    %p472 = scmp.ne.s32.totalorder %s461, %s464
    %p473 = scmp.eq.s32.totalorder %s31, 1
    %p474 = por %p472, %p473
    %p475 = scmp.ne.s32.totalorder %s464, %s465
    %p476 = scmp.eq.s32.totalorder %s31, 0
    %p477 = por %p475, %p476
    %p478 = scmp.ne.s32.totalorder %s464, %s465
    %p479 = scmp.eq.s32.totalorder %s32, 1
    %p480 = por %p478, %p479
    %p482 = scmp.ne.s32.totalorder %s465, %s481
    %p483 = scmp.eq.s32.totalorder %s32, 0
    %p484 = por %p482, %p483
    %p485 = scmp.le.s32.totalorder 1, %s26
    %p486 = scmp.lt.s32.totalorder %s26, 3
    %p487 = pnand %p485, %p486
    %p488 = pneg %p487
    // Predicated region
    $region9: #{siamese_forward.1} parent=5 // pred_check
      _
    $region10: #{siamese_forward.1} parent=5 // pred_check_branch
      %490 = sbr.rel (%p487) target = $region12
    $region11: #{siamese_forward.1} parent=5 // pred_region
      %s491 = ssub.s32 %s26, 1
      // Predicated region
      $region13: #{siamese_forward.1} parent=11 // pred_check
        %p492 = pneg %p73
      $region14: #{siamese_forward.1} parent=11 // pred_check_branch
        %494 = sbr.rel (%p492) target = $region16
      $region15: #{siamese_forward.1} parent=11 // pred_region
        _
      $region16: #{siamese_forward.1} parent=11 // pred_fallthru
        _
      // Predicated region
      $region17: #{siamese_forward.1} parent=11 // pred_check
        %p495 = pneg %p94
      $region18: #{siamese_forward.1} parent=11 // pred_check_branch
        %497 = sbr.rel (%p495) target = $region20
      $region19: #{siamese_forward.1} parent=11 // pred_region
        _
      $region20: #{siamese_forward.1} parent=11 // pred_fallthru
        _
      // Predicated region
      $region21: #{siamese_forward.1} parent=11 // pred_check
        %p498 = pneg %p115
      $region22: #{siamese_forward.1} parent=11 // pred_check_branch
        %500 = sbr.rel (%p498) target = $region24
      $region23: #{siamese_forward.1} parent=11 // pred_region
        _
      $region24: #{siamese_forward.1} parent=11 // pred_fallthru
        _
      // Predicated region
      $region25: #{siamese_forward.1} parent=11 // pred_check
        %p501 = pneg %p136
      $region26: #{siamese_forward.1} parent=11 // pred_check_branch
        %503 = sbr.rel (%p501) target = $region28
      $region27: #{siamese_forward.1} parent=11 // pred_region
        _
      $region28: #{siamese_forward.1} parent=11 // pred_fallthru
        _
      // Predicated region
      $region29: #{siamese_forward.1} parent=11 // pred_check
        %p504 = pneg %p157
      $region30: #{siamese_forward.1} parent=11 // pred_check_branch
        %506 = sbr.rel (%p504) target = $region32
      $region31: #{siamese_forward.1} parent=11 // pred_region
        _
      $region32: #{siamese_forward.1} parent=11 // pred_fallthru
        _
      // Predicated region
      $region33: #{siamese_forward.1} parent=11 // pred_check
        %p507 = pneg %p178
      $region34: #{siamese_forward.1} parent=11 // pred_check_branch
        %509 = sbr.rel (%p507) target = $region36
      $region35: #{siamese_forward.1} parent=11 // pred_region
        _
      $region36: #{siamese_forward.1} parent=11 // pred_fallthru
        _
      // Predicated region
      $region37: #{siamese_forward.1} parent=11 // pred_check
        %p510 = pneg %p199
      $region38: #{siamese_forward.1} parent=11 // pred_check_branch
        %512 = sbr.rel (%p510) target = $region40
      $region39: #{siamese_forward.1} parent=11 // pred_region
        _
      $region40: #{siamese_forward.1} parent=11 // pred_fallthru
        _
      // Predicated region
      $region41: #{siamese_forward.1} parent=11 // pred_check
        %p513 = pneg %p220
      $region42: #{siamese_forward.1} parent=11 // pred_check_branch
        %515 = sbr.rel (%p513) target = $region44
      $region43: #{siamese_forward.1} parent=11 // pred_region
        _
      $region44: #{siamese_forward.1} parent=11 // pred_fallthru
        _
      // Predicated region
      $region45: #{siamese_forward.1} parent=11 // pred_check
        %p516 = pneg %p241
      $region46: #{siamese_forward.1} parent=11 // pred_check_branch
        %518 = sbr.rel (%p516) target = $region48
      $region47: #{siamese_forward.1} parent=11 // pred_region
        _
      $region48: #{siamese_forward.1} parent=11 // pred_fallthru
        _
      // Predicated region
      $region49: #{siamese_forward.1} parent=11 // pred_check
        %p519 = pneg %p262
      $region50: #{siamese_forward.1} parent=11 // pred_check_branch
        %521 = sbr.rel (%p519) target = $region52
      $region51: #{siamese_forward.1} parent=11 // pred_region
        _
      $region52: #{siamese_forward.1} parent=11 // pred_fallthru
        _
      // Predicated region
      $region53: #{siamese_forward.1} parent=11 // pred_check
        %p522 = pneg %p283
      $region54: #{siamese_forward.1} parent=11 // pred_check_branch
        %524 = sbr.rel (%p522) target = $region56
      $region55: #{siamese_forward.1} parent=11 // pred_region
        _
      $region56: #{siamese_forward.1} parent=11 // pred_fallthru
        _
      // Predicated region
      $region57: #{siamese_forward.1} parent=11 // pred_check
        %p525 = pneg %p304
      $region58: #{siamese_forward.1} parent=11 // pred_check_branch
        %527 = sbr.rel (%p525) target = $region60
      $region59: #{siamese_forward.1} parent=11 // pred_region
        _
      $region60: #{siamese_forward.1} parent=11 // pred_fallthru
        _
      // Predicated region
      $region61: #{siamese_forward.1} parent=11 // pred_check
        %p528 = pneg %p325
      $region62: #{siamese_forward.1} parent=11 // pred_check_branch
        %530 = sbr.rel (%p528) target = $region64
      $region63: #{siamese_forward.1} parent=11 // pred_region
        _
      $region64: #{siamese_forward.1} parent=11 // pred_fallthru
        _
      // Predicated region
      $region65: #{siamese_forward.1} parent=11 // pred_check
        %p531 = pneg %p346
      $region66: #{siamese_forward.1} parent=11 // pred_check_branch
        %533 = sbr.rel (%p531) target = $region68
      $region67: #{siamese_forward.1} parent=11 // pred_region
        _
      $region68: #{siamese_forward.1} parent=11 // pred_fallthru
        _
      // Predicated region
      $region69: #{siamese_forward.1} parent=11 // pred_check
        %p534 = pneg %p367
      $region70: #{siamese_forward.1} parent=11 // pred_check_branch
        %536 = sbr.rel (%p534) target = $region72
      $region71: #{siamese_forward.1} parent=11 // pred_region
        _
      $region72: #{siamese_forward.1} parent=11 // pred_fallthru
        _
      // Predicated region
      $region73: #{siamese_forward.1} parent=11 // pred_check
        %p537 = pneg %p388
      $region74: #{siamese_forward.1} parent=11 // pred_check_branch
        %539 = sbr.rel (%p537) target = $region76
      $region75: #{siamese_forward.1} parent=11 // pred_region
        _
      $region76: #{siamese_forward.1} parent=11 // pred_fallthru
        _
      // Predicated region
      $region77: #{siamese_forward.1} parent=11 // pred_check
        %p540 = pneg %p409
      $region78: #{siamese_forward.1} parent=11 // pred_check_branch
        %542 = sbr.rel (%p540) target = $region80
      $region79: #{siamese_forward.1} parent=11 // pred_region
        _
      $region80: #{siamese_forward.1} parent=11 // pred_fallthru
        _
      // Predicated region
      $region81: #{siamese_forward.1} parent=11 // pred_check
        %p543 = pneg %p430
      $region82: #{siamese_forward.1} parent=11 // pred_check_branch
        %545 = sbr.rel (%p543) target = $region84
      $region83: #{siamese_forward.1} parent=11 // pred_region
        _
      $region84: #{siamese_forward.1} parent=11 // pred_fallthru
        _
      // Predicated region
      $region85: #{siamese_forward.1} parent=11 // pred_check
        %p546 = pneg %p451
      $region86: #{siamese_forward.1} parent=11 // pred_check_branch
        %548 = sbr.rel (%p546) target = $region88
      $region87: #{siamese_forward.1} parent=11 // pred_region
        _
      $region88: #{siamese_forward.1} parent=11 // pred_fallthru
        _
    $region12: #{siamese_forward.1} parent=5 // pred_fallthru
      _
    %p549 = scmp.lt.s32.totalorder %s26, 2
    // Predicated region
    $region89: #{siamese_forward.1} parent=5 // pred_check
      %p550 = pneg %p549
    $region90: #{siamese_forward.1} parent=5 // pred_check_branch
      %552 = sbr.rel (%p550) target = $region92
    $region91: #{siamese_forward.1} parent=5 // pred_region
      // Predicated region
      $region93: #{siamese_forward.1} parent=91 // pred_check
        %p553 = pneg %p46
      $region94: #{siamese_forward.1} parent=91 // pred_check_branch
        %555 = sbr.rel (%p553) target = $region96
      $region95: #{siamese_forward.1} parent=91 // pred_region
        %p556 = scmp.lt.s32.totalorder %s26, 1
        %s557 = scalar_select %p556, %s26, 1
        %s558 = smul.addr %s557, 12
        %s559 = smul.addr %s558, 8
        %s560 = scalar_lea.vmem %s0, %s559
      $region96: #{siamese_forward.1} parent=91 // pred_fallthru
        _
    $region92: #{siamese_forward.1} parent=5 // pred_fallthru
      _
    %p561 = scmp.le.s32.totalorder 1, %s26
    %p562 = scmp.lt.s32.totalorder %s26, 3
    %p563 = pnand %p561, %p562
    %p564 = pneg %p563
    // Predicated region
    $region97: #{siamese_forward.1} parent=5 // pred_check
      _
    $region98: #{siamese_forward.1} parent=5 // pred_check_branch
      %566 = sbr.rel (%p563) target = $region100
    $region99: #{siamese_forward.1} parent=5 // pred_region
      %s567 = ssub.s32 %s26, 1
      %p568 = scmp.lt.s32.totalorder %s31, 1
      %s569 = scalar_select %p568, %s31, 1
      %s570 = smul.addr %s569, 12
      %s571 = smul.addr %s570, 8
      %s572 = scalar_lea.vmem %s0, %s571
      %p573 = pneg %p52
      %p574 = pneg %p49
      %p575 = pneg %p73
      %p576 = pneg %p70
      %p577 = pneg %p94
      %p578 = pneg %p91
      %p579 = pneg %p115
      %p580 = pneg %p112
      %p581 = pneg %p136
      %p582 = pneg %p133
      %p583 = pneg %p157
      %p584 = pneg %p154
      %p585 = pneg %p178
      %p586 = pneg %p175
      %p587 = pneg %p199
      %p588 = pneg %p196
      %p589 = pneg %p220
      %p590 = pneg %p217
      %p591 = pneg %p241
      %p592 = pneg %p238
      %p593 = pneg %p262
      %p594 = pneg %p259
      %p595 = pneg %p283
      %p596 = pneg %p280
      %p597 = pneg %p304
      %p598 = pneg %p301
      %p599 = pneg %p325
      %p600 = pneg %p322
      %p601 = pneg %p346
      %p602 = pneg %p343
      %p603 = pneg %p367
      %p604 = pneg %p364
      %p605 = pneg %p388
      %p606 = pneg %p385
      %p607 = pneg %p409
      %p608 = pneg %p406
      %p609 = pneg %p430
      %p610 = pneg %p427
      %p611 = pneg %p451
      %p612 = pneg %p448
      %p613 = pneg %p477
      %p614 = pneg %p474
      %p615 = scmp.lt.s32.totalorder %s31, 1
      %s616 = scalar_select %p615, %s31, 1
      %s617 = scalar_lea.vmem %s20, %s616
      %p618 = scmp.lt.s32.totalorder %s31, 1
      %s619 = scalar_select %p618, %s31, 1
      %s620 = smul.addr %s619, 12
      %s621 = smul.addr %s620, 8
      %s622 = scalar_lea.vmem %s0, %s621
      %p623 = scmp.lt.s32.totalorder %s31, 1
      %s624 = scalar_select %p623, %s31, 1
      %s625 = scalar_lea.vmem %s20, %s624
      %v626 = vld [vmem:[%s622] sm:$0xff]
      %v627 = vld [vmem:[%s622 + $0x8] sm:$0xff]
      %v628 = vld [vmem:[%s622 + $0x10] sm:$0xff]
      %v629 = vld [vmem:[%s622 + $0x18] sm:$0xff]
      %v630 = vld [vmem:[%s622 + $0x20] sm:$0xff]
      %v631 = vld [vmem:[%s622 + $0x28] sm:$0xff]
      %v632 = vld [vmem:[%s622 + $0x30] sm:$0xff]
      %v633 = vld [vmem:[%s622 + $0x38] sm:$0xff]
      %v634 = vld [vmem:[%s622 + $0x40] sm:$0xff]
      %v635 = vld [vmem:[%s622 + $0x48] sm:$0xff]
      %v636 = vld [vmem:[%s622 + $0x50] sm:$0xff]
      %v637 = vld [vmem:[%s622 + $0x58] sm:$0xff]
      %v638 = vld [vmem:[%s2] sm:$0xff]
      %v639 = vld [vmem:[%s2 + $0x8] sm:$0xff]
      %v640 = vld [vmem:[%s2 + $0x10] sm:$0xff]
      %v641 = vld [vmem:[%s2 + $0x18] sm:$0xff]
      %v642 = vld [vmem:[%s2 + $0x20] sm:$0xff]
      %v643 = vld [vmem:[%s2 + $0x28] sm:$0xff]
      %v644 = vld [vmem:[%s2 + $0x30] sm:$0xff]
      %v645 = vld [vmem:[%s2 + $0x38] sm:$0xff]
      %v646 = vld [vmem:[%s2 + $0x40] sm:$0xff]
      %v647 = vld [vmem:[%s2 + $0x48] sm:$0xff]
      %v648 = vld [vmem:[%s2 + $0x50] sm:$0xff]
      %v649 = vld [vmem:[%s2 + $0x58] sm:$0xff]
      %v650 = vld [vmem:[%s2 + $0x60] sm:$0xff]
      %v651 = vld [vmem:[%s2 + $0x68] sm:$0xff]
      %v652 = vld [vmem:[%s2 + $0x70] sm:$0xff]
      %v653 = vld [vmem:[%s2 + $0x78] sm:$0xff]
      %v654 = vld [vmem:[%s2 + $0x80] sm:$0xff]
      %v655 = vld [vmem:[%s2 + $0x88] sm:$0xff]
      %v656 = vld [vmem:[%s2 + $0x90] sm:$0xff]
      %v657 = vld [vmem:[%s2 + $0x98] sm:$0xff]
      %v658 = vld [vmem:[%s2 + $0xa0] sm:$0xff]
      %v659 = vld [vmem:[%s2 + $0xa8] sm:$0xff]
      %v660 = vld [vmem:[%s2 + $0xb0] sm:$0xff]
      %v661 = vld [vmem:[%s2 + $0xb8] sm:$0xff]
      %v662 = vld [vmem:[%s2 + $0xc0] sm:$0xff]
      %v663 = vld [vmem:[%s2 + $0xc8] sm:$0xff]
      %v664 = vld [vmem:[%s2 + $0xd0] sm:$0xff]
      %v665 = vld [vmem:[%s2 + $0xd8] sm:$0xff]
      %v666 = vld [vmem:[%s2 + $0xe0] sm:$0xff]
      %v667 = vld [vmem:[%s2 + $0xe8] sm:$0xff]
      %v668 = vld [vmem:[%s2 + $0xf0] sm:$0xff]
      %v669 = vld [vmem:[%s2 + $0xf8] sm:$0xff]
      %v670 = vld [vmem:[%s2 + $0x100] sm:$0xff]
      %v671 = vld [vmem:[%s2 + $0x108] sm:$0xff]
      %v672 = vld [vmem:[%s2 + $0x110] sm:$0xff]
      %v673 = vld [vmem:[%s2 + $0x118] sm:$0xff]
      %v674 = vld [vmem:[%s2 + $0x120] sm:$0xff]
      %v675 = vld [vmem:[%s2 + $0x128] sm:$0xff]
      %v676 = vld [vmem:[%s2 + $0x130] sm:$0xff]
      %v677 = vld [vmem:[%s2 + $0x138] sm:$0xff]
      %v678 = vld [vmem:[%s2 + $0x140] sm:$0xff]
      %v679 = vld [vmem:[%s2 + $0x148] sm:$0xff]
      %v680 = vld [vmem:[%s2 + $0x150] sm:$0xff]
      %v681 = vld [vmem:[%s2 + $0x158] sm:$0xff]
      %v682 = vld [vmem:[%s2 + $0x160] sm:$0xff]
      %v683 = vld [vmem:[%s2 + $0x168] sm:$0xff]
      %v684 = vld [vmem:[%s2 + $0x170] sm:$0xff]
      %v685 = vld [vmem:[%s2 + $0x178] sm:$0xff]
      %v686 = vld [vmem:[%s2 + $0x180] sm:$0xff]
      %v687 = vld [vmem:[%s2 + $0x188] sm:$0xff]
      %v688 = vld [vmem:[%s2 + $0x190] sm:$0xff]
      %v689 = vld [vmem:[%s2 + $0x198] sm:$0xff]
      %v690 = vld [vmem:[%s2 + $0x1a0] sm:$0xff]
      %v691 = vld [vmem:[%s2 + $0x1a8] sm:$0xff]
      %v692 = vld [vmem:[%s2 + $0x1b0] sm:$0xff]
      %v693 = vld [vmem:[%s2 + $0x1b8] sm:$0xff]
      %v694 = vld [vmem:[%s2 + $0x1c0] sm:$0xff]
      %v695 = vld [vmem:[%s2 + $0x1c8] sm:$0xff]
      %v696 = vld [vmem:[%s2 + $0x1d0] sm:$0xff]
      %v697 = vld [vmem:[%s2 + $0x1d8] sm:$0xff]
      %v698 = vld [vmem:[%s2 + $0x1e0] sm:$0xff]
      %v699 = vld [vmem:[%s2 + $0x1e8] sm:$0xff]
      %v700 = vld [vmem:[%s2 + $0x1f0] sm:$0xff]
      %v701 = vld [vmem:[%s2 + $0x1f8] sm:$0xff]
      %v702 = vld [vmem:[%s2 + $0x200] sm:$0xff]
      %v703 = vld [vmem:[%s2 + $0x208] sm:$0xff]
      %v704 = vld [vmem:[%s2 + $0x210] sm:$0xff]
      %v705 = vld [vmem:[%s2 + $0x218] sm:$0xff]
      %v706 = vld [vmem:[%s2 + $0x220] sm:$0xff]
      %v707 = vld [vmem:[%s2 + $0x228] sm:$0xff]
      %v708 = vld [vmem:[%s2 + $0x230] sm:$0xff]
      %v709 = vld [vmem:[%s2 + $0x238] sm:$0xff]
      %v710 = vld [vmem:[%s2 + $0x240] sm:$0xff]
      %v711 = vld [vmem:[%s2 + $0x248] sm:$0xff]
      %v712 = vld [vmem:[%s2 + $0x250] sm:$0xff]
      %v713 = vld [vmem:[%s2 + $0x258] sm:$0xff]
      %v714 = vld [vmem:[%s2 + $0x260] sm:$0xff]
      %v715 = vld [vmem:[%s2 + $0x268] sm:$0xff]
      %v716 = vld [vmem:[%s2 + $0x270] sm:$0xff]
      %v717 = vld [vmem:[%s2 + $0x278] sm:$0xff]
      %v718 = vld [vmem:[%s2 + $0x280] sm:$0xff]
      %v719 = vld [vmem:[%s2 + $0x288] sm:$0xff]
      %v720 = vld [vmem:[%s2 + $0x290] sm:$0xff]
      %v721 = vld [vmem:[%s2 + $0x298] sm:$0xff]
      %v722 = vld [vmem:[%s2 + $0x2a0] sm:$0xff]
      %v723 = vld [vmem:[%s2 + $0x2a8] sm:$0xff]
      %v724 = vld [vmem:[%s2 + $0x2b0] sm:$0xff]
      %v725 = vld [vmem:[%s2 + $0x2b8] sm:$0xff]
      %v726 = vld [vmem:[%s2 + $0x2c0] sm:$0xff]
      %v727 = vld [vmem:[%s2 + $0x2c8] sm:$0xff]
      %v728 = vld [vmem:[%s2 + $0x2d0] sm:$0xff]
      %v729 = vld [vmem:[%s2 + $0x2d8] sm:$0xff]
      %v730 = vld [vmem:[%s2 + $0x2e0] sm:$0xff]
      %v731 = vld [vmem:[%s2 + $0x2e8] sm:$0xff]
      %v732 = vld [vmem:[%s2 + $0x2f0] sm:$0xff]
      %v733 = vld [vmem:[%s2 + $0x2f8] sm:$0xff]
      %734 = vmatpush.msra.mxu0 %v653
      %735 = vmatpush.msra.mxu0 %v652
      %736 = vmatpush.msra.mxu0 %v651
      %737 = vmatpush.msra.mxu0 %v650
      %738 = vmatpush.msra.mxu0 %v649
      %739 = vmatpush.msra.mxu0 %v648
      %740 = vmatpush.msra.mxu0 %v647
      %741 = vmatpush.msra.mxu0 %v646
      %742 = vmatpush.msra.mxu0 %v645
      %743 = vmatpush.msra.mxu0 %v644
      %744 = vmatpush.msra.mxu0 %v643
      %745 = vmatpush.msra.mxu0 %v642
      %746 = vmatpush.msra.mxu0 %v641
      %747 = vmatpush.msra.mxu0 %v640
      %748 = vmatpush.msra.mxu0 %v639
      %749 = vmatpush.msra.mxu0 %v638
      %750 = vmatmul.f32.gmra.mxu0 %v626
      %v751 = vpop.f32.mrf.mxu0
      %v752 = vadd.f32 0.0, %v751
      %753 = vmatmul.f32.gmra.mxu0 %v632
      %v754 = vpop.f32.mrf.mxu0
      %v755 = vadd.f32 0.0, %v754
      %756 = vdwg.mxu0
      %757 = vmatpush.msra.mxu0 %v669
      %758 = vmatpush.msra.mxu0 %v668
      %759 = vmatpush.msra.mxu0 %v667
      %760 = vmatpush.msra.mxu0 %v666
      %761 = vmatpush.msra.mxu0 %v665
      %762 = vmatpush.msra.mxu0 %v664
      %763 = vmatpush.msra.mxu0 %v663
      %764 = vmatpush.msra.mxu0 %v662
      %765 = vmatpush.msra.mxu0 %v661
      %766 = vmatpush.msra.mxu0 %v660
      %767 = vmatpush.msra.mxu0 %v659
      %768 = vmatpush.msra.mxu0 %v658
      %769 = vmatpush.msra.mxu0 %v657
      %770 = vmatpush.msra.mxu0 %v656
      %771 = vmatpush.msra.mxu0 %v655
      %772 = vmatpush.msra.mxu0 %v654
      %773 = vmatmul.f32.gmra.mxu0 %v627
      %v774 = vpop.f32.mrf.mxu0
      %v775 = vadd.f32 %v752, %v774
      %776 = vmatmul.f32.gmra.mxu0 %v633
      %v777 = vpop.f32.mrf.mxu0
      %v778 = vadd.f32 %v755, %v777
      %779 = vdwg.mxu0
      %780 = vmatpush.msra.mxu0 %v685
      %781 = vmatpush.msra.mxu0 %v684
      %782 = vmatpush.msra.mxu0 %v683
      %783 = vmatpush.msra.mxu0 %v682
      %784 = vmatpush.msra.mxu0 %v681
      %785 = vmatpush.msra.mxu0 %v680
      %786 = vmatpush.msra.mxu0 %v679
      %787 = vmatpush.msra.mxu0 %v678
      %788 = vmatpush.msra.mxu0 %v677
      %789 = vmatpush.msra.mxu0 %v676
      %790 = vmatpush.msra.mxu0 %v675
      %791 = vmatpush.msra.mxu0 %v674
      %792 = vmatpush.msra.mxu0 %v673
      %793 = vmatpush.msra.mxu0 %v672
      %794 = vmatpush.msra.mxu0 %v671
      %795 = vmatpush.msra.mxu0 %v670
      %796 = vmatmul.f32.gmra.mxu0 %v628
      %v797 = vpop.f32.mrf.mxu0
      %v798 = vadd.f32 %v775, %v797
      %799 = vmatmul.f32.gmra.mxu0 %v634
      %v800 = vpop.f32.mrf.mxu0
      %v801 = vadd.f32 %v778, %v800
      %802 = vdwg.mxu0
      %803 = vmatpush.msra.mxu0 %v701
      %804 = vmatpush.msra.mxu0 %v700
      %805 = vmatpush.msra.mxu0 %v699
      %806 = vmatpush.msra.mxu0 %v698
      %807 = vmatpush.msra.mxu0 %v697
      %808 = vmatpush.msra.mxu0 %v696
      %809 = vmatpush.msra.mxu0 %v695
      %810 = vmatpush.msra.mxu0 %v694
      %811 = vmatpush.msra.mxu0 %v693
      %812 = vmatpush.msra.mxu0 %v692
      %813 = vmatpush.msra.mxu0 %v691
      %814 = vmatpush.msra.mxu0 %v690
      %815 = vmatpush.msra.mxu0 %v689
      %816 = vmatpush.msra.mxu0 %v688
      %817 = vmatpush.msra.mxu0 %v687
      %818 = vmatpush.msra.mxu0 %v686
      %819 = vmatmul.f32.gmra.mxu0 %v629
      %v820 = vpop.f32.mrf.mxu0
      %v821 = vadd.f32 %v798, %v820
      %822 = vmatmul.f32.gmra.mxu0 %v635
      %v823 = vpop.f32.mrf.mxu0
      %v824 = vadd.f32 %v801, %v823
      %825 = vdwg.mxu0
      %826 = vmatpush.msra.mxu0 %v717
      %827 = vmatpush.msra.mxu0 %v716
      %828 = vmatpush.msra.mxu0 %v715
      %829 = vmatpush.msra.mxu0 %v714
      %830 = vmatpush.msra.mxu0 %v713
      %831 = vmatpush.msra.mxu0 %v712
      %832 = vmatpush.msra.mxu0 %v711
      %833 = vmatpush.msra.mxu0 %v710
      %834 = vmatpush.msra.mxu0 %v709
      %835 = vmatpush.msra.mxu0 %v708
      %836 = vmatpush.msra.mxu0 %v707
      %837 = vmatpush.msra.mxu0 %v706
      %838 = vmatpush.msra.mxu0 %v705
      %839 = vmatpush.msra.mxu0 %v704
      %840 = vmatpush.msra.mxu0 %v703
      %841 = vmatpush.msra.mxu0 %v702
      %842 = vmatmul.f32.gmra.mxu0 %v630
      %v843 = vpop.f32.mrf.mxu0
      %v844 = vadd.f32 %v821, %v843
      %845 = vmatmul.f32.gmra.mxu0 %v636
      %v846 = vpop.f32.mrf.mxu0
      %v847 = vadd.f32 %v824, %v846
      %848 = vdwg.mxu0
      %849 = vmatpush.msra.mxu0 %v733
      %850 = vmatpush.msra.mxu0 %v732
      %851 = vmatpush.msra.mxu0 %v731
      %852 = vmatpush.msra.mxu0 %v730
      %853 = vmatpush.msra.mxu0 %v729
      %854 = vmatpush.msra.mxu0 %v728
      %855 = vmatpush.msra.mxu0 %v727
      %856 = vmatpush.msra.mxu0 %v726
      %857 = vmatpush.msra.mxu0 %v725
      %858 = vmatpush.msra.mxu0 %v724
      %859 = vmatpush.msra.mxu0 %v723
      %860 = vmatpush.msra.mxu0 %v722
      %861 = vmatpush.msra.mxu0 %v721
      %862 = vmatpush.msra.mxu0 %v720
      %863 = vmatpush.msra.mxu0 %v719
      %864 = vmatpush.msra.mxu0 %v718
      %865 = vmatmul.f32.gmra.mxu0 %v631
      %v866 = vpop.f32.mrf.mxu0
      %v867 = vadd.f32 %v844, %v866
      %868 = vmatmul.f32.gmra.mxu0 %v637
      %v869 = vpop.f32.mrf.mxu0
      %v870 = vadd.f32 %v847, %v869
      %871 = vdwg.mxu0
      %v872 = vld [vmem:[%s1] sm:$0xff]
      %v873 = vadd.f32 %v867, %v872
      %v874 = vadd.f32 %v870, %v872
      %v875 = vlaneseq
      %v876 = vand.u32 %v875, 127
      %vm877 = vcmp.lt.s32.totalorder %v876, 5
      %v878 = vsel %vm877, 0.0, -1e+09
      %v879 = vld [vmem:[%s3] sm:$0x1]
      %v880 = vld [vmem:[%s4] sm:$0x1]
      %881 = vadd.xlane.f32.xlu0 %v873
      %v882 = vpop.xlane.xlu0 %881
      %883 = vadd.xlane.f32.xlu0 %v874
      %v884 = vpop.xlane.xlu0 %883
      %v885 = vrcp.pop 128.0
      %v886 = vmul.f32 128.0, %v885
      %v887 = vsub.f32 1.0, %v886
      %v888 = vmul.f32 %v885, %v887
      %v889 = vadd.f32 %v885, %v888
      %vm890 = vweird.f32 %v885
      %v891 = vsel %vm890, %v885, %v889
      %v892 = vmul.f32 %v882, %v891
      %v893 = vmul.f32 %v884, %v891
      %v894 = vsub.f32 %v873, %v892
      %v895 = vsub.f32 %v874, %v893
      %v896 = vmul.f32 %v894, %v894
      %v897 = vmul.f32 %v895, %v895
      %898 = vadd.xlane.f32.xlu0 %v896
      %v899 = vpop.xlane.xlu0 %898
      %900 = vadd.xlane.f32.xlu0 %v897
      %v901 = vpop.xlane.xlu0 %900
      %v902 = vmul.f32 %v899, %v891
      %v903 = vmul.f32 %v901, %v891
      %v904 = vadd.f32 %v902, 1e-05
      %v905 = vadd.f32 %v903, 1e-05
      %v906 = vrsqrt.pop %v904
      %v907 = vmul.f32 %v906, %v904
      %v908 = vmul.f32 %v907, %v906
      %v909 = vmul.f32 0.5, %v908
      %v910 = vsub.f32 1.5, %v909
      %v911 = vmul.f32 %v906, %v910
      %vm912 = vweird.f32 %v904
      %vm913 = vweird.f32 %v906
      %vm914 = vmor %vm912, %vm913
      %v915 = vsel %vm914, %v906, %v911
      %v916 = vrsqrt.pop %v905
      %v917 = vmul.f32 %v916, %v905
      %v918 = vmul.f32 %v917, %v916
      %v919 = vmul.f32 0.5, %v918
      %v920 = vsub.f32 1.5, %v919
      %v921 = vmul.f32 %v916, %v920
      %vm922 = vweird.f32 %v905
      %vm923 = vweird.f32 %v916
      %vm924 = vmor %vm922, %vm923
      %v925 = vsel %vm924, %v916, %v921
      %v926 = vmul.f32 %v894, %v915
      %v927 = vmul.f32 %v895, %v925
      %v928 = vperm.slane %v879, 0
      %v929 = vmul.f32 %v926, %v928
      %v930 = vmul.f32 %v927, %v928
      %v931 = vperm.slane %v880, 0
      %v932 = vadd.f32 %v929, %v931
      %v933 = vadd.f32 %v930, %v931
      %v934 = vld [vmem:[%s5] sm:$0xff]
      %v935 = vld [vmem:[%s5 + $0x8] sm:$0xff]
      %v936 = vld [vmem:[%s5 + $0x10] sm:$0xff]
      %v937 = vld [vmem:[%s5 + $0x18] sm:$0xff]
      %v938 = vld [vmem:[%s5 + $0x20] sm:$0xff]
      %v939 = vld [vmem:[%s5 + $0x28] sm:$0xff]
      %v940 = vld [vmem:[%s5 + $0x30] sm:$0xff]
      %v941 = vld [vmem:[%s5 + $0x38] sm:$0xff]
      %v942 = vld [vmem:[%s5 + $0x40] sm:$0xff]
      %v943 = vld [vmem:[%s5 + $0x48] sm:$0xff]
      %v944 = vld [vmem:[%s5 + $0x50] sm:$0xff]
      %v945 = vld [vmem:[%s5 + $0x58] sm:$0xff]
      %v946 = vld [vmem:[%s5 + $0x60] sm:$0xff]
      %v947 = vld [vmem:[%s5 + $0x68] sm:$0xff]
      %v948 = vld [vmem:[%s5 + $0x70] sm:$0xff]
      %v949 = vld [vmem:[%s5 + $0x78] sm:$0xff]
      %v950 = vld [vmem:[%s5 + $0x80] sm:$0xff]
      %v951 = vld [vmem:[%s5 + $0x88] sm:$0xff]
      %v952 = vld [vmem:[%s5 + $0x90] sm:$0xff]
      %v953 = vld [vmem:[%s5 + $0x98] sm:$0xff]
      %v954 = vld [vmem:[%s5 + $0xa0] sm:$0xff]
      %v955 = vld [vmem:[%s5 + $0xa8] sm:$0xff]
      %v956 = vld [vmem:[%s5 + $0xb0] sm:$0xff]
      %v957 = vld [vmem:[%s5 + $0xb8] sm:$0xff]
      %v958 = vld [vmem:[%s5 + $0xc0] sm:$0xff]
      %v959 = vld [vmem:[%s5 + $0xc8] sm:$0xff]
      %v960 = vld [vmem:[%s5 + $0xd0] sm:$0xff]
      %v961 = vld [vmem:[%s5 + $0xd8] sm:$0xff]
      %v962 = vld [vmem:[%s5 + $0xe0] sm:$0xff]
      %v963 = vld [vmem:[%s5 + $0xe8] sm:$0xff]
      %v964 = vld [vmem:[%s5 + $0xf0] sm:$0xff]
      %v965 = vld [vmem:[%s5 + $0xf8] sm:$0xff]
      %v966 = vld [vmem:[%s5 + $0x100] sm:$0xff]
      %v967 = vld [vmem:[%s5 + $0x108] sm:$0xff]
      %v968 = vld [vmem:[%s5 + $0x110] sm:$0xff]
      %v969 = vld [vmem:[%s5 + $0x118] sm:$0xff]
      %v970 = vld [vmem:[%s5 + $0x120] sm:$0xff]
      %v971 = vld [vmem:[%s5 + $0x128] sm:$0xff]
      %v972 = vld [vmem:[%s5 + $0x130] sm:$0xff]
      %v973 = vld [vmem:[%s5 + $0x138] sm:$0xff]
      %v974 = vld [vmem:[%s5 + $0x140] sm:$0xff]
      %v975 = vld [vmem:[%s5 + $0x148] sm:$0xff]
      %v976 = vld [vmem:[%s5 + $0x150] sm:$0xff]
      %v977 = vld [vmem:[%s5 + $0x158] sm:$0xff]
      %v978 = vld [vmem:[%s5 + $0x160] sm:$0xff]
      %v979 = vld [vmem:[%s5 + $0x168] sm:$0xff]
      %v980 = vld [vmem:[%s5 + $0x170] sm:$0xff]
      %v981 = vld [vmem:[%s5 + $0x178] sm:$0xff]
      %982 = vmatpush.msra.mxu0 %v979
      %983 = vmatpush.msra.mxu0 %v976
      %984 = vmatpush.msra.mxu0 %v973
      %985 = vmatpush.msra.mxu0 %v970
      %986 = vmatpush.msra.mxu0 %v967
      %987 = vmatpush.msra.mxu0 %v964
      %988 = vmatpush.msra.mxu0 %v961
      %989 = vmatpush.msra.mxu0 %v958
      %990 = vmatpush.msra.mxu0 %v955
      %991 = vmatpush.msra.mxu0 %v952
      %992 = vmatpush.msra.mxu0 %v949
      %993 = vmatpush.msra.mxu0 %v946
      %994 = vmatpush.msra.mxu0 %v943
      %995 = vmatpush.msra.mxu0 %v940
      %996 = vmatpush.msra.mxu0 %v937
      %997 = vmatpush.msra.mxu0 %v934
      %998 = vmatmul.f32.gmra.mxu0 %v932
      %v999 = vpop.f32.mrf.mxu0
      %v1000 = vadd.f32 0.0, %v999
      %1001 = vmatmul.f32.gmra.mxu0 %v933
      %v1002 = vpop.f32.mrf.mxu0
      %v1003 = vadd.f32 0.0, %v1002
      %1004 = vdwg.mxu0
      %1005 = vmatpush.msra.mxu0 %v980
      %1006 = vmatpush.msra.mxu0 %v977
      %1007 = vmatpush.msra.mxu0 %v974
      %1008 = vmatpush.msra.mxu0 %v971
      %1009 = vmatpush.msra.mxu0 %v968
      %1010 = vmatpush.msra.mxu0 %v965
      %1011 = vmatpush.msra.mxu0 %v962
      %1012 = vmatpush.msra.mxu0 %v959
      %1013 = vmatpush.msra.mxu0 %v956
      %1014 = vmatpush.msra.mxu0 %v953
      %1015 = vmatpush.msra.mxu0 %v950
      %1016 = vmatpush.msra.mxu0 %v947
      %1017 = vmatpush.msra.mxu0 %v944
      %1018 = vmatpush.msra.mxu0 %v941
      %1019 = vmatpush.msra.mxu0 %v938
      %1020 = vmatpush.msra.mxu0 %v935
      %1021 = vmatmul.f32.gmra.mxu0 %v932
      %v1022 = vpop.f32.mrf.mxu0
      %v1023 = vadd.f32 0.0, %v1022
      %1024 = vmatmul.f32.gmra.mxu0 %v933
      %v1025 = vpop.f32.mrf.mxu0
      %v1026 = vadd.f32 0.0, %v1025
      %1027 = vdwg.mxu0
      %1028 = vmatpush.msra.mxu0 %v981
      %1029 = vmatpush.msra.mxu0 %v978
      %1030 = vmatpush.msra.mxu0 %v975
      %1031 = vmatpush.msra.mxu0 %v972
      %1032 = vmatpush.msra.mxu0 %v969
      %1033 = vmatpush.msra.mxu0 %v966
      %1034 = vmatpush.msra.mxu0 %v963
      %1035 = vmatpush.msra.mxu0 %v960
      %1036 = vmatpush.msra.mxu0 %v957
      %1037 = vmatpush.msra.mxu0 %v954
      %1038 = vmatpush.msra.mxu0 %v951
      %1039 = vmatpush.msra.mxu0 %v948
      %1040 = vmatpush.msra.mxu0 %v945
      %1041 = vmatpush.msra.mxu0 %v942
      %1042 = vmatpush.msra.mxu0 %v939
      %1043 = vmatpush.msra.mxu0 %v936
      %1044 = vmatmul.f32.gmra.mxu0 %v932
      %v1045 = vpop.f32.mrf.mxu0
      %v1046 = vadd.f32 0.0, %v1045
      %1047 = vmatmul.f32.gmra.mxu0 %v933
      %v1048 = vpop.f32.mrf.mxu0
      %v1049 = vadd.f32 0.0, %v1048
      %1050 = vdwg.mxu0
      %1052 = vrot.lane.b32.xlu0 %v1000, 96
      %v1053 = vpop.permute.xlu0 %1052
      %1055 = vrot.lane.b32.xlu0 %v1000, 64
      %v1056 = vpop.permute.xlu0 %1055
      %1058 = vrot.lane.b32.xlu0 %v1000, 32
      %v1059 = vpop.permute.xlu0 %1058
      %v1061 = vrot.slane %v1056, 4
      %vm1062 = vcmask 1047556
      %v1063 = vsel %vm1062, %v1061, %v1000
      %v1064 = vrot.slane %v1000, 4
      %v1065 = vsel %vm1062, %v1056, %v1064
      %v1067 = vunpack.c.l.s4 1983009808
      %v1068 = vunpack.c.0.s8 %v1067
      %v1069 = vperm.slane %v1063, %v1068
      %v1071 = vunpack.c.l.s4 1983009808
      %v1072 = vunpack.c.0.s8 %v1071
      %v1073 = vperm.slane %v1065, %v1072
      %v1074 = vrot.slane %v1059, 4
      %v1075 = vsel %vm1062, %v1074, %v1053
      %v1076 = vrot.slane %v1053, 4
      %v1077 = vsel %vm1062, %v1059, %v1076
      %v1079 = vunpack.c.l.s4 1983009808
      %v1080 = vunpack.c.0.s8 %v1079
      %v1081 = vperm.slane %v1075, %v1080
      %v1083 = vunpack.c.l.s4 1983009808
      %v1084 = vunpack.c.0.s8 %v1083
      %v1085 = vperm.slane %v1077, %v1084
      %v1086 = vrot.slane %v1081, 4
      %v1087 = vsel %vm1062, %v1086, %v1069
      %v1088 = vrot.slane %v1069, 4
      %v1089 = vsel %vm1062, %v1081, %v1088
      %v1091 = vunpack.c.l.s4 1934713408
      %v1092 = vunpack.c.0.s8 %v1091
      %v1093 = vperm.slane %v1087, %v1092
      %v1095 = vunpack.c.l.s4 1934713408
      %v1096 = vunpack.c.0.s8 %v1095
      %v1097 = vperm.slane %v1089, %v1096
      %v1098 = vrot.slane %v1085, 4
      %v1099 = vsel %vm1062, %v1098, %v1073
      %v1100 = vrot.slane %v1073, 4
      %v1101 = vsel %vm1062, %v1085, %v1100
      %v1103 = vunpack.c.l.s4 1934713408
      %v1104 = vunpack.c.0.s8 %v1103
      %v1105 = vperm.slane %v1099, %v1104
      %v1107 = vunpack.c.l.s4 1934713408
      %v1108 = vunpack.c.0.s8 %v1107
      %v1109 = vperm.slane %v1101, %v1108
      %v1110 = vrot.slane %v1093, 4
      %v1111 = vsel %vm1062, 0.0, %v1110
      %v1112 = vrot.slane %v1097, 4
      %v1113 = vsel %vm1062, 0.0, %v1112
      %v1114 = vrot.slane %v1105, 4
      %v1115 = vsel %vm1062, 0.0, %v1114
      %v1116 = vrot.slane %v1109, 4
      %v1117 = vsel %vm1062, 0.0, %v1116
      %1119 = vrot.lane.b32.xlu0 %v1023, 96
      %v1120 = vpop.permute.xlu0 %1119
      %1122 = vrot.lane.b32.xlu0 %v1023, 64
      %v1123 = vpop.permute.xlu0 %1122
      %1125 = vrot.lane.b32.xlu0 %v1023, 32
      %v1126 = vpop.permute.xlu0 %1125
      %v1128 = vrot.slane %v1123, 4
      %v1129 = vsel %vm1062, %v1128, %v1023
      %v1130 = vrot.slane %v1023, 4
      %v1131 = vsel %vm1062, %v1123, %v1130
      %v1133 = vunpack.c.l.s4 1983009808
      %v1134 = vunpack.c.0.s8 %v1133
      %v1135 = vperm.slane %v1129, %v1134
      %v1137 = vunpack.c.l.s4 1983009808
      %v1138 = vunpack.c.0.s8 %v1137
      %v1139 = vperm.slane %v1131, %v1138
      %v1140 = vrot.slane %v1126, 4
      %v1141 = vsel %vm1062, %v1140, %v1120
      %v1142 = vrot.slane %v1120, 4
      %v1143 = vsel %vm1062, %v1126, %v1142
      %v1145 = vunpack.c.l.s4 1983009808
      %v1146 = vunpack.c.0.s8 %v1145
      %v1147 = vperm.slane %v1141, %v1146
      %v1149 = vunpack.c.l.s4 1983009808
      %v1150 = vunpack.c.0.s8 %v1149
      %v1151 = vperm.slane %v1143, %v1150
      %v1152 = vrot.slane %v1147, 4
      %v1153 = vsel %vm1062, %v1152, %v1135
      %v1154 = vrot.slane %v1135, 4
      %v1155 = vsel %vm1062, %v1147, %v1154
      %v1157 = vunpack.c.l.s4 1934713408
      %v1158 = vunpack.c.0.s8 %v1157
      %v1159 = vperm.slane %v1153, %v1158
      %v1161 = vunpack.c.l.s4 1934713408
      %v1162 = vunpack.c.0.s8 %v1161
      %v1163 = vperm.slane %v1155, %v1162
      %v1164 = vrot.slane %v1151, 4
      %v1165 = vsel %vm1062, %v1164, %v1139
      %v1166 = vrot.slane %v1139, 4
      %v1167 = vsel %vm1062, %v1151, %v1166
      %v1169 = vunpack.c.l.s4 1934713408
      %v1170 = vunpack.c.0.s8 %v1169
      %v1171 = vperm.slane %v1165, %v1170
      %v1173 = vunpack.c.l.s4 1934713408
      %v1174 = vunpack.c.0.s8 %v1173
      %v1175 = vperm.slane %v1167, %v1174
      %v1176 = vrot.slane %v1159, 4
      %v1177 = vsel %vm1062, 0.0, %v1176
      %v1178 = vrot.slane %v1163, 4
      %v1179 = vsel %vm1062, 0.0, %v1178
      %v1180 = vrot.slane %v1171, 4
      %v1181 = vsel %vm1062, 0.0, %v1180
      %v1182 = vrot.slane %v1175, 4
      %v1183 = vsel %vm1062, 0.0, %v1182
      %1185 = vrot.lane.b32.xlu0 %v1046, 96
      %v1186 = vpop.permute.xlu0 %1185
      %1188 = vrot.lane.b32.xlu0 %v1046, 64
      %v1189 = vpop.permute.xlu0 %1188
      %1191 = vrot.lane.b32.xlu0 %v1046, 32
      %v1192 = vpop.permute.xlu0 %1191
      %v1194 = vrot.slane %v1189, 4
      %v1195 = vsel %vm1062, %v1194, %v1046
      %v1196 = vrot.slane %v1046, 4
      %v1197 = vsel %vm1062, %v1189, %v1196
      %v1199 = vunpack.c.l.s4 1983009808
      %v1200 = vunpack.c.0.s8 %v1199
      %v1201 = vperm.slane %v1195, %v1200
      %v1203 = vunpack.c.l.s4 1983009808
      %v1204 = vunpack.c.0.s8 %v1203
      %v1205 = vperm.slane %v1197, %v1204
      %v1206 = vrot.slane %v1192, 4
      %v1207 = vsel %vm1062, %v1206, %v1186
      %v1208 = vrot.slane %v1186, 4
      %v1209 = vsel %vm1062, %v1192, %v1208
      %v1211 = vunpack.c.l.s4 1983009808
      %v1212 = vunpack.c.0.s8 %v1211
      %v1213 = vperm.slane %v1207, %v1212
      %v1215 = vunpack.c.l.s4 1983009808
      %v1216 = vunpack.c.0.s8 %v1215
      %v1217 = vperm.slane %v1209, %v1216
      %v1218 = vrot.slane %v1213, 4
      %v1219 = vsel %vm1062, %v1218, %v1201
      %v1220 = vrot.slane %v1201, 4
      %v1221 = vsel %vm1062, %v1213, %v1220
      %v1223 = vunpack.c.l.s4 1934713408
      %v1224 = vunpack.c.0.s8 %v1223
      %v1225 = vperm.slane %v1219, %v1224
      %v1227 = vunpack.c.l.s4 1934713408
      %v1228 = vunpack.c.0.s8 %v1227
      %v1229 = vperm.slane %v1221, %v1228
      %v1230 = vrot.slane %v1217, 4
      %v1231 = vsel %vm1062, %v1230, %v1205
      %v1232 = vrot.slane %v1205, 4
      %v1233 = vsel %vm1062, %v1217, %v1232
      %v1235 = vunpack.c.l.s4 1934713408
      %v1236 = vunpack.c.0.s8 %v1235
      %v1237 = vperm.slane %v1231, %v1236
      %v1239 = vunpack.c.l.s4 1934713408
      %v1240 = vunpack.c.0.s8 %v1239
      %v1241 = vperm.slane %v1233, %v1240
      %v1242 = vrot.slane %v1225, 4
      %v1243 = vsel %vm1062, 0.0, %v1242
      %v1244 = vrot.slane %v1229, 4
      %v1245 = vsel %vm1062, 0.0, %v1244
      %v1246 = vrot.slane %v1237, 4
      %v1247 = vsel %vm1062, 0.0, %v1246
      %v1248 = vrot.slane %v1241, 4
      %v1249 = vsel %vm1062, 0.0, %v1248
      %v1250 = vsel %vm1062, %v1112, %v1093
      %v1252 = vunpack.c.l.s4 1983009808
      %v1253 = vunpack.c.0.s8 %v1252
      %v1254 = vperm.slane %v1250, %v1253
      %v1255 = vrot.slane %v1113, 4
      %v1256 = vsel %vm1062, %v1255, %v1111
      %v1258 = vunpack.c.l.s4 1983009808
      %v1259 = vunpack.c.0.s8 %v1258
      %v1260 = vperm.slane %v1256, %v1259
      %v1261 = vsel %vm1062, %v1116, %v1105
      %v1263 = vunpack.c.l.s4 1983009808
      %v1264 = vunpack.c.0.s8 %v1263
      %v1265 = vperm.slane %v1261, %v1264
      %v1266 = vrot.slane %v1117, 4
      %v1267 = vsel %vm1062, %v1266, %v1115
      %v1269 = vunpack.c.l.s4 1983009808
      %v1270 = vunpack.c.0.s8 %v1269
      %v1271 = vperm.slane %v1267, %v1270
      %v1272 = vrot.slane %v1260, 4
      %v1273 = vsel %vm1062, %v1272, %v1254
      %v1274 = vrot.slane %v1254, 4
      %v1275 = vsel %vm1062, %v1260, %v1274
      %v1277 = vunpack.c.l.s4 1934713408
      %v1278 = vunpack.c.0.s8 %v1277
      %v1279 = vperm.slane %v1273, %v1278
      %v1281 = vunpack.c.l.s4 1934713408
      %v1282 = vunpack.c.0.s8 %v1281
      %v1283 = vperm.slane %v1275, %v1282
      %v1284 = vrot.slane %v1271, 4
      %v1285 = vsel %vm1062, %v1284, %v1265
      %v1286 = vrot.slane %v1265, 4
      %v1287 = vsel %vm1062, %v1271, %v1286
      %v1289 = vunpack.c.l.s4 1934713408
      %v1290 = vunpack.c.0.s8 %v1289
      %v1291 = vperm.slane %v1285, %v1290
      %v1293 = vunpack.c.l.s4 1934713408
      %v1294 = vunpack.c.0.s8 %v1293
      %v1295 = vperm.slane %v1287, %v1294
      %v1296 = vrot.slane %v1291, 4
      %v1297 = vsel %vm1062, %v1296, %v1279
      %v1298 = vrot.slane %v1279, 4
      %v1299 = vsel %vm1062, %v1291, %v1298
      %v1300 = vrot.slane %v1295, 4
      %v1301 = vsel %vm1062, %v1300, %v1283
      %v1302 = vrot.slane %v1283, 4
      %v1303 = vsel %vm1062, %v1295, %v1302
      %v1304 = vsel %vm1062, %v1178, %v1159
      %v1306 = vunpack.c.l.s4 1983009808
      %v1307 = vunpack.c.0.s8 %v1306
      %v1308 = vperm.slane %v1304, %v1307
      %v1309 = vrot.slane %v1179, 4
      %v1310 = vsel %vm1062, %v1309, %v1177
      %v1312 = vunpack.c.l.s4 1983009808
      %v1313 = vunpack.c.0.s8 %v1312
      %v1314 = vperm.slane %v1310, %v1313
      %v1315 = vsel %vm1062, %v1182, %v1171
      %v1317 = vunpack.c.l.s4 1983009808
      %v1318 = vunpack.c.0.s8 %v1317
      %v1319 = vperm.slane %v1315, %v1318
      %v1320 = vrot.slane %v1183, 4
      %v1321 = vsel %vm1062, %v1320, %v1181
      %v1323 = vunpack.c.l.s4 1983009808
      %v1324 = vunpack.c.0.s8 %v1323
      %v1325 = vperm.slane %v1321, %v1324
      %v1326 = vrot.slane %v1314, 4
      %v1327 = vsel %vm1062, %v1326, %v1308
      %v1328 = vrot.slane %v1308, 4
      %v1329 = vsel %vm1062, %v1314, %v1328
      %v1331 = vunpack.c.l.s4 1934713408
      %v1332 = vunpack.c.0.s8 %v1331
      %v1333 = vperm.slane %v1327, %v1332
      %v1335 = vunpack.c.l.s4 1934713408
      %v1336 = vunpack.c.0.s8 %v1335
      %v1337 = vperm.slane %v1329, %v1336
      %v1338 = vrot.slane %v1325, 4
      %v1339 = vsel %vm1062, %v1338, %v1319
      %v1340 = vrot.slane %v1319, 4
      %v1341 = vsel %vm1062, %v1325, %v1340
      %v1343 = vunpack.c.l.s4 1934713408
      %v1344 = vunpack.c.0.s8 %v1343
      %v1345 = vperm.slane %v1339, %v1344
      %v1347 = vunpack.c.l.s4 1934713408
      %v1348 = vunpack.c.0.s8 %v1347
      %v1349 = vperm.slane %v1341, %v1348
      %v1350 = vrot.slane %v1345, 4
      %v1351 = vsel %vm1062, %v1350, %v1333
      %v1352 = vrot.slane %v1333, 4
      %v1353 = vsel %vm1062, %v1345, %v1352
      %v1354 = vrot.slane %v1349, 4
      %v1355 = vsel %vm1062, %v1354, %v1337
      %v1356 = vrot.slane %v1337, 4
      %v1357 = vsel %vm1062, %v1349, %v1356
      %v1358 = vsel %vm1062, %v1244, %v1225
      %v1360 = vunpack.c.l.s4 1983009808
      %v1361 = vunpack.c.0.s8 %v1360
      %v1362 = vperm.slane %v1358, %v1361
      %v1363 = vrot.slane %v1245, 4
      %v1364 = vsel %vm1062, %v1363, %v1243
      %v1366 = vunpack.c.l.s4 1983009808
      %v1367 = vunpack.c.0.s8 %v1366
      %v1368 = vperm.slane %v1364, %v1367
      %v1369 = vsel %vm1062, %v1248, %v1237
      %v1371 = vunpack.c.l.s4 1983009808
      %v1372 = vunpack.c.0.s8 %v1371
      %v1373 = vperm.slane %v1369, %v1372
      %v1374 = vrot.slane %v1249, 4
      %v1375 = vsel %vm1062, %v1374, %v1247
      %v1377 = vunpack.c.l.s4 1983009808
      %v1378 = vunpack.c.0.s8 %v1377
      %v1379 = vperm.slane %v1375, %v1378
      %v1380 = vrot.slane %v1368, 4
      %v1381 = vsel %vm1062, %v1380, %v1362
      %v1382 = vrot.slane %v1362, 4
      %v1383 = vsel %vm1062, %v1368, %v1382
      %v1385 = vunpack.c.l.s4 1934713408
      %v1386 = vunpack.c.0.s8 %v1385
      %v1387 = vperm.slane %v1381, %v1386
      %v1389 = vunpack.c.l.s4 1934713408
      %v1390 = vunpack.c.0.s8 %v1389
      %v1391 = vperm.slane %v1383, %v1390
      %v1392 = vrot.slane %v1379, 4
      %v1393 = vsel %vm1062, %v1392, %v1373
      %v1394 = vrot.slane %v1373, 4
      %v1395 = vsel %vm1062, %v1379, %v1394
      %v1397 = vunpack.c.l.s4 1934713408
      %v1398 = vunpack.c.0.s8 %v1397
      %v1399 = vperm.slane %v1393, %v1398
      %v1401 = vunpack.c.l.s4 1934713408
      %v1402 = vunpack.c.0.s8 %v1401
      %v1403 = vperm.slane %v1395, %v1402
      %v1404 = vrot.slane %v1399, 4
      %v1405 = vsel %vm1062, %v1404, %v1387
      %v1406 = vrot.slane %v1387, 4
      %v1407 = vsel %vm1062, %v1399, %v1406
      %v1408 = vrot.slane %v1403, 4
      %v1409 = vsel %vm1062, %v1408, %v1391
      %v1410 = vrot.slane %v1391, 4
      %v1411 = vsel %vm1062, %v1403, %v1410
      %vm1412 = vcmask 261120
      %v1414 = vsel %vm1412, %v1297, 0
      %v1417 = vsel %vm1412, %v1351, 0
      %1419 = vmatpush.xpose.msra.mxu0 0.0
      %1420 = vmatpush.xpose.msra.mxu0 0.0
      %1421 = vmatpush.xpose.msra.mxu0 0.0
      %1422 = vmatpush.xpose.msra.mxu0 0.0
      %1423 = vmatpush.xpose.msra.mxu0 0.0
      %1424 = vmatpush.xpose.msra.mxu0 0.0
      %1425 = vmatpush.xpose.msra.mxu0 0.0
      %1426 = vmatpush.xpose.msra.mxu0 0.0
      %1427 = vmatpush.xpose.msra.mxu0 0.0
      %1428 = vmatpush.xpose.msra.mxu0 0.0
      %1429 = vmatpush.xpose.msra.mxu0 0.0
      %1430 = vmatpush.xpose.msra.mxu0 0.0
      %1431 = vmatpush.xpose.msra.mxu0 0.0
      %1432 = vmatpush.xpose.msra.mxu0 0.0
      %1433 = vmatpush.xpose.msra.mxu0 0.0
      %1434 = vmatpush.xpose.msra.mxu0 %v1417
      %1435 = vmatmul.f32.gmra.mxu0 %v1414
      %v1436 = vpop.f32.mrf.mxu0
      %v1437 = vadd.f32 0.0, %v1436
      %1438 = vdwg.mxu0
      %v1440 = vsel %vm1412, %v1299, 0
      %v1443 = vsel %vm1412, %v1353, 0
      %1445 = vmatpush.xpose.msra.mxu0 0.0
      %1446 = vmatpush.xpose.msra.mxu0 0.0
      %1447 = vmatpush.xpose.msra.mxu0 0.0
      %1448 = vmatpush.xpose.msra.mxu0 0.0
      %1449 = vmatpush.xpose.msra.mxu0 0.0
      %1450 = vmatpush.xpose.msra.mxu0 0.0
      %1451 = vmatpush.xpose.msra.mxu0 0.0
      %1452 = vmatpush.xpose.msra.mxu0 0.0
      %1453 = vmatpush.xpose.msra.mxu0 0.0
      %1454 = vmatpush.xpose.msra.mxu0 0.0
      %1455 = vmatpush.xpose.msra.mxu0 0.0
      %1456 = vmatpush.xpose.msra.mxu0 0.0
      %1457 = vmatpush.xpose.msra.mxu0 0.0
      %1458 = vmatpush.xpose.msra.mxu0 0.0
      %1459 = vmatpush.xpose.msra.mxu0 0.0
      %1460 = vmatpush.xpose.msra.mxu0 %v1443
      %1461 = vmatmul.f32.gmra.mxu0 %v1440
      %v1462 = vpop.f32.mrf.mxu0
      %v1463 = vadd.f32 0.0, %v1462
      %1464 = vdwg.mxu0
      %v1466 = vsel %vm1412, %v1301, 0
      %v1469 = vsel %vm1412, %v1355, 0
      %1471 = vmatpush.xpose.msra.mxu0 0.0
      %1472 = vmatpush.xpose.msra.mxu0 0.0
      %1473 = vmatpush.xpose.msra.mxu0 0.0
      %1474 = vmatpush.xpose.msra.mxu0 0.0
      %1475 = vmatpush.xpose.msra.mxu0 0.0
      %1476 = vmatpush.xpose.msra.mxu0 0.0
      %1477 = vmatpush.xpose.msra.mxu0 0.0
      %1478 = vmatpush.xpose.msra.mxu0 0.0
      %1479 = vmatpush.xpose.msra.mxu0 0.0
      %1480 = vmatpush.xpose.msra.mxu0 0.0
      %1481 = vmatpush.xpose.msra.mxu0 0.0
      %1482 = vmatpush.xpose.msra.mxu0 0.0
      %1483 = vmatpush.xpose.msra.mxu0 0.0
      %1484 = vmatpush.xpose.msra.mxu0 0.0
      %1485 = vmatpush.xpose.msra.mxu0 0.0
      %1486 = vmatpush.xpose.msra.mxu0 %v1469
      %1487 = vmatmul.f32.gmra.mxu0 %v1466
      %v1488 = vpop.f32.mrf.mxu0
      %v1489 = vadd.f32 0.0, %v1488
      %1490 = vdwg.mxu0
      %v1492 = vsel %vm1412, %v1303, 0
      %v1495 = vsel %vm1412, %v1357, 0
      %1497 = vmatpush.xpose.msra.mxu0 0.0
      %1498 = vmatpush.xpose.msra.mxu0 0.0
      %1499 = vmatpush.xpose.msra.mxu0 0.0
      %1500 = vmatpush.xpose.msra.mxu0 0.0
      %1501 = vmatpush.xpose.msra.mxu0 0.0
      %1502 = vmatpush.xpose.msra.mxu0 0.0
      %1503 = vmatpush.xpose.msra.mxu0 0.0
      %1504 = vmatpush.xpose.msra.mxu0 0.0
      %1505 = vmatpush.xpose.msra.mxu0 0.0
      %1506 = vmatpush.xpose.msra.mxu0 0.0
      %1507 = vmatpush.xpose.msra.mxu0 0.0
      %1508 = vmatpush.xpose.msra.mxu0 0.0
      %1509 = vmatpush.xpose.msra.mxu0 0.0
      %1510 = vmatpush.xpose.msra.mxu0 0.0
      %1511 = vmatpush.xpose.msra.mxu0 0.0
      %1512 = vmatpush.xpose.msra.mxu0 %v1495
      %1513 = vmatmul.f32.gmra.mxu0 %v1492
      %v1514 = vpop.f32.mrf.mxu0
      %v1515 = vadd.f32 0.0, %v1514
      %1516 = vdwg.mxu0
      %v1517 = vmul.f32 %v1437, 0.17677669
      %v1518 = vmul.f32 %v1463, 0.17677669
      %v1519 = vmul.f32 %v1489, 0.17677669
      %v1520 = vmul.f32 %v1515, 0.17677669
      %v1521 = vadd.f32 %v1517, %v878
      %v1522 = vadd.f32 %v1518, %v878
      %v1523 = vadd.f32 %v1519, %v878
      %v1524 = vadd.f32 %v1520, %v878
      %vm1525 = vcmask 64512
      %v1526 = vsel %vm1525, %v1521, -inf
      %1527 = vmax.xlane.f32.xlu0 %v1526
      %v1528 = vpop.xlane.xlu0 %1527
      %v1529 = vsel %vm1525, %v1522, -inf
      %1530 = vmax.xlane.f32.xlu0 %v1529
      %v1531 = vpop.xlane.xlu0 %1530
      %v1532 = vsel %vm1525, %v1523, -inf
      %1533 = vmax.xlane.f32.xlu0 %v1532
      %v1534 = vpop.xlane.xlu0 %1533
      %v1535 = vsel %vm1525, %v1524, -inf
      %1536 = vmax.xlane.f32.xlu0 %v1535
      %v1537 = vpop.xlane.xlu0 %1536
      %v1538 = vsub.f32 %v1521, %v1528
      %v1539 = vsub.f32 %v1522, %v1531
      %v1540 = vsub.f32 %v1523, %v1534
      %v1541 = vsub.f32 %v1524, %v1537
      %v1542 = vmul.f32 %v1538, 1.442695
      %v1543 = vpow.pop %v1542
      %v1544 = vmul.f32 %v1539, 1.442695
      %v1545 = vpow.pop %v1544
      %v1546 = vmul.f32 %v1540, 1.442695
      %v1547 = vpow.pop %v1546
      %v1548 = vmul.f32 %v1541, 1.442695
      %v1549 = vpow.pop %v1548
      %v1550 = vsel %vm1525, %v1543, 0.0
      %1551 = vadd.xlane.f32.xlu0 %v1550
      %v1552 = vpop.xlane.xlu0 %1551
      %v1553 = vsel %vm1525, %v1545, 0.0
      %1554 = vadd.xlane.f32.xlu0 %v1553
      %v1555 = vpop.xlane.xlu0 %1554
      %v1556 = vsel %vm1525, %v1547, 0.0
      %1557 = vadd.xlane.f32.xlu0 %v1556
      %v1558 = vpop.xlane.xlu0 %1557
      %v1559 = vsel %vm1525, %v1549, 0.0
      %1560 = vadd.xlane.f32.xlu0 %v1559
      %v1561 = vpop.xlane.xlu0 %1560
      %v1562 = vrcp.pop %v1552
      %v1563 = vrcp.pop %v1555
      %v1564 = vrcp.pop %v1558
      %v1565 = vrcp.pop %v1561
      %v1566 = vmul.f32 %v1543, %v1562
      %v1567 = vmul.f32 %v1545, %v1563
      %v1568 = vmul.f32 %v1547, %v1564
      %v1569 = vmul.f32 %v1549, %v1565
      %v1571 = vsel %vm1525, %v1566, 0
      %1573 = vmatpush.msra.mxu0 0.0
      %1574 = vmatpush.msra.mxu0 0.0
      %1575 = vmatpush.msra.mxu0 0.0
      %1576 = vmatpush.msra.mxu0 0.0
      %1577 = vmatpush.msra.mxu0 0.0
      %1578 = vmatpush.msra.mxu0 0.0
      %1579 = vmatpush.msra.mxu0 0.0
      %1580 = vmatpush.msra.mxu0 0.0
      %1581 = vmatpush.msra.mxu0 0.0
      %1582 = vmatpush.msra.mxu0 0.0
      %1583 = vmatpush.msra.mxu0 0.0
      %1584 = vmatpush.msra.mxu0 0.0
      %1585 = vmatpush.msra.mxu0 0.0
      %1586 = vmatpush.msra.mxu0 0.0
      %1587 = vmatpush.msra.mxu0 0.0
      %1588 = vmatpush.msra.mxu0 %v1405
      %1589 = vmatmul.f32.gmra.mxu0 %v1571
      %v1590 = vpop.f32.mrf.mxu0
      %v1591 = vadd.f32 0.0, %v1590
      %1592 = vdwg.mxu0
      %v1594 = vsel %vm1525, %v1567, 0
      %1596 = vmatpush.msra.mxu0 0.0
      %1597 = vmatpush.msra.mxu0 0.0
      %1598 = vmatpush.msra.mxu0 0.0
      %1599 = vmatpush.msra.mxu0 0.0
      %1600 = vmatpush.msra.mxu0 0.0
      %1601 = vmatpush.msra.mxu0 0.0
      %1602 = vmatpush.msra.mxu0 0.0
      %1603 = vmatpush.msra.mxu0 0.0
      %1604 = vmatpush.msra.mxu0 0.0
      %1605 = vmatpush.msra.mxu0 0.0
      %1606 = vmatpush.msra.mxu0 0.0
      %1607 = vmatpush.msra.mxu0 0.0
      %1608 = vmatpush.msra.mxu0 0.0
      %1609 = vmatpush.msra.mxu0 0.0
      %1610 = vmatpush.msra.mxu0 0.0
      %1611 = vmatpush.msra.mxu0 %v1407
      %1612 = vmatmul.f32.gmra.mxu0 %v1594
      %v1613 = vpop.f32.mrf.mxu0
      %v1614 = vadd.f32 0.0, %v1613
      %1615 = vdwg.mxu0
      %v1617 = vsel %vm1525, %v1568, 0
      %1619 = vmatpush.msra.mxu0 0.0
      %1620 = vmatpush.msra.mxu0 0.0
      %1621 = vmatpush.msra.mxu0 0.0
      %1622 = vmatpush.msra.mxu0 0.0
      %1623 = vmatpush.msra.mxu0 0.0
      %1624 = vmatpush.msra.mxu0 0.0
      %1625 = vmatpush.msra.mxu0 0.0
      %1626 = vmatpush.msra.mxu0 0.0
      %1627 = vmatpush.msra.mxu0 0.0
      %1628 = vmatpush.msra.mxu0 0.0
      %1629 = vmatpush.msra.mxu0 0.0
      %1630 = vmatpush.msra.mxu0 0.0
      %1631 = vmatpush.msra.mxu0 0.0
      %1632 = vmatpush.msra.mxu0 0.0
      %1633 = vmatpush.msra.mxu0 0.0
      %1634 = vmatpush.msra.mxu0 %v1409
      %1635 = vmatmul.f32.gmra.mxu0 %v1617
      %v1636 = vpop.f32.mrf.mxu0
      %v1637 = vadd.f32 0.0, %v1636
      %1638 = vdwg.mxu0
      %v1640 = vsel %vm1525, %v1569, 0
      %1642 = vmatpush.msra.mxu0 0.0
      %1643 = vmatpush.msra.mxu0 0.0
      %1644 = vmatpush.msra.mxu0 0.0
      %1645 = vmatpush.msra.mxu0 0.0
      %1646 = vmatpush.msra.mxu0 0.0
      %1647 = vmatpush.msra.mxu0 0.0
      %1648 = vmatpush.msra.mxu0 0.0
      %1649 = vmatpush.msra.mxu0 0.0
      %1650 = vmatpush.msra.mxu0 0.0
      %1651 = vmatpush.msra.mxu0 0.0
      %1652 = vmatpush.msra.mxu0 0.0
      %1653 = vmatpush.msra.mxu0 0.0
      %1654 = vmatpush.msra.mxu0 0.0
      %1655 = vmatpush.msra.mxu0 0.0
      %1656 = vmatpush.msra.mxu0 0.0
      %1657 = vmatpush.msra.mxu0 %v1411
      %1658 = vmatmul.f32.gmra.mxu0 %v1640
      %v1659 = vpop.f32.mrf.mxu0
      %v1660 = vadd.f32 0.0, %v1659
      %1661 = vdwg.mxu0
      %v1662 = vrot.slane %v1637, 4
      %v1663 = vsel %vm1062, %v1662, %v1591
      %v1664 = vrot.slane %v1591, 4
      %v1665 = vsel %vm1062, %v1637, %v1664
      %v1667 = vunpack.c.l.s4 1983009808
      %v1668 = vunpack.c.0.s8 %v1667
      %v1669 = vperm.slane %v1663, %v1668
      %v1671 = vunpack.c.l.s4 1983009808
      %v1672 = vunpack.c.0.s8 %v1671
      %v1673 = vperm.slane %v1665, %v1672
      %v1674 = vrot.slane %v1660, 4
      %v1675 = vsel %vm1062, %v1674, %v1614
      %v1676 = vrot.slane %v1614, 4
      %v1677 = vsel %vm1062, %v1660, %v1676
      %v1679 = vunpack.c.l.s4 1983009808
      %v1680 = vunpack.c.0.s8 %v1679
      %v1681 = vperm.slane %v1675, %v1680
      %v1683 = vunpack.c.l.s4 1983009808
      %v1684 = vunpack.c.0.s8 %v1683
      %v1685 = vperm.slane %v1677, %v1684
      %v1686 = vrot.slane %v1681, 4
      %v1687 = vsel %vm1062, %v1686, %v1669
      %v1688 = vrot.slane %v1669, 4
      %v1689 = vsel %vm1062, %v1681, %v1688
      %v1691 = vunpack.c.l.s4 1934713408
      %v1692 = vunpack.c.0.s8 %v1691
      %v1693 = vperm.slane %v1687, %v1692
      %v1695 = vunpack.c.l.s4 1934713408
      %v1696 = vunpack.c.0.s8 %v1695
      %v1697 = vperm.slane %v1689, %v1696
      %v1698 = vrot.slane %v1685, 4
      %v1699 = vsel %vm1062, %v1698, %v1673
      %v1700 = vrot.slane %v1673, 4
      %v1701 = vsel %vm1062, %v1685, %v1700
      %v1703 = vunpack.c.l.s4 1934713408
      %v1704 = vunpack.c.0.s8 %v1703
      %v1705 = vperm.slane %v1699, %v1704
      %v1707 = vunpack.c.l.s4 1934713408
      %v1708 = vunpack.c.0.s8 %v1707
      %v1709 = vperm.slane %v1701, %v1708
      %v1710 = vrot.slane %v1693, 4
      %v1711 = vsel %vm1062, 0.0, %v1710
      %v1712 = vrot.slane %v1697, 4
      %v1713 = vsel %vm1062, 0.0, %v1712
      %v1714 = vrot.slane %v1705, 4
      %v1715 = vsel %vm1062, 0.0, %v1714
      %v1716 = vrot.slane %v1709, 4
      %v1717 = vsel %vm1062, 0.0, %v1716
      %v1718 = vsel %vm1062, %v1712, %v1693
      %v1720 = vunpack.c.l.s4 1983009808
      %v1721 = vunpack.c.0.s8 %v1720
      %v1722 = vperm.slane %v1718, %v1721
      %v1723 = vrot.slane %v1713, 4
      %v1724 = vsel %vm1062, %v1723, %v1711
      %v1726 = vunpack.c.l.s4 1983009808
      %v1727 = vunpack.c.0.s8 %v1726
      %v1728 = vperm.slane %v1724, %v1727
      %v1729 = vsel %vm1062, %v1716, %v1705
      %v1731 = vunpack.c.l.s4 1983009808
      %v1732 = vunpack.c.0.s8 %v1731
      %v1733 = vperm.slane %v1729, %v1732
      %v1734 = vrot.slane %v1717, 4
      %v1735 = vsel %vm1062, %v1734, %v1715
      %v1737 = vunpack.c.l.s4 1983009808
      %v1738 = vunpack.c.0.s8 %v1737
      %v1739 = vperm.slane %v1735, %v1738
      %v1740 = vrot.slane %v1728, 4
      %v1741 = vsel %vm1062, %v1740, %v1722
      %v1742 = vrot.slane %v1722, 4
      %v1743 = vsel %vm1062, %v1728, %v1742
      %v1745 = vunpack.c.l.s4 1934713408
      %v1746 = vunpack.c.0.s8 %v1745
      %v1747 = vperm.slane %v1741, %v1746
      %v1749 = vunpack.c.l.s4 1934713408
      %v1750 = vunpack.c.0.s8 %v1749
      %v1751 = vperm.slane %v1743, %v1750
      %v1752 = vrot.slane %v1739, 4
      %v1753 = vsel %vm1062, %v1752, %v1733
      %v1754 = vrot.slane %v1733, 4
      %v1755 = vsel %vm1062, %v1739, %v1754
      %v1757 = vunpack.c.l.s4 1934713408
      %v1758 = vunpack.c.0.s8 %v1757
      %v1759 = vperm.slane %v1753, %v1758
      %v1761 = vunpack.c.l.s4 1934713408
      %v1762 = vunpack.c.0.s8 %v1761
      %v1763 = vperm.slane %v1755, %v1762
      %v1764 = vrot.slane %v1759, 4
      %v1765 = vsel %vm1062, %v1764, %v1747
      %v1766 = vrot.slane %v1747, 4
      %v1767 = vsel %vm1062, %v1759, %v1766
      %v1768 = vrot.slane %v1763, 4
      %v1769 = vsel %vm1062, %v1768, %v1751
      %v1770 = vrot.slane %v1751, 4
      %v1771 = vsel %vm1062, %v1763, %v1770
      %1773 = vrot.lane.b32.xlu0 %v1767, 32
      %v1774 = vpop.permute.xlu0 %1773
      %1777 = vrot.lane.b32.xlu0 %v1769, 64
      %v1778 = vpop.permute.xlu0 %1777
      %1781 = vrot.lane.b32.xlu0 %v1771, 96
      %v1782 = vpop.permute.xlu0 %1781
      %v1784 = vsel %vm1412, %v1765, %v1774
      %vm1785 = vcmask 523264
      %v1786 = vsel %vm1785, %v1784, %v1778
      %vm1787 = vcmask 785408
      %v1788 = vsel %vm1787, %v1786, %v1782
      %1790 = vrot.lane.b32.xlu0 %v1003, 96
      %v1791 = vpop.permute.xlu0 %1790
      %1793 = vrot.lane.b32.xlu0 %v1003, 64
      %v1794 = vpop.permute.xlu0 %1793
      %1796 = vrot.lane.b32.xlu0 %v1003, 32
      %v1797 = vpop.permute.xlu0 %1796
      %v1799 = vrot.slane %v1794, 4
      %v1800 = vsel %vm1062, %v1799, %v1003
      %v1801 = vrot.slane %v1003, 4
      %v1802 = vsel %vm1062, %v1794, %v1801
      %v1804 = vunpack.c.l.s4 1983009808
      %v1805 = vunpack.c.0.s8 %v1804
      %v1806 = vperm.slane %v1800, %v1805
      %v1808 = vunpack.c.l.s4 1983009808
      %v1809 = vunpack.c.0.s8 %v1808
      %v1810 = vperm.slane %v1802, %v1809
      %v1811 = vrot.slane %v1797, 4
      %v1812 = vsel %vm1062, %v1811, %v1791
      %v1813 = vrot.slane %v1791, 4
      %v1814 = vsel %vm1062, %v1797, %v1813
      %v1816 = vunpack.c.l.s4 1983009808
      %v1817 = vunpack.c.0.s8 %v1816
      %v1818 = vperm.slane %v1812, %v1817
      %v1820 = vunpack.c.l.s4 1983009808
      %v1821 = vunpack.c.0.s8 %v1820
      %v1822 = vperm.slane %v1814, %v1821
      %v1823 = vrot.slane %v1818, 4
      %v1824 = vsel %vm1062, %v1823, %v1806
      %v1825 = vrot.slane %v1806, 4
      %v1826 = vsel %vm1062, %v1818, %v1825
      %v1828 = vunpack.c.l.s4 1934713408
      %v1829 = vunpack.c.0.s8 %v1828
      %v1830 = vperm.slane %v1824, %v1829
      %v1832 = vunpack.c.l.s4 1934713408
      %v1833 = vunpack.c.0.s8 %v1832
      %v1834 = vperm.slane %v1826, %v1833
      %v1835 = vrot.slane %v1822, 4
      %v1836 = vsel %vm1062, %v1835, %v1810
      %v1837 = vrot.slane %v1810, 4
      %v1838 = vsel %vm1062, %v1822, %v1837
      %v1840 = vunpack.c.l.s4 1934713408
      %v1841 = vunpack.c.0.s8 %v1840
      %v1842 = vperm.slane %v1836, %v1841
      %v1844 = vunpack.c.l.s4 1934713408
      %v1845 = vunpack.c.0.s8 %v1844
      %v1846 = vperm.slane %v1838, %v1845
      %v1847 = vrot.slane %v1830, 4
      %v1848 = vsel %vm1062, 0.0, %v1847
      %v1849 = vrot.slane %v1834, 4
      %v1850 = vsel %vm1062, 0.0, %v1849
      %v1851 = vrot.slane %v1842, 4
      %v1852 = vsel %vm1062, 0.0, %v1851
      %v1853 = vrot.slane %v1846, 4
      %v1854 = vsel %vm1062, 0.0, %v1853
      %1856 = vrot.lane.b32.xlu0 %v1026, 96
      %v1857 = vpop.permute.xlu0 %1856
      %1859 = vrot.lane.b32.xlu0 %v1026, 64
      %v1860 = vpop.permute.xlu0 %1859
      %1862 = vrot.lane.b32.xlu0 %v1026, 32
      %v1863 = vpop.permute.xlu0 %1862
      %v1865 = vrot.slane %v1860, 4
      %v1866 = vsel %vm1062, %v1865, %v1026
      %v1867 = vrot.slane %v1026, 4
      %v1868 = vsel %vm1062, %v1860, %v1867
      %v1870 = vunpack.c.l.s4 1983009808
      %v1871 = vunpack.c.0.s8 %v1870
      %v1872 = vperm.slane %v1866, %v1871
      %v1874 = vunpack.c.l.s4 1983009808
      %v1875 = vunpack.c.0.s8 %v1874
      %v1876 = vperm.slane %v1868, %v1875
      %v1877 = vrot.slane %v1863, 4
      %v1878 = vsel %vm1062, %v1877, %v1857
      %v1879 = vrot.slane %v1857, 4
      %v1880 = vsel %vm1062, %v1863, %v1879
      %v1882 = vunpack.c.l.s4 1983009808
      %v1883 = vunpack.c.0.s8 %v1882
      %v1884 = vperm.slane %v1878, %v1883
      %v1886 = vunpack.c.l.s4 1983009808
      %v1887 = vunpack.c.0.s8 %v1886
      %v1888 = vperm.slane %v1880, %v1887
      %v1889 = vrot.slane %v1884, 4
      %v1890 = vsel %vm1062, %v1889, %v1872
      %v1891 = vrot.slane %v1872, 4
      %v1892 = vsel %vm1062, %v1884, %v1891
      %v1894 = vunpack.c.l.s4 1934713408
      %v1895 = vunpack.c.0.s8 %v1894
      %v1896 = vperm.slane %v1890, %v1895
      %v1898 = vunpack.c.l.s4 1934713408
      %v1899 = vunpack.c.0.s8 %v1898
      %v1900 = vperm.slane %v1892, %v1899
      %v1901 = vrot.slane %v1888, 4
      %v1902 = vsel %vm1062, %v1901, %v1876
      %v1903 = vrot.slane %v1876, 4
      %v1904 = vsel %vm1062, %v1888, %v1903
      %v1906 = vunpack.c.l.s4 1934713408
      %v1907 = vunpack.c.0.s8 %v1906
      %v1908 = vperm.slane %v1902, %v1907
      %v1910 = vunpack.c.l.s4 1934713408
      %v1911 = vunpack.c.0.s8 %v1910
      %v1912 = vperm.slane %v1904, %v1911
      %v1913 = vrot.slane %v1896, 4
      %v1914 = vsel %vm1062, 0.0, %v1913
      %v1915 = vrot.slane %v1900, 4
      %v1916 = vsel %vm1062, 0.0, %v1915
      %v1917 = vrot.slane %v1908, 4
      %v1918 = vsel %vm1062, 0.0, %v1917
      %v1919 = vrot.slane %v1912, 4
      %v1920 = vsel %vm1062, 0.0, %v1919
      %1922 = vrot.lane.b32.xlu0 %v1049, 96
      %v1923 = vpop.permute.xlu0 %1922
      %1925 = vrot.lane.b32.xlu0 %v1049, 64
      %v1926 = vpop.permute.xlu0 %1925
      %1928 = vrot.lane.b32.xlu0 %v1049, 32
      %v1929 = vpop.permute.xlu0 %1928
      %v1931 = vrot.slane %v1926, 4
      %v1932 = vsel %vm1062, %v1931, %v1049
      %v1933 = vrot.slane %v1049, 4
      %v1934 = vsel %vm1062, %v1926, %v1933
      %v1936 = vunpack.c.l.s4 1983009808
      %v1937 = vunpack.c.0.s8 %v1936
      %v1938 = vperm.slane %v1932, %v1937
      %v1940 = vunpack.c.l.s4 1983009808
      %v1941 = vunpack.c.0.s8 %v1940
      %v1942 = vperm.slane %v1934, %v1941
      %v1943 = vrot.slane %v1929, 4
      %v1944 = vsel %vm1062, %v1943, %v1923
      %v1945 = vrot.slane %v1923, 4
      %v1946 = vsel %vm1062, %v1929, %v1945
      %v1948 = vunpack.c.l.s4 1983009808
      %v1949 = vunpack.c.0.s8 %v1948
      %v1950 = vperm.slane %v1944, %v1949
      %v1952 = vunpack.c.l.s4 1983009808
      %v1953 = vunpack.c.0.s8 %v1952
      %v1954 = vperm.slane %v1946, %v1953
      %v1955 = vrot.slane %v1950, 4
      %v1956 = vsel %vm1062, %v1955, %v1938
      %v1957 = vrot.slane %v1938, 4
      %v1958 = vsel %vm1062, %v1950, %v1957
      %v1960 = vunpack.c.l.s4 1934713408
      %v1961 = vunpack.c.0.s8 %v1960
      %v1962 = vperm.slane %v1956, %v1961
      %v1964 = vunpack.c.l.s4 1934713408
      %v1965 = vunpack.c.0.s8 %v1964
      %v1966 = vperm.slane %v1958, %v1965
      %v1967 = vrot.slane %v1954, 4
      %v1968 = vsel %vm1062, %v1967, %v1942
      %v1969 = vrot.slane %v1942, 4
      %v1970 = vsel %vm1062, %v1954, %v1969
      %v1972 = vunpack.c.l.s4 1934713408
      %v1973 = vunpack.c.0.s8 %v1972
      %v1974 = vperm.slane %v1968, %v1973
      %v1976 = vunpack.c.l.s4 1934713408
      %v1977 = vunpack.c.0.s8 %v1976
      %v1978 = vperm.slane %v1970, %v1977
      %v1979 = vrot.slane %v1962, 4
      %v1980 = vsel %vm1062, 0.0, %v1979
      %v1981 = vrot.slane %v1966, 4
      %v1982 = vsel %vm1062, 0.0, %v1981
      %v1983 = vrot.slane %v1974, 4
      %v1984 = vsel %vm1062, 0.0, %v1983
      %v1985 = vrot.slane %v1978, 4
      %v1986 = vsel %vm1062, 0.0, %v1985
      %v1987 = vsel %vm1062, %v1849, %v1830
      %v1989 = vunpack.c.l.s4 1983009808
      %v1990 = vunpack.c.0.s8 %v1989
      %v1991 = vperm.slane %v1987, %v1990
      %v1992 = vrot.slane %v1850, 4
      %v1993 = vsel %vm1062, %v1992, %v1848
      %v1995 = vunpack.c.l.s4 1983009808
      %v1996 = vunpack.c.0.s8 %v1995
      %v1997 = vperm.slane %v1993, %v1996
      %v1998 = vsel %vm1062, %v1853, %v1842
      %v2000 = vunpack.c.l.s4 1983009808
      %v2001 = vunpack.c.0.s8 %v2000
      %v2002 = vperm.slane %v1998, %v2001
      %v2003 = vrot.slane %v1854, 4
      %v2004 = vsel %vm1062, %v2003, %v1852
      %v2006 = vunpack.c.l.s4 1983009808
      %v2007 = vunpack.c.0.s8 %v2006
      %v2008 = vperm.slane %v2004, %v2007
      %v2009 = vrot.slane %v1997, 4
      %v2010 = vsel %vm1062, %v2009, %v1991
      %v2011 = vrot.slane %v1991, 4
      %v2012 = vsel %vm1062, %v1997, %v2011
      %v2014 = vunpack.c.l.s4 1934713408
      %v2015 = vunpack.c.0.s8 %v2014
      %v2016 = vperm.slane %v2010, %v2015
      %v2018 = vunpack.c.l.s4 1934713408
      %v2019 = vunpack.c.0.s8 %v2018
      %v2020 = vperm.slane %v2012, %v2019
      %v2021 = vrot.slane %v2008, 4
      %v2022 = vsel %vm1062, %v2021, %v2002
      %v2023 = vrot.slane %v2002, 4
      %v2024 = vsel %vm1062, %v2008, %v2023
      %v2026 = vunpack.c.l.s4 1934713408
      %v2027 = vunpack.c.0.s8 %v2026
      %v2028 = vperm.slane %v2022, %v2027
      %v2030 = vunpack.c.l.s4 1934713408
      %v2031 = vunpack.c.0.s8 %v2030
      %v2032 = vperm.slane %v2024, %v2031
      %v2033 = vrot.slane %v2028, 4
      %v2034 = vsel %vm1062, %v2033, %v2016
      %v2035 = vrot.slane %v2016, 4
      %v2036 = vsel %vm1062, %v2028, %v2035
      %v2037 = vrot.slane %v2032, 4
      %v2038 = vsel %vm1062, %v2037, %v2020
      %v2039 = vrot.slane %v2020, 4
      %v2040 = vsel %vm1062, %v2032, %v2039
      %v2041 = vsel %vm1062, %v1915, %v1896
      %v2043 = vunpack.c.l.s4 1983009808
      %v2044 = vunpack.c.0.s8 %v2043
      %v2045 = vperm.slane %v2041, %v2044
      %v2046 = vrot.slane %v1916, 4
      %v2047 = vsel %vm1062, %v2046, %v1914
      %v2049 = vunpack.c.l.s4 1983009808
      %v2050 = vunpack.c.0.s8 %v2049
      %v2051 = vperm.slane %v2047, %v2050
      %v2052 = vsel %vm1062, %v1919, %v1908
      %v2054 = vunpack.c.l.s4 1983009808
      %v2055 = vunpack.c.0.s8 %v2054
      %v2056 = vperm.slane %v2052, %v2055
      %v2057 = vrot.slane %v1920, 4
      %v2058 = vsel %vm1062, %v2057, %v1918
      %v2060 = vunpack.c.l.s4 1983009808
      %v2061 = vunpack.c.0.s8 %v2060
      %v2062 = vperm.slane %v2058, %v2061
      %v2063 = vrot.slane %v2051, 4
      %v2064 = vsel %vm1062, %v2063, %v2045
      %v2065 = vrot.slane %v2045, 4
      %v2066 = vsel %vm1062, %v2051, %v2065
      %v2068 = vunpack.c.l.s4 1934713408
      %v2069 = vunpack.c.0.s8 %v2068
      %v2070 = vperm.slane %v2064, %v2069
      %v2072 = vunpack.c.l.s4 1934713408
      %v2073 = vunpack.c.0.s8 %v2072
      %v2074 = vperm.slane %v2066, %v2073
      %v2075 = vrot.slane %v2062, 4
      %v2076 = vsel %vm1062, %v2075, %v2056
      %v2077 = vrot.slane %v2056, 4
      %v2078 = vsel %vm1062, %v2062, %v2077
      %v2080 = vunpack.c.l.s4 1934713408
      %v2081 = vunpack.c.0.s8 %v2080
      %v2082 = vperm.slane %v2076, %v2081
      %v2084 = vunpack.c.l.s4 1934713408
      %v2085 = vunpack.c.0.s8 %v2084
      %v2086 = vperm.slane %v2078, %v2085
      %v2087 = vrot.slane %v2082, 4
      %v2088 = vsel %vm1062, %v2087, %v2070
      %v2089 = vrot.slane %v2070, 4
      %v2090 = vsel %vm1062, %v2082, %v2089
      %v2091 = vrot.slane %v2086, 4
      %v2092 = vsel %vm1062, %v2091, %v2074
      %v2093 = vrot.slane %v2074, 4
      %v2094 = vsel %vm1062, %v2086, %v2093
      %v2095 = vsel %vm1062, %v1981, %v1962
      %v2097 = vunpack.c.l.s4 1983009808
      %v2098 = vunpack.c.0.s8 %v2097
      %v2099 = vperm.slane %v2095, %v2098
      %v2100 = vrot.slane %v1982, 4
      %v2101 = vsel %vm1062, %v2100, %v1980
      %v2103 = vunpack.c.l.s4 1983009808
      %v2104 = vunpack.c.0.s8 %v2103
      %v2105 = vperm.slane %v2101, %v2104
      %v2106 = vsel %vm1062, %v1985, %v1974
      %v2108 = vunpack.c.l.s4 1983009808
      %v2109 = vunpack.c.0.s8 %v2108
      %v2110 = vperm.slane %v2106, %v2109
      %v2111 = vrot.slane %v1986, 4
      %v2112 = vsel %vm1062, %v2111, %v1984
      %v2114 = vunpack.c.l.s4 1983009808
      %v2115 = vunpack.c.0.s8 %v2114
      %v2116 = vperm.slane %v2112, %v2115
      %v2117 = vrot.slane %v2105, 4
      %v2118 = vsel %vm1062, %v2117, %v2099
      %v2119 = vrot.slane %v2099, 4
      %v2120 = vsel %vm1062, %v2105, %v2119
      %v2122 = vunpack.c.l.s4 1934713408
      %v2123 = vunpack.c.0.s8 %v2122
      %v2124 = vperm.slane %v2118, %v2123
      %v2126 = vunpack.c.l.s4 1934713408
      %v2127 = vunpack.c.0.s8 %v2126
      %v2128 = vperm.slane %v2120, %v2127
      %v2129 = vrot.slane %v2116, 4
      %v2130 = vsel %vm1062, %v2129, %v2110
      %v2131 = vrot.slane %v2110, 4
      %v2132 = vsel %vm1062, %v2116, %v2131
      %v2134 = vunpack.c.l.s4 1934713408
      %v2135 = vunpack.c.0.s8 %v2134
      %v2136 = vperm.slane %v2130, %v2135
      %v2138 = vunpack.c.l.s4 1934713408
      %v2139 = vunpack.c.0.s8 %v2138
      %v2140 = vperm.slane %v2132, %v2139
      %v2141 = vrot.slane %v2136, 4
      %v2142 = vsel %vm1062, %v2141, %v2124
      %v2143 = vrot.slane %v2124, 4
      %v2144 = vsel %vm1062, %v2136, %v2143
      %v2145 = vrot.slane %v2140, 4
      %v2146 = vsel %vm1062, %v2145, %v2128
      %v2147 = vrot.slane %v2128, 4
      %v2148 = vsel %vm1062, %v2140, %v2147
      %v2150 = vsel %vm1412, %v2034, 0
      %v2153 = vsel %vm1412, %v2088, 0
      %2155 = vmatpush.xpose.msra.mxu0 0.0
      %2156 = vmatpush.xpose.msra.mxu0 0.0
      %2157 = vmatpush.xpose.msra.mxu0 0.0
      %2158 = vmatpush.xpose.msra.mxu0 0.0
      %2159 = vmatpush.xpose.msra.mxu0 0.0
      %2160 = vmatpush.xpose.msra.mxu0 0.0
      %2161 = vmatpush.xpose.msra.mxu0 0.0
      %2162 = vmatpush.xpose.msra.mxu0 0.0
      %2163 = vmatpush.xpose.msra.mxu0 0.0
      %2164 = vmatpush.xpose.msra.mxu0 0.0
      %2165 = vmatpush.xpose.msra.mxu0 0.0
      %2166 = vmatpush.xpose.msra.mxu0 0.0
      %2167 = vmatpush.xpose.msra.mxu0 0.0
      %2168 = vmatpush.xpose.msra.mxu0 0.0
      %2169 = vmatpush.xpose.msra.mxu0 0.0
      %2170 = vmatpush.xpose.msra.mxu0 %v2153
      %2171 = vmatmul.f32.gmra.mxu0 %v2150
      %v2172 = vpop.f32.mrf.mxu0
      %v2173 = vadd.f32 0.0, %v2172
      %2174 = vdwg.mxu0
      %v2176 = vsel %vm1412, %v2036, 0
      %v2179 = vsel %vm1412, %v2090, 0
      %2181 = vmatpush.xpose.msra.mxu0 0.0
      %2182 = vmatpush.xpose.msra.mxu0 0.0
      %2183 = vmatpush.xpose.msra.mxu0 0.0
      %2184 = vmatpush.xpose.msra.mxu0 0.0
      %2185 = vmatpush.xpose.msra.mxu0 0.0
      %2186 = vmatpush.xpose.msra.mxu0 0.0
      %2187 = vmatpush.xpose.msra.mxu0 0.0
      %2188 = vmatpush.xpose.msra.mxu0 0.0
      %2189 = vmatpush.xpose.msra.mxu0 0.0
      %2190 = vmatpush.xpose.msra.mxu0 0.0
      %2191 = vmatpush.xpose.msra.mxu0 0.0
      %2192 = vmatpush.xpose.msra.mxu0 0.0
      %2193 = vmatpush.xpose.msra.mxu0 0.0
      %2194 = vmatpush.xpose.msra.mxu0 0.0
      %2195 = vmatpush.xpose.msra.mxu0 0.0
      %2196 = vmatpush.xpose.msra.mxu0 %v2179
      %2197 = vmatmul.f32.gmra.mxu0 %v2176
      %v2198 = vpop.f32.mrf.mxu0
      %v2199 = vadd.f32 0.0, %v2198
      %2200 = vdwg.mxu0
      %v2202 = vsel %vm1412, %v2038, 0
      %v2205 = vsel %vm1412, %v2092, 0
      %2207 = vmatpush.xpose.msra.mxu0 0.0
      %2208 = vmatpush.xpose.msra.mxu0 0.0
      %2209 = vmatpush.xpose.msra.mxu0 0.0
      %2210 = vmatpush.xpose.msra.mxu0 0.0
      %2211 = vmatpush.xpose.msra.mxu0 0.0
      %2212 = vmatpush.xpose.msra.mxu0 0.0
      %2213 = vmatpush.xpose.msra.mxu0 0.0
      %2214 = vmatpush.xpose.msra.mxu0 0.0
      %2215 = vmatpush.xpose.msra.mxu0 0.0
      %2216 = vmatpush.xpose.msra.mxu0 0.0
      %2217 = vmatpush.xpose.msra.mxu0 0.0
      %2218 = vmatpush.xpose.msra.mxu0 0.0
      %2219 = vmatpush.xpose.msra.mxu0 0.0
      %2220 = vmatpush.xpose.msra.mxu0 0.0
      %2221 = vmatpush.xpose.msra.mxu0 0.0
      %2222 = vmatpush.xpose.msra.mxu0 %v2205
      %2223 = vmatmul.f32.gmra.mxu0 %v2202
      %v2224 = vpop.f32.mrf.mxu0
      %v2225 = vadd.f32 0.0, %v2224
      %2226 = vdwg.mxu0
      %v2228 = vsel %vm1412, %v2040, 0
      %v2231 = vsel %vm1412, %v2094, 0
      %2233 = vmatpush.xpose.msra.mxu0 0.0
      %2234 = vmatpush.xpose.msra.mxu0 0.0
      %2235 = vmatpush.xpose.msra.mxu0 0.0
      %2236 = vmatpush.xpose.msra.mxu0 0.0
      %2237 = vmatpush.xpose.msra.mxu0 0.0
      %2238 = vmatpush.xpose.msra.mxu0 0.0
      %2239 = vmatpush.xpose.msra.mxu0 0.0
      %2240 = vmatpush.xpose.msra.mxu0 0.0
      %2241 = vmatpush.xpose.msra.mxu0 0.0
      %2242 = vmatpush.xpose.msra.mxu0 0.0
      %2243 = vmatpush.xpose.msra.mxu0 0.0
      %2244 = vmatpush.xpose.msra.mxu0 0.0
      %2245 = vmatpush.xpose.msra.mxu0 0.0
      %2246 = vmatpush.xpose.msra.mxu0 0.0
      %2247 = vmatpush.xpose.msra.mxu0 0.0
      %2248 = vmatpush.xpose.msra.mxu0 %v2231
      %2249 = vmatmul.f32.gmra.mxu0 %v2228
      %v2250 = vpop.f32.mrf.mxu0
      %v2251 = vadd.f32 0.0, %v2250
      %2252 = vdwg.mxu0
      %v2253 = vmul.f32 %v2173, 0.17677669
      %v2254 = vmul.f32 %v2199, 0.17677669
      %v2255 = vmul.f32 %v2225, 0.17677669
      %v2256 = vmul.f32 %v2251, 0.17677669
      %v2257 = vadd.f32 %v2253, %v878
      %v2258 = vadd.f32 %v2254, %v878
      %v2259 = vadd.f32 %v2255, %v878
      %v2260 = vadd.f32 %v2256, %v878
      %v2261 = vsel %vm1525, %v2257, -inf
      %2262 = vmax.xlane.f32.xlu0 %v2261
      %v2263 = vpop.xlane.xlu0 %2262
      %v2264 = vsel %vm1525, %v2258, -inf
      %2265 = vmax.xlane.f32.xlu0 %v2264
      %v2266 = vpop.xlane.xlu0 %2265
      %v2267 = vsel %vm1525, %v2259, -inf
      %2268 = vmax.xlane.f32.xlu0 %v2267
      %v2269 = vpop.xlane.xlu0 %2268
      %v2270 = vsel %vm1525, %v2260, -inf
      %2271 = vmax.xlane.f32.xlu0 %v2270
      %v2272 = vpop.xlane.xlu0 %2271
      %v2273 = vsub.f32 %v2257, %v2263
      %v2274 = vsub.f32 %v2258, %v2266
      %v2275 = vsub.f32 %v2259, %v2269
      %v2276 = vsub.f32 %v2260, %v2272
      %v2277 = vmul.f32 %v2273, 1.442695
      %v2278 = vpow.pop %v2277
      %v2279 = vmul.f32 %v2274, 1.442695
      %v2280 = vpow.pop %v2279
      %v2281 = vmul.f32 %v2275, 1.442695
      %v2282 = vpow.pop %v2281
      %v2283 = vmul.f32 %v2276, 1.442695
      %v2284 = vpow.pop %v2283
      %v2285 = vsel %vm1525, %v2278, 0.0
      %2286 = vadd.xlane.f32.xlu0 %v2285
      %v2287 = vpop.xlane.xlu0 %2286
      %v2288 = vsel %vm1525, %v2280, 0.0
      %2289 = vadd.xlane.f32.xlu0 %v2288
      %v2290 = vpop.xlane.xlu0 %2289
      %v2291 = vsel %vm1525, %v2282, 0.0
      %2292 = vadd.xlane.f32.xlu0 %v2291
      %v2293 = vpop.xlane.xlu0 %2292
      %v2294 = vsel %vm1525, %v2284, 0.0
      %2295 = vadd.xlane.f32.xlu0 %v2294
      %v2296 = vpop.xlane.xlu0 %2295
      %v2297 = vrcp.pop %v2287
      %v2298 = vrcp.pop %v2290
      %v2299 = vrcp.pop %v2293
      %v2300 = vrcp.pop %v2296
      %v2301 = vmul.f32 %v2278, %v2297
      %v2302 = vmul.f32 %v2280, %v2298
      %v2303 = vmul.f32 %v2282, %v2299
      %v2304 = vmul.f32 %v2284, %v2300
      %v2306 = vsel %vm1525, %v2301, 0
      %2308 = vmatpush.msra.mxu0 0.0
      %2309 = vmatpush.msra.mxu0 0.0
      %2310 = vmatpush.msra.mxu0 0.0
      %2311 = vmatpush.msra.mxu0 0.0
      %2312 = vmatpush.msra.mxu0 0.0
      %2313 = vmatpush.msra.mxu0 0.0
      %2314 = vmatpush.msra.mxu0 0.0
      %2315 = vmatpush.msra.mxu0 0.0
      %2316 = vmatpush.msra.mxu0 0.0
      %2317 = vmatpush.msra.mxu0 0.0
      %2318 = vmatpush.msra.mxu0 0.0
      %2319 = vmatpush.msra.mxu0 0.0
      %2320 = vmatpush.msra.mxu0 0.0
      %2321 = vmatpush.msra.mxu0 0.0
      %2322 = vmatpush.msra.mxu0 0.0
      %2323 = vmatpush.msra.mxu0 %v2142
      %2324 = vmatmul.f32.gmra.mxu0 %v2306
      %v2325 = vpop.f32.mrf.mxu0
      %v2326 = vadd.f32 0.0, %v2325
      %2327 = vdwg.mxu0
      %v2329 = vsel %vm1525, %v2302, 0
      %2331 = vmatpush.msra.mxu0 0.0
      %2332 = vmatpush.msra.mxu0 0.0
      %2333 = vmatpush.msra.mxu0 0.0
      %2334 = vmatpush.msra.mxu0 0.0
      %2335 = vmatpush.msra.mxu0 0.0
      %2336 = vmatpush.msra.mxu0 0.0
      %2337 = vmatpush.msra.mxu0 0.0
      %2338 = vmatpush.msra.mxu0 0.0
      %2339 = vmatpush.msra.mxu0 0.0
      %2340 = vmatpush.msra.mxu0 0.0
      %2341 = vmatpush.msra.mxu0 0.0
      %2342 = vmatpush.msra.mxu0 0.0
      %2343 = vmatpush.msra.mxu0 0.0
      %2344 = vmatpush.msra.mxu0 0.0
      %2345 = vmatpush.msra.mxu0 0.0
      %2346 = vmatpush.msra.mxu0 %v2144
      %2347 = vmatmul.f32.gmra.mxu0 %v2329
      %v2348 = vpop.f32.mrf.mxu0
      %v2349 = vadd.f32 0.0, %v2348
      %2350 = vdwg.mxu0
      %v2352 = vsel %vm1525, %v2303, 0
      %2354 = vmatpush.msra.mxu0 0.0
      %2355 = vmatpush.msra.mxu0 0.0
      %2356 = vmatpush.msra.mxu0 0.0
      %2357 = vmatpush.msra.mxu0 0.0
      %2358 = vmatpush.msra.mxu0 0.0
      %2359 = vmatpush.msra.mxu0 0.0
      %2360 = vmatpush.msra.mxu0 0.0
      %2361 = vmatpush.msra.mxu0 0.0
      %2362 = vmatpush.msra.mxu0 0.0
      %2363 = vmatpush.msra.mxu0 0.0
      %2364 = vmatpush.msra.mxu0 0.0
      %2365 = vmatpush.msra.mxu0 0.0
      %2366 = vmatpush.msra.mxu0 0.0
      %2367 = vmatpush.msra.mxu0 0.0
      %2368 = vmatpush.msra.mxu0 0.0
      %2369 = vmatpush.msra.mxu0 %v2146
      %2370 = vmatmul.f32.gmra.mxu0 %v2352
      %v2371 = vpop.f32.mrf.mxu0
      %v2372 = vadd.f32 0.0, %v2371
      %2373 = vdwg.mxu0
      %v2375 = vsel %vm1525, %v2304, 0
      %2377 = vmatpush.msra.mxu0 0.0
      %2378 = vmatpush.msra.mxu0 0.0
      %2379 = vmatpush.msra.mxu0 0.0
      %2380 = vmatpush.msra.mxu0 0.0
      %2381 = vmatpush.msra.mxu0 0.0
      %2382 = vmatpush.msra.mxu0 0.0
      %2383 = vmatpush.msra.mxu0 0.0
      %2384 = vmatpush.msra.mxu0 0.0
      %2385 = vmatpush.msra.mxu0 0.0
      %2386 = vmatpush.msra.mxu0 0.0
      %2387 = vmatpush.msra.mxu0 0.0
      %2388 = vmatpush.msra.mxu0 0.0
      %2389 = vmatpush.msra.mxu0 0.0
      %2390 = vmatpush.msra.mxu0 0.0
      %2391 = vmatpush.msra.mxu0 0.0
      %2392 = vmatpush.msra.mxu0 %v2148
      %2393 = vmatmul.f32.gmra.mxu0 %v2375
      %v2394 = vpop.f32.mrf.mxu0
      %v2395 = vadd.f32 0.0, %v2394
      %2396 = vdwg.mxu0
      %v2397 = vrot.slane %v2372, 4
      %v2398 = vsel %vm1062, %v2397, %v2326
      %v2399 = vrot.slane %v2326, 4
      %v2400 = vsel %vm1062, %v2372, %v2399
      %v2402 = vunpack.c.l.s4 1983009808
      %v2403 = vunpack.c.0.s8 %v2402
      %v2404 = vperm.slane %v2398, %v2403
      %v2406 = vunpack.c.l.s4 1983009808
      %v2407 = vunpack.c.0.s8 %v2406
      %v2408 = vperm.slane %v2400, %v2407
      %v2409 = vrot.slane %v2395, 4
      %v2410 = vsel %vm1062, %v2409, %v2349
      %v2411 = vrot.slane %v2349, 4
      %v2412 = vsel %vm1062, %v2395, %v2411
      %v2414 = vunpack.c.l.s4 1983009808
      %v2415 = vunpack.c.0.s8 %v2414
      %v2416 = vperm.slane %v2410, %v2415
      %v2418 = vunpack.c.l.s4 1983009808
      %v2419 = vunpack.c.0.s8 %v2418
      %v2420 = vperm.slane %v2412, %v2419
      %v2421 = vrot.slane %v2416, 4
      %v2422 = vsel %vm1062, %v2421, %v2404
      %v2423 = vrot.slane %v2404, 4
      %v2424 = vsel %vm1062, %v2416, %v2423
      %v2426 = vunpack.c.l.s4 1934713408
      %v2427 = vunpack.c.0.s8 %v2426
      %v2428 = vperm.slane %v2422, %v2427
      %v2430 = vunpack.c.l.s4 1934713408
      %v2431 = vunpack.c.0.s8 %v2430
      %v2432 = vperm.slane %v2424, %v2431
      %v2433 = vrot.slane %v2420, 4
      %v2434 = vsel %vm1062, %v2433, %v2408
      %v2435 = vrot.slane %v2408, 4
      %v2436 = vsel %vm1062, %v2420, %v2435
      %v2438 = vunpack.c.l.s4 1934713408
      %v2439 = vunpack.c.0.s8 %v2438
      %v2440 = vperm.slane %v2434, %v2439
      %v2442 = vunpack.c.l.s4 1934713408
      %v2443 = vunpack.c.0.s8 %v2442
      %v2444 = vperm.slane %v2436, %v2443
      %v2445 = vrot.slane %v2428, 4
      %v2446 = vsel %vm1062, 0.0, %v2445
      %v2447 = vrot.slane %v2432, 4
      %v2448 = vsel %vm1062, 0.0, %v2447
      %v2449 = vrot.slane %v2440, 4
      %v2450 = vsel %vm1062, 0.0, %v2449
      %v2451 = vrot.slane %v2444, 4
      %v2452 = vsel %vm1062, 0.0, %v2451
      %v2453 = vsel %vm1062, %v2447, %v2428
      %v2455 = vunpack.c.l.s4 1983009808
      %v2456 = vunpack.c.0.s8 %v2455
      %v2457 = vperm.slane %v2453, %v2456
      %v2458 = vrot.slane %v2448, 4
      %v2459 = vsel %vm1062, %v2458, %v2446
      %v2461 = vunpack.c.l.s4 1983009808
      %v2462 = vunpack.c.0.s8 %v2461
      %v2463 = vperm.slane %v2459, %v2462
      %v2464 = vsel %vm1062, %v2451, %v2440
      %v2466 = vunpack.c.l.s4 1983009808
      %v2467 = vunpack.c.0.s8 %v2466
      %v2468 = vperm.slane %v2464, %v2467
      %v2469 = vrot.slane %v2452, 4
      %v2470 = vsel %vm1062, %v2469, %v2450
      %v2472 = vunpack.c.l.s4 1983009808
      %v2473 = vunpack.c.0.s8 %v2472
      %v2474 = vperm.slane %v2470, %v2473
      %v2475 = vrot.slane %v2463, 4
      %v2476 = vsel %vm1062, %v2475, %v2457
      %v2477 = vrot.slane %v2457, 4
      %v2478 = vsel %vm1062, %v2463, %v2477
      %v2480 = vunpack.c.l.s4 1934713408
      %v2481 = vunpack.c.0.s8 %v2480
      %v2482 = vperm.slane %v2476, %v2481
      %v2484 = vunpack.c.l.s4 1934713408
      %v2485 = vunpack.c.0.s8 %v2484
      %v2486 = vperm.slane %v2478, %v2485
      %v2487 = vrot.slane %v2474, 4
      %v2488 = vsel %vm1062, %v2487, %v2468
      %v2489 = vrot.slane %v2468, 4
      %v2490 = vsel %vm1062, %v2474, %v2489
      %v2492 = vunpack.c.l.s4 1934713408
      %v2493 = vunpack.c.0.s8 %v2492
      %v2494 = vperm.slane %v2488, %v2493
      %v2496 = vunpack.c.l.s4 1934713408
      %v2497 = vunpack.c.0.s8 %v2496
      %v2498 = vperm.slane %v2490, %v2497
      %v2499 = vrot.slane %v2494, 4
      %v2500 = vsel %vm1062, %v2499, %v2482
      %v2501 = vrot.slane %v2482, 4
      %v2502 = vsel %vm1062, %v2494, %v2501
      %v2503 = vrot.slane %v2498, 4
      %v2504 = vsel %vm1062, %v2503, %v2486
      %v2505 = vrot.slane %v2486, 4
      %v2506 = vsel %vm1062, %v2498, %v2505
      %2508 = vrot.lane.b32.xlu0 %v2502, 32
      %v2509 = vpop.permute.xlu0 %2508
      %2512 = vrot.lane.b32.xlu0 %v2504, 64
      %v2513 = vpop.permute.xlu0 %2512
      %2516 = vrot.lane.b32.xlu0 %v2506, 96
      %v2517 = vpop.permute.xlu0 %2516
      %v2519 = vsel %vm1412, %v2500, %v2509
      %v2520 = vsel %vm1785, %v2519, %v2513
      %v2521 = vsel %vm1787, %v2520, %v2517
      %v2522 = vld [vmem:[%s6] sm:$0xff]
      %v2523 = vld [vmem:[%s6 + $0x8] sm:$0xff]
      %v2524 = vld [vmem:[%s6 + $0x10] sm:$0xff]
      %v2525 = vld [vmem:[%s6 + $0x18] sm:$0xff]
      %v2526 = vld [vmem:[%s6 + $0x20] sm:$0xff]
      %v2527 = vld [vmem:[%s6 + $0x28] sm:$0xff]
      %v2528 = vld [vmem:[%s6 + $0x30] sm:$0xff]
      %v2529 = vld [vmem:[%s6 + $0x38] sm:$0xff]
      %v2530 = vld [vmem:[%s6 + $0x40] sm:$0xff]
      %v2531 = vld [vmem:[%s6 + $0x48] sm:$0xff]
      %v2532 = vld [vmem:[%s6 + $0x50] sm:$0xff]
      %v2533 = vld [vmem:[%s6 + $0x58] sm:$0xff]
      %v2534 = vld [vmem:[%s6 + $0x60] sm:$0xff]
      %v2535 = vld [vmem:[%s6 + $0x68] sm:$0xff]
      %v2536 = vld [vmem:[%s6 + $0x70] sm:$0xff]
      %v2537 = vld [vmem:[%s6 + $0x78] sm:$0xff]
      %v2538 = vld [vmem:[%s7] sm:$0x1]
      %v2539 = vperm.slane %v2538, 0
      %2540 = vmatpush.msra.mxu0 %v2537
      %2541 = vmatpush.msra.mxu0 %v2536
      %2542 = vmatpush.msra.mxu0 %v2535
      %2543 = vmatpush.msra.mxu0 %v2534
      %2544 = vmatpush.msra.mxu0 %v2533
      %2545 = vmatpush.msra.mxu0 %v2532
      %2546 = vmatpush.msra.mxu0 %v2531
      %2547 = vmatpush.msra.mxu0 %v2530
      %2548 = vmatpush.msra.mxu0 %v2529
      %2549 = vmatpush.msra.mxu0 %v2528
      %2550 = vmatpush.msra.mxu0 %v2527
      %2551 = vmatpush.msra.mxu0 %v2526
      %2552 = vmatpush.msra.mxu0 %v2525
      %2553 = vmatpush.msra.mxu0 %v2524
      %2554 = vmatpush.msra.mxu0 %v2523
      %2555 = vmatpush.msra.mxu0 %v2522
      %2556 = vmatmul.f32.gmra.mxu0 %v1788
      %v2557 = vpop.f32.mrf.mxu0
      %v2558 = vadd.f32 %v2539, %v2557
      %2559 = vmatmul.f32.gmra.mxu0 %v2521
      %v2560 = vpop.f32.mrf.mxu0
      %v2561 = vadd.f32 %v2539, %v2560
      %2562 = vdwg.mxu0
      %v2563 = vadd.f32 %v873, %v2558
      %v2564 = vadd.f32 %v874, %v2561
      %v2565 = vld [vmem:[%s8] sm:$0x1]
      %v2566 = vld [vmem:[%s9] sm:$0x1]
      %2567 = vadd.xlane.f32.xlu0 %v2563
      %v2568 = vpop.xlane.xlu0 %2567
      %2569 = vadd.xlane.f32.xlu0 %v2564
      %v2570 = vpop.xlane.xlu0 %2569
      %v2571 = vmul.f32 %v2568, %v891
      %v2572 = vmul.f32 %v2570, %v891
      %v2573 = vsub.f32 %v2563, %v2571
      %v2574 = vsub.f32 %v2564, %v2572
      %v2575 = vmul.f32 %v2573, %v2573
      %v2576 = vmul.f32 %v2574, %v2574
      %2577 = vadd.xlane.f32.xlu0 %v2575
      %v2578 = vpop.xlane.xlu0 %2577
      %2579 = vadd.xlane.f32.xlu0 %v2576
      %v2580 = vpop.xlane.xlu0 %2579
      %v2581 = vmul.f32 %v2578, %v891
      %v2582 = vmul.f32 %v2580, %v891
      %v2583 = vadd.f32 %v2581, 1e-05
      %v2584 = vadd.f32 %v2582, 1e-05
      %v2585 = vrsqrt.pop %v2583
      %v2586 = vmul.f32 %v2585, %v2583
      %v2587 = vmul.f32 %v2586, %v2585
      %v2588 = vmul.f32 0.5, %v2587
      %v2589 = vsub.f32 1.5, %v2588
      %v2590 = vmul.f32 %v2585, %v2589
      %vm2591 = vweird.f32 %v2583
      %vm2592 = vweird.f32 %v2585
      %vm2593 = vmor %vm2591, %vm2592
      %v2594 = vsel %vm2593, %v2585, %v2590
      %v2595 = vrsqrt.pop %v2584
      %v2596 = vmul.f32 %v2595, %v2584
      %v2597 = vmul.f32 %v2596, %v2595
      %v2598 = vmul.f32 0.5, %v2597
      %v2599 = vsub.f32 1.5, %v2598
      %v2600 = vmul.f32 %v2595, %v2599
      %vm2601 = vweird.f32 %v2584
      %vm2602 = vweird.f32 %v2595
      %vm2603 = vmor %vm2601, %vm2602
      %v2604 = vsel %vm2603, %v2595, %v2600
      %v2605 = vmul.f32 %v2573, %v2594
      %v2606 = vmul.f32 %v2574, %v2604
      %v2607 = vperm.slane %v2565, 0
      %v2608 = vmul.f32 %v2605, %v2607
      %v2609 = vmul.f32 %v2606, %v2607
      %v2610 = vperm.slane %v2566, 0
      %v2611 = vadd.f32 %v2608, %v2610
      %v2612 = vadd.f32 %v2609, %v2610
      %v2613 = vld [vmem:[%s10] sm:$0xff]
      %v2614 = vld [vmem:[%s10 + $0x8] sm:$0xff]
      %v2615 = vld [vmem:[%s10 + $0x10] sm:$0xff]
      %v2616 = vld [vmem:[%s10 + $0x18] sm:$0xff]
      %v2617 = vld [vmem:[%s10 + $0x20] sm:$0xff]
      %v2618 = vld [vmem:[%s10 + $0x28] sm:$0xff]
      %v2619 = vld [vmem:[%s10 + $0x30] sm:$0xff]
      %v2620 = vld [vmem:[%s10 + $0x38] sm:$0xff]
      %v2621 = vld [vmem:[%s10 + $0x40] sm:$0xff]
      %v2622 = vld [vmem:[%s10 + $0x48] sm:$0xff]
      %v2623 = vld [vmem:[%s10 + $0x50] sm:$0xff]
      %v2624 = vld [vmem:[%s10 + $0x58] sm:$0xff]
      %v2625 = vld [vmem:[%s10 + $0x60] sm:$0xff]
      %v2626 = vld [vmem:[%s10 + $0x68] sm:$0xff]
      %v2627 = vld [vmem:[%s10 + $0x70] sm:$0xff]
      %v2628 = vld [vmem:[%s10 + $0x78] sm:$0xff]
      %v2629 = vld [vmem:[%s10 + $0x80] sm:$0xff]
      %v2630 = vld [vmem:[%s10 + $0x88] sm:$0xff]
      %v2631 = vld [vmem:[%s10 + $0x90] sm:$0xff]
      %v2632 = vld [vmem:[%s10 + $0x98] sm:$0xff]
      %v2633 = vld [vmem:[%s10 + $0xa0] sm:$0xff]
      %v2634 = vld [vmem:[%s10 + $0xa8] sm:$0xff]
      %v2635 = vld [vmem:[%s10 + $0xb0] sm:$0xff]
      %v2636 = vld [vmem:[%s10 + $0xb8] sm:$0xff]
      %v2637 = vld [vmem:[%s10 + $0xc0] sm:$0xff]
      %v2638 = vld [vmem:[%s10 + $0xc8] sm:$0xff]
      %v2639 = vld [vmem:[%s10 + $0xd0] sm:$0xff]
      %v2640 = vld [vmem:[%s10 + $0xd8] sm:$0xff]
      %v2641 = vld [vmem:[%s10 + $0xe0] sm:$0xff]
      %v2642 = vld [vmem:[%s10 + $0xe8] sm:$0xff]
      %v2643 = vld [vmem:[%s10 + $0xf0] sm:$0xff]
      %v2644 = vld [vmem:[%s10 + $0xf8] sm:$0xff]
      %v2645 = vld [vmem:[%s11] ss:$2 sm:$0x3]
      %v2647 = vperm.slane %v2645, 0
      %v2648 = vperm.slane %v2645, 1
      %2651 = vmatpush.msra.mxu0 %v2643
      %2652 = vmatpush.msra.mxu0 %v2641
      %2653 = vmatpush.msra.mxu0 %v2639
      %2654 = vmatpush.msra.mxu0 %v2637
      %2655 = vmatpush.msra.mxu0 %v2635
      %2656 = vmatpush.msra.mxu0 %v2633
      %2657 = vmatpush.msra.mxu0 %v2631
      %2658 = vmatpush.msra.mxu0 %v2629
      %2659 = vmatpush.msra.mxu0 %v2627
      %2660 = vmatpush.msra.mxu0 %v2625
      %2661 = vmatpush.msra.mxu0 %v2623
      %2662 = vmatpush.msra.mxu0 %v2621
      %2663 = vmatpush.msra.mxu0 %v2619
      %2664 = vmatpush.msra.mxu0 %v2617
      %2665 = vmatpush.msra.mxu0 %v2615
      %2666 = vmatpush.msra.mxu0 %v2613
      %2667 = vmatmul.f32.gmra.mxu0 %v2611
      %v2668 = vpop.f32.mrf.mxu0
      %v2669 = vadd.f32 %v2647, %v2668
      %2670 = vmatmul.f32.gmra.mxu0 %v2612
      %v2671 = vpop.f32.mrf.mxu0
      %v2672 = vadd.f32 %v2647, %v2671
      %2673 = vdwg.mxu0
      %2674 = vmatpush.msra.mxu0 %v2644
      %2675 = vmatpush.msra.mxu0 %v2642
      %2676 = vmatpush.msra.mxu0 %v2640
      %2677 = vmatpush.msra.mxu0 %v2638
      %2678 = vmatpush.msra.mxu0 %v2636
      %2679 = vmatpush.msra.mxu0 %v2634
      %2680 = vmatpush.msra.mxu0 %v2632
      %2681 = vmatpush.msra.mxu0 %v2630
      %2682 = vmatpush.msra.mxu0 %v2628
      %2683 = vmatpush.msra.mxu0 %v2626
      %2684 = vmatpush.msra.mxu0 %v2624
      %2685 = vmatpush.msra.mxu0 %v2622
      %2686 = vmatpush.msra.mxu0 %v2620
      %2687 = vmatpush.msra.mxu0 %v2618
      %2688 = vmatpush.msra.mxu0 %v2616
      %2689 = vmatpush.msra.mxu0 %v2614
      %2690 = vmatmul.f32.gmra.mxu0 %v2611
      %v2691 = vpop.f32.mrf.mxu0
      %v2692 = vadd.f32 %v2648, %v2691
      %2693 = vmatmul.f32.gmra.mxu0 %v2612
      %v2694 = vpop.f32.mrf.mxu0
      %v2695 = vadd.f32 %v2648, %v2694
      %2696 = vdwg.mxu0
      %v2697 = vmul.f32 %v2669, 0.5
      %v2698 = vmul.f32 %v2692, 0.5
      %v2699 = vmul.f32 %v2672, 0.5
      %v2700 = vmul.f32 %v2695, 0.5
      %v2701 = vmul.f32 %v2669, 0.70710677
      %v2702 = vmul.f32 %v2692, 0.70710677
      %v2703 = vmul.f32 %v2672, 0.70710677
      %v2704 = vmul.f32 %v2695, 0.70710677
      %v2705 = vand.u32 2147483647, %v2701
      %v2706 = vand.u32 2147483647, %v2702
      %v2707 = vand.u32 2147483647, %v2703
      %v2708 = vand.u32 2147483647, %v2704
      %v2709 = vmul.f32 %v2705, 0.3275911
      %v2710 = vmul.f32 %v2706, 0.3275911
      %v2711 = vmul.f32 %v2707, 0.3275911
      %v2712 = vmul.f32 %v2708, 0.3275911
      %v2713 = vadd.f32 %v2709, 1.0
      %v2714 = vadd.f32 %v2710, 1.0
      %v2715 = vadd.f32 %v2711, 1.0
      %v2716 = vadd.f32 %v2712, 1.0
      %v2717 = vrcp.pop %v2713
      %v2718 = vmul.f32 %v2713, %v2717
      %v2719 = vsub.f32 1.0, %v2718
      %v2720 = vmul.f32 %v2717, %v2719
      %v2721 = vadd.f32 %v2717, %v2720
      %vm2722 = vweird.f32 %v2713
      %vm2723 = vweird.f32 %v2717
      %vm2724 = vmor %vm2722, %vm2723
      %v2725 = vsel %vm2724, %v2717, %v2721
      %v2726 = vand.u32 2147483647, %v2713
      %vm2727 = vcmp.eq.f32.partialorder %v2726, 8.507059e+37
      %v2728 = vand.u32 %v2713, 2147483648
      %v2729 = vor.u32 1.1754944e-38, %v2728
      %v2730 = vsel %vm2727, %v2729, %v2725
      %v2731 = vmul.f32 1.0, %v2730
      %v2732 = vrcp.pop %v2714
      %v2733 = vmul.f32 %v2714, %v2732
      %v2734 = vsub.f32 1.0, %v2733
      %v2735 = vmul.f32 %v2732, %v2734
      %v2736 = vadd.f32 %v2732, %v2735
      %vm2737 = vweird.f32 %v2714
      %vm2738 = vweird.f32 %v2732
      %vm2739 = vmor %vm2737, %vm2738
      %v2740 = vsel %vm2739, %v2732, %v2736
      %v2741 = vand.u32 2147483647, %v2714
      %vm2742 = vcmp.eq.f32.partialorder %v2741, 8.507059e+37
      %v2743 = vand.u32 %v2714, 2147483648
      %v2744 = vor.u32 1.1754944e-38, %v2743
      %v2745 = vsel %vm2742, %v2744, %v2740
      %v2746 = vmul.f32 1.0, %v2745
      %v2747 = vrcp.pop %v2715
      %v2748 = vmul.f32 %v2715, %v2747
      %v2749 = vsub.f32 1.0, %v2748
      %v2750 = vmul.f32 %v2747, %v2749
      %v2751 = vadd.f32 %v2747, %v2750
      %vm2752 = vweird.f32 %v2715
      %vm2753 = vweird.f32 %v2747
      %vm2754 = vmor %vm2752, %vm2753
      %v2755 = vsel %vm2754, %v2747, %v2751
      %v2756 = vand.u32 2147483647, %v2715
      %vm2757 = vcmp.eq.f32.partialorder %v2756, 8.507059e+37
      %v2758 = vand.u32 %v2715, 2147483648
      %v2759 = vor.u32 1.1754944e-38, %v2758
      %v2760 = vsel %vm2757, %v2759, %v2755
      %v2761 = vmul.f32 1.0, %v2760
      %v2762 = vrcp.pop %v2716
      %v2763 = vmul.f32 %v2716, %v2762
      %v2764 = vsub.f32 1.0, %v2763
      %v2765 = vmul.f32 %v2762, %v2764
      %v2766 = vadd.f32 %v2762, %v2765
      %vm2767 = vweird.f32 %v2716
      %vm2768 = vweird.f32 %v2762
      %vm2769 = vmor %vm2767, %vm2768
      %v2770 = vsel %vm2769, %v2762, %v2766
      %v2771 = vand.u32 2147483647, %v2716
      %vm2772 = vcmp.eq.f32.partialorder %v2771, 8.507059e+37
      %v2773 = vand.u32 %v2716, 2147483648
      %v2774 = vor.u32 1.1754944e-38, %v2773
      %v2775 = vsel %vm2772, %v2774, %v2770
      %v2776 = vmul.f32 1.0, %v2775
      %v2777 = vmul.f32 %v2731, 1.0614054
      %v2778 = vmul.f32 %v2746, 1.0614054
      %v2779 = vmul.f32 %v2761, 1.0614054
      %v2780 = vmul.f32 %v2776, 1.0614054
      %v2781 = vadd.f32 %v2777, -1.4531521
      %v2782 = vadd.f32 %v2778, -1.4531521
      %v2783 = vadd.f32 %v2779, -1.4531521
      %v2784 = vadd.f32 %v2780, -1.4531521
      %v2785 = vmul.f32 %v2781, %v2731
      %v2786 = vmul.f32 %v2782, %v2746
      %v2787 = vmul.f32 %v2783, %v2761
      %v2788 = vmul.f32 %v2784, %v2776
      %v2789 = vadd.f32 %v2785, 1.4214138
      %v2790 = vadd.f32 %v2786, 1.4214138
      %v2791 = vadd.f32 %v2787, 1.4214138
      %v2792 = vadd.f32 %v2788, 1.4214138
      %v2793 = vmul.f32 %v2789, %v2731
      %v2794 = vmul.f32 %v2790, %v2746
      %v2795 = vmul.f32 %v2791, %v2761
      %v2796 = vmul.f32 %v2792, %v2776
      %v2797 = vadd.f32 %v2793, -0.28449672
      %v2798 = vadd.f32 %v2794, -0.28449672
      %v2799 = vadd.f32 %v2795, -0.28449672
      %v2800 = vadd.f32 %v2796, -0.28449672
      %v2801 = vmul.f32 %v2797, %v2731
      %v2802 = vmul.f32 %v2798, %v2746
      %v2803 = vmul.f32 %v2799, %v2761
      %v2804 = vmul.f32 %v2800, %v2776
      %v2805 = vadd.f32 %v2801, 0.2548296
      %v2806 = vadd.f32 %v2802, 0.2548296
      %v2807 = vadd.f32 %v2803, 0.2548296
      %v2808 = vadd.f32 %v2804, 0.2548296
      %v2809 = vmul.f32 %v2805, %v2731
      %v2810 = vmul.f32 %v2806, %v2746
      %v2811 = vmul.f32 %v2807, %v2761
      %v2812 = vmul.f32 %v2808, %v2776
      %v2813 = vsub.f32 0.0, %v2705
      %v2814 = vsub.f32 0.0, %v2706
      %v2815 = vsub.f32 0.0, %v2707
      %v2816 = vsub.f32 0.0, %v2708
      %v2817 = vmul.f32 %v2813, %v2705
      %v2818 = vmul.f32 %v2814, %v2706
      %v2819 = vmul.f32 %v2815, %v2707
      %v2820 = vmul.f32 %v2816, %v2708
      %v2821 = vmul.f32 %v2817, 1.442695
      %v2822 = vpow.pop %v2821
      %v2823 = vmul.f32 %v2818, 1.442695
      %v2824 = vpow.pop %v2823
      %v2825 = vmul.f32 %v2819, 1.442695
      %v2826 = vpow.pop %v2825
      %v2827 = vmul.f32 %v2820, 1.442695
      %v2828 = vpow.pop %v2827
      %v2829 = vmul.f32 %v2809, %v2822
      %v2830 = vmul.f32 %v2810, %v2824
      %v2831 = vmul.f32 %v2811, %v2826
      %v2832 = vmul.f32 %v2812, %v2828
      %v2833 = vsub.f32 1.0, %v2829
      %v2834 = vsub.f32 1.0, %v2830
      %v2835 = vsub.f32 1.0, %v2831
      %v2836 = vsub.f32 1.0, %v2832
      %vm2837 = vcmp.ge.f32.partialorder %v2701, 0.0
      %vm2838 = vcmp.ge.f32.partialorder %v2702, 0.0
      %vm2839 = vcmp.ge.f32.partialorder %v2703, 0.0
      %vm2840 = vcmp.ge.f32.partialorder %v2704, 0.0
      %v2841 = vsub.f32 0.0, %v2833
      %v2842 = vsub.f32 0.0, %v2834
      %v2843 = vsub.f32 0.0, %v2835
      %v2844 = vsub.f32 0.0, %v2836
      %v2845 = vsel %vm2837, %v2833, %v2841
      %v2846 = vsel %vm2838, %v2834, %v2842
      %v2847 = vsel %vm2839, %v2835, %v2843
      %v2848 = vsel %vm2840, %v2836, %v2844
      %v2849 = vadd.f32 %v2845, 1.0
      %v2850 = vadd.f32 %v2846, 1.0
      %v2851 = vadd.f32 %v2847, 1.0
      %v2852 = vadd.f32 %v2848, 1.0
      %v2853 = vmul.f32 %v2697, %v2849
      %v2854 = vmul.f32 %v2698, %v2850
      %v2855 = vmul.f32 %v2699, %v2851
      %v2856 = vmul.f32 %v2700, %v2852
      %v2857 = vld [vmem:[%s12] sm:$0xff]
      %v2858 = vld [vmem:[%s12 + $0x8] sm:$0xff]
      %v2859 = vld [vmem:[%s12 + $0x10] sm:$0xff]
      %v2860 = vld [vmem:[%s12 + $0x18] sm:$0xff]
      %v2861 = vld [vmem:[%s12 + $0x20] sm:$0xff]
      %v2862 = vld [vmem:[%s12 + $0x28] sm:$0xff]
      %v2863 = vld [vmem:[%s12 + $0x30] sm:$0xff]
      %v2864 = vld [vmem:[%s12 + $0x38] sm:$0xff]
      %v2865 = vld [vmem:[%s12 + $0x40] sm:$0xff]
      %v2866 = vld [vmem:[%s12 + $0x48] sm:$0xff]
      %v2867 = vld [vmem:[%s12 + $0x50] sm:$0xff]
      %v2868 = vld [vmem:[%s12 + $0x58] sm:$0xff]
      %v2869 = vld [vmem:[%s12 + $0x60] sm:$0xff]
      %v2870 = vld [vmem:[%s12 + $0x68] sm:$0xff]
      %v2871 = vld [vmem:[%s12 + $0x70] sm:$0xff]
      %v2872 = vld [vmem:[%s12 + $0x78] sm:$0xff]
      %v2873 = vld [vmem:[%s12 + $0x80] sm:$0xff]
      %v2874 = vld [vmem:[%s12 + $0x88] sm:$0xff]
      %v2875 = vld [vmem:[%s12 + $0x90] sm:$0xff]
      %v2876 = vld [vmem:[%s12 + $0x98] sm:$0xff]
      %v2877 = vld [vmem:[%s12 + $0xa0] sm:$0xff]
      %v2878 = vld [vmem:[%s12 + $0xa8] sm:$0xff]
      %v2879 = vld [vmem:[%s12 + $0xb0] sm:$0xff]
      %v2880 = vld [vmem:[%s12 + $0xb8] sm:$0xff]
      %v2881 = vld [vmem:[%s12 + $0xc0] sm:$0xff]
      %v2882 = vld [vmem:[%s12 + $0xc8] sm:$0xff]
      %v2883 = vld [vmem:[%s12 + $0xd0] sm:$0xff]
      %v2884 = vld [vmem:[%s12 + $0xd8] sm:$0xff]
      %v2885 = vld [vmem:[%s12 + $0xe0] sm:$0xff]
      %v2886 = vld [vmem:[%s12 + $0xe8] sm:$0xff]
      %v2887 = vld [vmem:[%s12 + $0xf0] sm:$0xff]
      %v2888 = vld [vmem:[%s12 + $0xf8] sm:$0xff]
      %v2889 = vld [vmem:[%s13] sm:$0x1]
      %v2890 = vperm.slane %v2889, 0
      %2891 = vmatpush.msra.mxu0 %v2872
      %2892 = vmatpush.msra.mxu0 %v2871
      %2893 = vmatpush.msra.mxu0 %v2870
      %2894 = vmatpush.msra.mxu0 %v2869
      %2895 = vmatpush.msra.mxu0 %v2868
      %2896 = vmatpush.msra.mxu0 %v2867
      %2897 = vmatpush.msra.mxu0 %v2866
      %2898 = vmatpush.msra.mxu0 %v2865
      %2899 = vmatpush.msra.mxu0 %v2864
      %2900 = vmatpush.msra.mxu0 %v2863
      %2901 = vmatpush.msra.mxu0 %v2862
      %2902 = vmatpush.msra.mxu0 %v2861
      %2903 = vmatpush.msra.mxu0 %v2860
      %2904 = vmatpush.msra.mxu0 %v2859
      %2905 = vmatpush.msra.mxu0 %v2858
      %2906 = vmatpush.msra.mxu0 %v2857
      %2907 = vmatmul.f32.gmra.mxu0 %v2853
      %v2908 = vpop.f32.mrf.mxu0
      %v2909 = vadd.f32 %v2890, %v2908
      %2910 = vmatmul.f32.gmra.mxu0 %v2855
      %v2911 = vpop.f32.mrf.mxu0
      %v2912 = vadd.f32 %v2890, %v2911
      %2913 = vdwg.mxu0
      %2914 = vmatpush.msra.mxu0 %v2888
      %2915 = vmatpush.msra.mxu0 %v2887
      %2916 = vmatpush.msra.mxu0 %v2886
      %2917 = vmatpush.msra.mxu0 %v2885
      %2918 = vmatpush.msra.mxu0 %v2884
      %2919 = vmatpush.msra.mxu0 %v2883
      %2920 = vmatpush.msra.mxu0 %v2882
      %2921 = vmatpush.msra.mxu0 %v2881
      %2922 = vmatpush.msra.mxu0 %v2880
      %2923 = vmatpush.msra.mxu0 %v2879
      %2924 = vmatpush.msra.mxu0 %v2878
      %2925 = vmatpush.msra.mxu0 %v2877
      %2926 = vmatpush.msra.mxu0 %v2876
      %2927 = vmatpush.msra.mxu0 %v2875
      %2928 = vmatpush.msra.mxu0 %v2874
      %2929 = vmatpush.msra.mxu0 %v2873
      %2930 = vmatmul.f32.gmra.mxu0 %v2854
      %v2931 = vpop.f32.mrf.mxu0
      %v2932 = vadd.f32 %v2909, %v2931
      %2933 = vmatmul.f32.gmra.mxu0 %v2856
      %v2934 = vpop.f32.mrf.mxu0
      %v2935 = vadd.f32 %v2912, %v2934
      %2936 = vdwg.mxu0
      %v2937 = vadd.f32 %v2563, %v2932
      %v2938 = vadd.f32 %v2564, %v2935
      %v2939 = vld [vmem:[%s3 + $0x1] sm:$0x1]
      %v2940 = vld [vmem:[%s4 + $0x1] sm:$0x1]
      %2941 = vadd.xlane.f32.xlu0 %v2937
      %v2942 = vpop.xlane.xlu0 %2941
      %2943 = vadd.xlane.f32.xlu0 %v2938
      %v2944 = vpop.xlane.xlu0 %2943
      %v2945 = vmul.f32 %v2942, %v891
      %v2946 = vmul.f32 %v2944, %v891
      %v2947 = vsub.f32 %v2937, %v2945
      %v2948 = vsub.f32 %v2938, %v2946
      %v2949 = vmul.f32 %v2947, %v2947
      %v2950 = vmul.f32 %v2948, %v2948
      %2951 = vadd.xlane.f32.xlu0 %v2949
      %v2952 = vpop.xlane.xlu0 %2951
      %2953 = vadd.xlane.f32.xlu0 %v2950
      %v2954 = vpop.xlane.xlu0 %2953
      %v2955 = vmul.f32 %v2952, %v891
      %v2956 = vmul.f32 %v2954, %v891
      %v2957 = vadd.f32 %v2955, 1e-05
      %v2958 = vadd.f32 %v2956, 1e-05
      %v2959 = vrsqrt.pop %v2957
      %v2960 = vmul.f32 %v2959, %v2957
      %v2961 = vmul.f32 %v2960, %v2959
      %v2962 = vmul.f32 0.5, %v2961
      %v2963 = vsub.f32 1.5, %v2962
      %v2964 = vmul.f32 %v2959, %v2963
      %vm2965 = vweird.f32 %v2957
      %vm2966 = vweird.f32 %v2959
      %vm2967 = vmor %vm2965, %vm2966
      %v2968 = vsel %vm2967, %v2959, %v2964
      %v2969 = vrsqrt.pop %v2958
      %v2970 = vmul.f32 %v2969, %v2958
      %v2971 = vmul.f32 %v2970, %v2969
      %v2972 = vmul.f32 0.5, %v2971
      %v2973 = vsub.f32 1.5, %v2972
      %v2974 = vmul.f32 %v2969, %v2973
      %vm2975 = vweird.f32 %v2958
      %vm2976 = vweird.f32 %v2969
      %vm2977 = vmor %vm2975, %vm2976
      %v2978 = vsel %vm2977, %v2969, %v2974
      %v2979 = vmul.f32 %v2947, %v2968
      %v2980 = vmul.f32 %v2948, %v2978
      %v2981 = vperm.slane %v2939, 0
      %v2982 = vmul.f32 %v2979, %v2981
      %v2983 = vmul.f32 %v2980, %v2981
      %v2984 = vperm.slane %v2940, 0
      %v2985 = vadd.f32 %v2982, %v2984
      %v2986 = vadd.f32 %v2983, %v2984
      %s2987 = scalar_lea.vmem %s5, 384
      %v2988 = vld [vmem:[%s2987] sm:$0xff]
      %v2989 = vld [vmem:[%s2987 + $0x8] sm:$0xff]
      %v2990 = vld [vmem:[%s2987 + $0x10] sm:$0xff]
      %v2991 = vld [vmem:[%s2987 + $0x18] sm:$0xff]
      %v2992 = vld [vmem:[%s2987 + $0x20] sm:$0xff]
      %v2993 = vld [vmem:[%s2987 + $0x28] sm:$0xff]
      %v2994 = vld [vmem:[%s2987 + $0x30] sm:$0xff]
      %v2995 = vld [vmem:[%s2987 + $0x38] sm:$0xff]
      %v2996 = vld [vmem:[%s2987 + $0x40] sm:$0xff]
      %v2997 = vld [vmem:[%s2987 + $0x48] sm:$0xff]
      %v2998 = vld [vmem:[%s2987 + $0x50] sm:$0xff]
      %v2999 = vld [vmem:[%s2987 + $0x58] sm:$0xff]
      %v3000 = vld [vmem:[%s2987 + $0x60] sm:$0xff]
      %v3001 = vld [vmem:[%s2987 + $0x68] sm:$0xff]
      %v3002 = vld [vmem:[%s2987 + $0x70] sm:$0xff]
      %v3003 = vld [vmem:[%s2987 + $0x78] sm:$0xff]
      %v3004 = vld [vmem:[%s2987 + $0x80] sm:$0xff]
      %v3005 = vld [vmem:[%s2987 + $0x88] sm:$0xff]
      %v3006 = vld [vmem:[%s2987 + $0x90] sm:$0xff]
      %v3007 = vld [vmem:[%s2987 + $0x98] sm:$0xff]
      %v3008 = vld [vmem:[%s2987 + $0xa0] sm:$0xff]
      %v3009 = vld [vmem:[%s2987 + $0xa8] sm:$0xff]
      %v3010 = vld [vmem:[%s2987 + $0xb0] sm:$0xff]
      %v3011 = vld [vmem:[%s2987 + $0xb8] sm:$0xff]
      %v3012 = vld [vmem:[%s2987 + $0xc0] sm:$0xff]
      %v3013 = vld [vmem:[%s2987 + $0xc8] sm:$0xff]
      %v3014 = vld [vmem:[%s2987 + $0xd0] sm:$0xff]
      %v3015 = vld [vmem:[%s2987 + $0xd8] sm:$0xff]
      %v3016 = vld [vmem:[%s2987 + $0xe0] sm:$0xff]
      %v3017 = vld [vmem:[%s2987 + $0xe8] sm:$0xff]
      %v3018 = vld [vmem:[%s2987 + $0xf0] sm:$0xff]
      %v3019 = vld [vmem:[%s2987 + $0xf8] sm:$0xff]
      %v3020 = vld [vmem:[%s2987 + $0x100] sm:$0xff]
      %v3021 = vld [vmem:[%s2987 + $0x108] sm:$0xff]
      %v3022 = vld [vmem:[%s2987 + $0x110] sm:$0xff]
      %v3023 = vld [vmem:[%s2987 + $0x118] sm:$0xff]
      %v3024 = vld [vmem:[%s2987 + $0x120] sm:$0xff]
      %v3025 = vld [vmem:[%s2987 + $0x128] sm:$0xff]
      %v3026 = vld [vmem:[%s2987 + $0x130] sm:$0xff]
      %v3027 = vld [vmem:[%s2987 + $0x138] sm:$0xff]
      %v3028 = vld [vmem:[%s2987 + $0x140] sm:$0xff]
      %v3029 = vld [vmem:[%s2987 + $0x148] sm:$0xff]
      %v3030 = vld [vmem:[%s2987 + $0x150] sm:$0xff]
      %v3031 = vld [vmem:[%s2987 + $0x158] sm:$0xff]
      %v3032 = vld [vmem:[%s2987 + $0x160] sm:$0xff]
      %v3033 = vld [vmem:[%s2987 + $0x168] sm:$0xff]
      %v3034 = vld [vmem:[%s2987 + $0x170] sm:$0xff]
      %v3035 = vld [vmem:[%s2987 + $0x178] sm:$0xff]
      %3036 = vmatpush.msra.mxu0 %v3033
      %3037 = vmatpush.msra.mxu0 %v3030
      %3038 = vmatpush.msra.mxu0 %v3027
      %3039 = vmatpush.msra.mxu0 %v3024
      %3040 = vmatpush.msra.mxu0 %v3021
      %3041 = vmatpush.msra.mxu0 %v3018
      %3042 = vmatpush.msra.mxu0 %v3015
      %3043 = vmatpush.msra.mxu0 %v3012
      %3044 = vmatpush.msra.mxu0 %v3009
      %3045 = vmatpush.msra.mxu0 %v3006
      %3046 = vmatpush.msra.mxu0 %v3003
      %3047 = vmatpush.msra.mxu0 %v3000
      %3048 = vmatpush.msra.mxu0 %v2997
      %3049 = vmatpush.msra.mxu0 %v2994
      %3050 = vmatpush.msra.mxu0 %v2991
      %3051 = vmatpush.msra.mxu0 %v2988
      %3052 = vmatmul.f32.gmra.mxu0 %v2985
      %v3053 = vpop.f32.mrf.mxu0
      %v3054 = vadd.f32 0.0, %v3053
      %3055 = vmatmul.f32.gmra.mxu0 %v2986
      %v3056 = vpop.f32.mrf.mxu0
      %v3057 = vadd.f32 0.0, %v3056
      %3058 = vdwg.mxu0
      %3059 = vmatpush.msra.mxu0 %v3034
      %3060 = vmatpush.msra.mxu0 %v3031
      %3061 = vmatpush.msra.mxu0 %v3028
      %3062 = vmatpush.msra.mxu0 %v3025
      %3063 = vmatpush.msra.mxu0 %v3022
      %3064 = vmatpush.msra.mxu0 %v3019
      %3065 = vmatpush.msra.mxu0 %v3016
      %3066 = vmatpush.msra.mxu0 %v3013
      %3067 = vmatpush.msra.mxu0 %v3010
      %3068 = vmatpush.msra.mxu0 %v3007
      %3069 = vmatpush.msra.mxu0 %v3004
      %3070 = vmatpush.msra.mxu0 %v3001
      %3071 = vmatpush.msra.mxu0 %v2998
      %3072 = vmatpush.msra.mxu0 %v2995
      %3073 = vmatpush.msra.mxu0 %v2992
      %3074 = vmatpush.msra.mxu0 %v2989
      %3075 = vmatmul.f32.gmra.mxu0 %v2985
      %v3076 = vpop.f32.mrf.mxu0
      %v3077 = vadd.f32 0.0, %v3076
      %3078 = vmatmul.f32.gmra.mxu0 %v2986
      %v3079 = vpop.f32.mrf.mxu0
      %v3080 = vadd.f32 0.0, %v3079
      %3081 = vdwg.mxu0
      %3082 = vmatpush.msra.mxu0 %v3035
      %3083 = vmatpush.msra.mxu0 %v3032
      %3084 = vmatpush.msra.mxu0 %v3029
      %3085 = vmatpush.msra.mxu0 %v3026
      %3086 = vmatpush.msra.mxu0 %v3023
      %3087 = vmatpush.msra.mxu0 %v3020
      %3088 = vmatpush.msra.mxu0 %v3017
      %3089 = vmatpush.msra.mxu0 %v3014
      %3090 = vmatpush.msra.mxu0 %v3011
      %3091 = vmatpush.msra.mxu0 %v3008
      %3092 = vmatpush.msra.mxu0 %v3005
      %3093 = vmatpush.msra.mxu0 %v3002
      %3094 = vmatpush.msra.mxu0 %v2999
      %3095 = vmatpush.msra.mxu0 %v2996
      %3096 = vmatpush.msra.mxu0 %v2993
      %3097 = vmatpush.msra.mxu0 %v2990
      %3098 = vmatmul.f32.gmra.mxu0 %v2985
      %v3099 = vpop.f32.mrf.mxu0
      %v3100 = vadd.f32 0.0, %v3099
      %3101 = vmatmul.f32.gmra.mxu0 %v2986
      %v3102 = vpop.f32.mrf.mxu0
      %v3103 = vadd.f32 0.0, %v3102
      %3104 = vdwg.mxu0
      %3106 = vrot.lane.b32.xlu0 %v3054, 96
      %v3107 = vpop.permute.xlu0 %3106
      %3109 = vrot.lane.b32.xlu0 %v3054, 64
      %v3110 = vpop.permute.xlu0 %3109
      %3112 = vrot.lane.b32.xlu0 %v3054, 32
      %v3113 = vpop.permute.xlu0 %3112
      %v3115 = vrot.slane %v3110, 4
      %v3116 = vsel %vm1062, %v3115, %v3054
      %v3117 = vrot.slane %v3054, 4
      %v3118 = vsel %vm1062, %v3110, %v3117
      %v3120 = vunpack.c.l.s4 1983009808
      %v3121 = vunpack.c.0.s8 %v3120
      %v3122 = vperm.slane %v3116, %v3121
      %v3124 = vunpack.c.l.s4 1983009808
      %v3125 = vunpack.c.0.s8 %v3124
      %v3126 = vperm.slane %v3118, %v3125
      %v3127 = vrot.slane %v3113, 4
      %v3128 = vsel %vm1062, %v3127, %v3107
      %v3129 = vrot.slane %v3107, 4
      %v3130 = vsel %vm1062, %v3113, %v3129
      %v3132 = vunpack.c.l.s4 1983009808
      %v3133 = vunpack.c.0.s8 %v3132
      %v3134 = vperm.slane %v3128, %v3133
      %v3136 = vunpack.c.l.s4 1983009808
      %v3137 = vunpack.c.0.s8 %v3136
      %v3138 = vperm.slane %v3130, %v3137
      %v3139 = vrot.slane %v3134, 4
      %v3140 = vsel %vm1062, %v3139, %v3122
      %v3141 = vrot.slane %v3122, 4
      %v3142 = vsel %vm1062, %v3134, %v3141
      %v3144 = vunpack.c.l.s4 1934713408
      %v3145 = vunpack.c.0.s8 %v3144
      %v3146 = vperm.slane %v3140, %v3145
      %v3148 = vunpack.c.l.s4 1934713408
      %v3149 = vunpack.c.0.s8 %v3148
      %v3150 = vperm.slane %v3142, %v3149
      %v3151 = vrot.slane %v3138, 4
      %v3152 = vsel %vm1062, %v3151, %v3126
      %v3153 = vrot.slane %v3126, 4
      %v3154 = vsel %vm1062, %v3138, %v3153
      %v3156 = vunpack.c.l.s4 1934713408
      %v3157 = vunpack.c.0.s8 %v3156
      %v3158 = vperm.slane %v3152, %v3157
      %v3160 = vunpack.c.l.s4 1934713408
      %v3161 = vunpack.c.0.s8 %v3160
      %v3162 = vperm.slane %v3154, %v3161
      %v3163 = vrot.slane %v3146, 4
      %v3164 = vsel %vm1062, 0.0, %v3163
      %v3165 = vrot.slane %v3150, 4
      %v3166 = vsel %vm1062, 0.0, %v3165
      %v3167 = vrot.slane %v3158, 4
      %v3168 = vsel %vm1062, 0.0, %v3167
      %v3169 = vrot.slane %v3162, 4
      %v3170 = vsel %vm1062, 0.0, %v3169
      %3172 = vrot.lane.b32.xlu0 %v3077, 96
      %v3173 = vpop.permute.xlu0 %3172
      %3175 = vrot.lane.b32.xlu0 %v3077, 64
      %v3176 = vpop.permute.xlu0 %3175
      %3178 = vrot.lane.b32.xlu0 %v3077, 32
      %v3179 = vpop.permute.xlu0 %3178
      %v3181 = vrot.slane %v3176, 4
      %v3182 = vsel %vm1062, %v3181, %v3077
      %v3183 = vrot.slane %v3077, 4
      %v3184 = vsel %vm1062, %v3176, %v3183
      %v3186 = vunpack.c.l.s4 1983009808
      %v3187 = vunpack.c.0.s8 %v3186
      %v3188 = vperm.slane %v3182, %v3187
      %v3190 = vunpack.c.l.s4 1983009808
      %v3191 = vunpack.c.0.s8 %v3190
      %v3192 = vperm.slane %v3184, %v3191
      %v3193 = vrot.slane %v3179, 4
      %v3194 = vsel %vm1062, %v3193, %v3173
      %v3195 = vrot.slane %v3173, 4
      %v3196 = vsel %vm1062, %v3179, %v3195
      %v3198 = vunpack.c.l.s4 1983009808
      %v3199 = vunpack.c.0.s8 %v3198
      %v3200 = vperm.slane %v3194, %v3199
      %v3202 = vunpack.c.l.s4 1983009808
      %v3203 = vunpack.c.0.s8 %v3202
      %v3204 = vperm.slane %v3196, %v3203
      %v3205 = vrot.slane %v3200, 4
      %v3206 = vsel %vm1062, %v3205, %v3188
      %v3207 = vrot.slane %v3188, 4
      %v3208 = vsel %vm1062, %v3200, %v3207
      %v3210 = vunpack.c.l.s4 1934713408
      %v3211 = vunpack.c.0.s8 %v3210
      %v3212 = vperm.slane %v3206, %v3211
      %v3214 = vunpack.c.l.s4 1934713408
      %v3215 = vunpack.c.0.s8 %v3214
      %v3216 = vperm.slane %v3208, %v3215
      %v3217 = vrot.slane %v3204, 4
      %v3218 = vsel %vm1062, %v3217, %v3192
      %v3219 = vrot.slane %v3192, 4
      %v3220 = vsel %vm1062, %v3204, %v3219
      %v3222 = vunpack.c.l.s4 1934713408
      %v3223 = vunpack.c.0.s8 %v3222
      %v3224 = vperm.slane %v3218, %v3223
      %v3226 = vunpack.c.l.s4 1934713408
      %v3227 = vunpack.c.0.s8 %v3226
      %v3228 = vperm.slane %v3220, %v3227
      %v3229 = vrot.slane %v3212, 4
      %v3230 = vsel %vm1062, 0.0, %v3229
      %v3231 = vrot.slane %v3216, 4
      %v3232 = vsel %vm1062, 0.0, %v3231
      %v3233 = vrot.slane %v3224, 4
      %v3234 = vsel %vm1062, 0.0, %v3233
      %v3235 = vrot.slane %v3228, 4
      %v3236 = vsel %vm1062, 0.0, %v3235
      %3238 = vrot.lane.b32.xlu0 %v3100, 96
      %v3239 = vpop.permute.xlu0 %3238
      %3241 = vrot.lane.b32.xlu0 %v3100, 64
      %v3242 = vpop.permute.xlu0 %3241
      %3244 = vrot.lane.b32.xlu0 %v3100, 32
      %v3245 = vpop.permute.xlu0 %3244
      %v3247 = vrot.slane %v3242, 4
      %v3248 = vsel %vm1062, %v3247, %v3100
      %v3249 = vrot.slane %v3100, 4
      %v3250 = vsel %vm1062, %v3242, %v3249
      %v3252 = vunpack.c.l.s4 1983009808
      %v3253 = vunpack.c.0.s8 %v3252
      %v3254 = vperm.slane %v3248, %v3253
      %v3256 = vunpack.c.l.s4 1983009808
      %v3257 = vunpack.c.0.s8 %v3256
      %v3258 = vperm.slane %v3250, %v3257
      %v3259 = vrot.slane %v3245, 4
      %v3260 = vsel %vm1062, %v3259, %v3239
      %v3261 = vrot.slane %v3239, 4
      %v3262 = vsel %vm1062, %v3245, %v3261
      %v3264 = vunpack.c.l.s4 1983009808
      %v3265 = vunpack.c.0.s8 %v3264
      %v3266 = vperm.slane %v3260, %v3265
      %v3268 = vunpack.c.l.s4 1983009808
      %v3269 = vunpack.c.0.s8 %v3268
      %v3270 = vperm.slane %v3262, %v3269
      %v3271 = vrot.slane %v3266, 4
      %v3272 = vsel %vm1062, %v3271, %v3254
      %v3273 = vrot.slane %v3254, 4
      %v3274 = vsel %vm1062, %v3266, %v3273
      %v3276 = vunpack.c.l.s4 1934713408
      %v3277 = vunpack.c.0.s8 %v3276
      %v3278 = vperm.slane %v3272, %v3277
      %v3280 = vunpack.c.l.s4 1934713408
      %v3281 = vunpack.c.0.s8 %v3280
      %v3282 = vperm.slane %v3274, %v3281
      %v3283 = vrot.slane %v3270, 4
      %v3284 = vsel %vm1062, %v3283, %v3258
      %v3285 = vrot.slane %v3258, 4
      %v3286 = vsel %vm1062, %v3270, %v3285
      %v3288 = vunpack.c.l.s4 1934713408
      %v3289 = vunpack.c.0.s8 %v3288
      %v3290 = vperm.slane %v3284, %v3289
      %v3292 = vunpack.c.l.s4 1934713408
      %v3293 = vunpack.c.0.s8 %v3292
      %v3294 = vperm.slane %v3286, %v3293
      %v3295 = vrot.slane %v3278, 4
      %v3296 = vsel %vm1062, 0.0, %v3295
      %v3297 = vrot.slane %v3282, 4
      %v3298 = vsel %vm1062, 0.0, %v3297
      %v3299 = vrot.slane %v3290, 4
      %v3300 = vsel %vm1062, 0.0, %v3299
      %v3301 = vrot.slane %v3294, 4
      %v3302 = vsel %vm1062, 0.0, %v3301
      %v3303 = vsel %vm1062, %v3165, %v3146
      %v3305 = vunpack.c.l.s4 1983009808
      %v3306 = vunpack.c.0.s8 %v3305
      %v3307 = vperm.slane %v3303, %v3306
      %v3308 = vrot.slane %v3166, 4
      %v3309 = vsel %vm1062, %v3308, %v3164
      %v3311 = vunpack.c.l.s4 1983009808
      %v3312 = vunpack.c.0.s8 %v3311
      %v3313 = vperm.slane %v3309, %v3312
      %v3314 = vsel %vm1062, %v3169, %v3158
      %v3316 = vunpack.c.l.s4 1983009808
      %v3317 = vunpack.c.0.s8 %v3316
      %v3318 = vperm.slane %v3314, %v3317
      %v3319 = vrot.slane %v3170, 4
      %v3320 = vsel %vm1062, %v3319, %v3168
      %v3322 = vunpack.c.l.s4 1983009808
      %v3323 = vunpack.c.0.s8 %v3322
      %v3324 = vperm.slane %v3320, %v3323
      %v3325 = vrot.slane %v3313, 4
      %v3326 = vsel %vm1062, %v3325, %v3307
      %v3327 = vrot.slane %v3307, 4
      %v3328 = vsel %vm1062, %v3313, %v3327
      %v3330 = vunpack.c.l.s4 1934713408
      %v3331 = vunpack.c.0.s8 %v3330
      %v3332 = vperm.slane %v3326, %v3331
      %v3334 = vunpack.c.l.s4 1934713408
      %v3335 = vunpack.c.0.s8 %v3334
      %v3336 = vperm.slane %v3328, %v3335
      %v3337 = vrot.slane %v3324, 4
      %v3338 = vsel %vm1062, %v3337, %v3318
      %v3339 = vrot.slane %v3318, 4
      %v3340 = vsel %vm1062, %v3324, %v3339
      %v3342 = vunpack.c.l.s4 1934713408
      %v3343 = vunpack.c.0.s8 %v3342
      %v3344 = vperm.slane %v3338, %v3343
      %v3346 = vunpack.c.l.s4 1934713408
      %v3347 = vunpack.c.0.s8 %v3346
      %v3348 = vperm.slane %v3340, %v3347
      %v3349 = vrot.slane %v3344, 4
      %v3350 = vsel %vm1062, %v3349, %v3332
      %v3351 = vrot.slane %v3332, 4
      %v3352 = vsel %vm1062, %v3344, %v3351
      %v3353 = vrot.slane %v3348, 4
      %v3354 = vsel %vm1062, %v3353, %v3336
      %v3355 = vrot.slane %v3336, 4
      %v3356 = vsel %vm1062, %v3348, %v3355
      %v3357 = vsel %vm1062, %v3231, %v3212
      %v3359 = vunpack.c.l.s4 1983009808
      %v3360 = vunpack.c.0.s8 %v3359
      %v3361 = vperm.slane %v3357, %v3360
      %v3362 = vrot.slane %v3232, 4
      %v3363 = vsel %vm1062, %v3362, %v3230
      %v3365 = vunpack.c.l.s4 1983009808
      %v3366 = vunpack.c.0.s8 %v3365
      %v3367 = vperm.slane %v3363, %v3366
      %v3368 = vsel %vm1062, %v3235, %v3224
      %v3370 = vunpack.c.l.s4 1983009808
      %v3371 = vunpack.c.0.s8 %v3370
      %v3372 = vperm.slane %v3368, %v3371
      %v3373 = vrot.slane %v3236, 4
      %v3374 = vsel %vm1062, %v3373, %v3234
      %v3376 = vunpack.c.l.s4 1983009808
      %v3377 = vunpack.c.0.s8 %v3376
      %v3378 = vperm.slane %v3374, %v3377
      %v3379 = vrot.slane %v3367, 4
      %v3380 = vsel %vm1062, %v3379, %v3361
      %v3381 = vrot.slane %v3361, 4
      %v3382 = vsel %vm1062, %v3367, %v3381
      %v3384 = vunpack.c.l.s4 1934713408
      %v3385 = vunpack.c.0.s8 %v3384
      %v3386 = vperm.slane %v3380, %v3385
      %v3388 = vunpack.c.l.s4 1934713408
      %v3389 = vunpack.c.0.s8 %v3388
      %v3390 = vperm.slane %v3382, %v3389
      %v3391 = vrot.slane %v3378, 4
      %v3392 = vsel %vm1062, %v3391, %v3372
      %v3393 = vrot.slane %v3372, 4
      %v3394 = vsel %vm1062, %v3378, %v3393
      %v3396 = vunpack.c.l.s4 1934713408
      %v3397 = vunpack.c.0.s8 %v3396
      %v3398 = vperm.slane %v3392, %v3397
      %v3400 = vunpack.c.l.s4 1934713408
      %v3401 = vunpack.c.0.s8 %v3400
      %v3402 = vperm.slane %v3394, %v3401
      %v3403 = vrot.slane %v3398, 4
      %v3404 = vsel %vm1062, %v3403, %v3386
      %v3405 = vrot.slane %v3386, 4
      %v3406 = vsel %vm1062, %v3398, %v3405
      %v3407 = vrot.slane %v3402, 4
      %v3408 = vsel %vm1062, %v3407, %v3390
      %v3409 = vrot.slane %v3390, 4
      %v3410 = vsel %vm1062, %v3402, %v3409
      %v3411 = vsel %vm1062, %v3297, %v3278
      %v3413 = vunpack.c.l.s4 1983009808
      %v3414 = vunpack.c.0.s8 %v3413
      %v3415 = vperm.slane %v3411, %v3414
      %v3416 = vrot.slane %v3298, 4
      %v3417 = vsel %vm1062, %v3416, %v3296
      %v3419 = vunpack.c.l.s4 1983009808
      %v3420 = vunpack.c.0.s8 %v3419
      %v3421 = vperm.slane %v3417, %v3420
      %v3422 = vsel %vm1062, %v3301, %v3290
      %v3424 = vunpack.c.l.s4 1983009808
      %v3425 = vunpack.c.0.s8 %v3424
      %v3426 = vperm.slane %v3422, %v3425
      %v3427 = vrot.slane %v3302, 4
      %v3428 = vsel %vm1062, %v3427, %v3300
      %v3430 = vunpack.c.l.s4 1983009808
      %v3431 = vunpack.c.0.s8 %v3430
      %v3432 = vperm.slane %v3428, %v3431
      %v3433 = vrot.slane %v3421, 4
      %v3434 = vsel %vm1062, %v3433, %v3415
      %v3435 = vrot.slane %v3415, 4
      %v3436 = vsel %vm1062, %v3421, %v3435
      %v3438 = vunpack.c.l.s4 1934713408
      %v3439 = vunpack.c.0.s8 %v3438
      %v3440 = vperm.slane %v3434, %v3439
      %v3442 = vunpack.c.l.s4 1934713408
      %v3443 = vunpack.c.0.s8 %v3442
      %v3444 = vperm.slane %v3436, %v3443
      %v3445 = vrot.slane %v3432, 4
      %v3446 = vsel %vm1062, %v3445, %v3426
      %v3447 = vrot.slane %v3426, 4
      %v3448 = vsel %vm1062, %v3432, %v3447
      %v3450 = vunpack.c.l.s4 1934713408
      %v3451 = vunpack.c.0.s8 %v3450
      %v3452 = vperm.slane %v3446, %v3451
      %v3454 = vunpack.c.l.s4 1934713408
      %v3455 = vunpack.c.0.s8 %v3454
      %v3456 = vperm.slane %v3448, %v3455
      %v3457 = vrot.slane %v3452, 4
      %v3458 = vsel %vm1062, %v3457, %v3440
      %v3459 = vrot.slane %v3440, 4
      %v3460 = vsel %vm1062, %v3452, %v3459
      %v3461 = vrot.slane %v3456, 4
      %v3462 = vsel %vm1062, %v3461, %v3444
      %v3463 = vrot.slane %v3444, 4
      %v3464 = vsel %vm1062, %v3456, %v3463
      %v3466 = vsel %vm1412, %v3350, 0
      %v3469 = vsel %vm1412, %v3404, 0
      %3471 = vmatpush.xpose.msra.mxu0 0.0
      %3472 = vmatpush.xpose.msra.mxu0 0.0
      %3473 = vmatpush.xpose.msra.mxu0 0.0
      %3474 = vmatpush.xpose.msra.mxu0 0.0
      %3475 = vmatpush.xpose.msra.mxu0 0.0
      %3476 = vmatpush.xpose.msra.mxu0 0.0
      %3477 = vmatpush.xpose.msra.mxu0 0.0
      %3478 = vmatpush.xpose.msra.mxu0 0.0
      %3479 = vmatpush.xpose.msra.mxu0 0.0
      %3480 = vmatpush.xpose.msra.mxu0 0.0
      %3481 = vmatpush.xpose.msra.mxu0 0.0
      %3482 = vmatpush.xpose.msra.mxu0 0.0
      %3483 = vmatpush.xpose.msra.mxu0 0.0
      %3484 = vmatpush.xpose.msra.mxu0 0.0
      %3485 = vmatpush.xpose.msra.mxu0 0.0
      %3486 = vmatpush.xpose.msra.mxu0 %v3469
      %3487 = vmatmul.f32.gmra.mxu0 %v3466
      %v3488 = vpop.f32.mrf.mxu0
      %v3489 = vadd.f32 0.0, %v3488
      %3490 = vdwg.mxu0
      %v3492 = vsel %vm1412, %v3352, 0
      %v3495 = vsel %vm1412, %v3406, 0
      %3497 = vmatpush.xpose.msra.mxu0 0.0
      %3498 = vmatpush.xpose.msra.mxu0 0.0
      %3499 = vmatpush.xpose.msra.mxu0 0.0
      %3500 = vmatpush.xpose.msra.mxu0 0.0
      %3501 = vmatpush.xpose.msra.mxu0 0.0
      %3502 = vmatpush.xpose.msra.mxu0 0.0
      %3503 = vmatpush.xpose.msra.mxu0 0.0
      %3504 = vmatpush.xpose.msra.mxu0 0.0
      %3505 = vmatpush.xpose.msra.mxu0 0.0
      %3506 = vmatpush.xpose.msra.mxu0 0.0
      %3507 = vmatpush.xpose.msra.mxu0 0.0
      %3508 = vmatpush.xpose.msra.mxu0 0.0
      %3509 = vmatpush.xpose.msra.mxu0 0.0
      %3510 = vmatpush.xpose.msra.mxu0 0.0
      %3511 = vmatpush.xpose.msra.mxu0 0.0
      %3512 = vmatpush.xpose.msra.mxu0 %v3495
      %3513 = vmatmul.f32.gmra.mxu0 %v3492
      %v3514 = vpop.f32.mrf.mxu0
      %v3515 = vadd.f32 0.0, %v3514
      %3516 = vdwg.mxu0
      %v3518 = vsel %vm1412, %v3354, 0
      %v3521 = vsel %vm1412, %v3408, 0
      %3523 = vmatpush.xpose.msra.mxu0 0.0
      %3524 = vmatpush.xpose.msra.mxu0 0.0
      %3525 = vmatpush.xpose.msra.mxu0 0.0
      %3526 = vmatpush.xpose.msra.mxu0 0.0
      %3527 = vmatpush.xpose.msra.mxu0 0.0
      %3528 = vmatpush.xpose.msra.mxu0 0.0
      %3529 = vmatpush.xpose.msra.mxu0 0.0
      %3530 = vmatpush.xpose.msra.mxu0 0.0
      %3531 = vmatpush.xpose.msra.mxu0 0.0
      %3532 = vmatpush.xpose.msra.mxu0 0.0
      %3533 = vmatpush.xpose.msra.mxu0 0.0
      %3534 = vmatpush.xpose.msra.mxu0 0.0
      %3535 = vmatpush.xpose.msra.mxu0 0.0
      %3536 = vmatpush.xpose.msra.mxu0 0.0
      %3537 = vmatpush.xpose.msra.mxu0 0.0
      %3538 = vmatpush.xpose.msra.mxu0 %v3521
      %3539 = vmatmul.f32.gmra.mxu0 %v3518
      %v3540 = vpop.f32.mrf.mxu0
      %v3541 = vadd.f32 0.0, %v3540
      %3542 = vdwg.mxu0
      %v3544 = vsel %vm1412, %v3356, 0
      %v3547 = vsel %vm1412, %v3410, 0
      %3549 = vmatpush.xpose.msra.mxu0 0.0
      %3550 = vmatpush.xpose.msra.mxu0 0.0
      %3551 = vmatpush.xpose.msra.mxu0 0.0
      %3552 = vmatpush.xpose.msra.mxu0 0.0
      %3553 = vmatpush.xpose.msra.mxu0 0.0
      %3554 = vmatpush.xpose.msra.mxu0 0.0
      %3555 = vmatpush.xpose.msra.mxu0 0.0
      %3556 = vmatpush.xpose.msra.mxu0 0.0
      %3557 = vmatpush.xpose.msra.mxu0 0.0
      %3558 = vmatpush.xpose.msra.mxu0 0.0
      %3559 = vmatpush.xpose.msra.mxu0 0.0
      %3560 = vmatpush.xpose.msra.mxu0 0.0
      %3561 = vmatpush.xpose.msra.mxu0 0.0
      %3562 = vmatpush.xpose.msra.mxu0 0.0
      %3563 = vmatpush.xpose.msra.mxu0 0.0
      %3564 = vmatpush.xpose.msra.mxu0 %v3547
      %3565 = vmatmul.f32.gmra.mxu0 %v3544
      %v3566 = vpop.f32.mrf.mxu0
      %v3567 = vadd.f32 0.0, %v3566
      %3568 = vdwg.mxu0
      %v3569 = vmul.f32 %v3489, 0.17677669
      %v3570 = vmul.f32 %v3515, 0.17677669
      %v3571 = vmul.f32 %v3541, 0.17677669
      %v3572 = vmul.f32 %v3567, 0.17677669
      %v3573 = vadd.f32 %v3569, %v878
      %v3574 = vadd.f32 %v3570, %v878
      %v3575 = vadd.f32 %v3571, %v878
      %v3576 = vadd.f32 %v3572, %v878
      %v3577 = vsel %vm1525, %v3573, -inf
      %3578 = vmax.xlane.f32.xlu0 %v3577
      %v3579 = vpop.xlane.xlu0 %3578
      %v3580 = vsel %vm1525, %v3574, -inf
      %3581 = vmax.xlane.f32.xlu0 %v3580
      %v3582 = vpop.xlane.xlu0 %3581
      %v3583 = vsel %vm1525, %v3575, -inf
      %3584 = vmax.xlane.f32.xlu0 %v3583
      %v3585 = vpop.xlane.xlu0 %3584
      %v3586 = vsel %vm1525, %v3576, -inf
      %3587 = vmax.xlane.f32.xlu0 %v3586
      %v3588 = vpop.xlane.xlu0 %3587
      %v3589 = vsub.f32 %v3573, %v3579
      %v3590 = vsub.f32 %v3574, %v3582
      %v3591 = vsub.f32 %v3575, %v3585
      %v3592 = vsub.f32 %v3576, %v3588
      %v3593 = vmul.f32 %v3589, 1.442695
      %v3594 = vpow.pop %v3593
      %v3595 = vmul.f32 %v3590, 1.442695
      %v3596 = vpow.pop %v3595
      %v3597 = vmul.f32 %v3591, 1.442695
      %v3598 = vpow.pop %v3597
      %v3599 = vmul.f32 %v3592, 1.442695
      %v3600 = vpow.pop %v3599
      %v3601 = vsel %vm1525, %v3594, 0.0
      %3602 = vadd.xlane.f32.xlu0 %v3601
      %v3603 = vpop.xlane.xlu0 %3602
      %v3604 = vsel %vm1525, %v3596, 0.0
      %3605 = vadd.xlane.f32.xlu0 %v3604
      %v3606 = vpop.xlane.xlu0 %3605
      %v3607 = vsel %vm1525, %v3598, 0.0
      %3608 = vadd.xlane.f32.xlu0 %v3607
      %v3609 = vpop.xlane.xlu0 %3608
      %v3610 = vsel %vm1525, %v3600, 0.0
      %3611 = vadd.xlane.f32.xlu0 %v3610
      %v3612 = vpop.xlane.xlu0 %3611
      %v3613 = vrcp.pop %v3603
      %v3614 = vrcp.pop %v3606
      %v3615 = vrcp.pop %v3609
      %v3616 = vrcp.pop %v3612
      %v3617 = vmul.f32 %v3594, %v3613
      %v3618 = vmul.f32 %v3596, %v3614
      %v3619 = vmul.f32 %v3598, %v3615
      %v3620 = vmul.f32 %v3600, %v3616
      %v3622 = vsel %vm1525, %v3617, 0
      %3624 = vmatpush.msra.mxu0 0.0
      %3625 = vmatpush.msra.mxu0 0.0
      %3626 = vmatpush.msra.mxu0 0.0
      %3627 = vmatpush.msra.mxu0 0.0
      %3628 = vmatpush.msra.mxu0 0.0
      %3629 = vmatpush.msra.mxu0 0.0
      %3630 = vmatpush.msra.mxu0 0.0
      %3631 = vmatpush.msra.mxu0 0.0
      %3632 = vmatpush.msra.mxu0 0.0
      %3633 = vmatpush.msra.mxu0 0.0
      %3634 = vmatpush.msra.mxu0 0.0
      %3635 = vmatpush.msra.mxu0 0.0
      %3636 = vmatpush.msra.mxu0 0.0
      %3637 = vmatpush.msra.mxu0 0.0
      %3638 = vmatpush.msra.mxu0 0.0
      %3639 = vmatpush.msra.mxu0 %v3458
      %3640 = vmatmul.f32.gmra.mxu0 %v3622
      %v3641 = vpop.f32.mrf.mxu0
      %v3642 = vadd.f32 0.0, %v3641
      %3643 = vdwg.mxu0
      %v3645 = vsel %vm1525, %v3618, 0
      %3647 = vmatpush.msra.mxu0 0.0
      %3648 = vmatpush.msra.mxu0 0.0
      %3649 = vmatpush.msra.mxu0 0.0
      %3650 = vmatpush.msra.mxu0 0.0
      %3651 = vmatpush.msra.mxu0 0.0
      %3652 = vmatpush.msra.mxu0 0.0
      %3653 = vmatpush.msra.mxu0 0.0
      %3654 = vmatpush.msra.mxu0 0.0
      %3655 = vmatpush.msra.mxu0 0.0
      %3656 = vmatpush.msra.mxu0 0.0
      %3657 = vmatpush.msra.mxu0 0.0
      %3658 = vmatpush.msra.mxu0 0.0
      %3659 = vmatpush.msra.mxu0 0.0
      %3660 = vmatpush.msra.mxu0 0.0
      %3661 = vmatpush.msra.mxu0 0.0
      %3662 = vmatpush.msra.mxu0 %v3460
      %3663 = vmatmul.f32.gmra.mxu0 %v3645
      %v3664 = vpop.f32.mrf.mxu0
      %v3665 = vadd.f32 0.0, %v3664
      %3666 = vdwg.mxu0
      %v3668 = vsel %vm1525, %v3619, 0
      %3670 = vmatpush.msra.mxu0 0.0
      %3671 = vmatpush.msra.mxu0 0.0
      %3672 = vmatpush.msra.mxu0 0.0
      %3673 = vmatpush.msra.mxu0 0.0
      %3674 = vmatpush.msra.mxu0 0.0
      %3675 = vmatpush.msra.mxu0 0.0
      %3676 = vmatpush.msra.mxu0 0.0
      %3677 = vmatpush.msra.mxu0 0.0
      %3678 = vmatpush.msra.mxu0 0.0
      %3679 = vmatpush.msra.mxu0 0.0
      %3680 = vmatpush.msra.mxu0 0.0
      %3681 = vmatpush.msra.mxu0 0.0
      %3682 = vmatpush.msra.mxu0 0.0
      %3683 = vmatpush.msra.mxu0 0.0
      %3684 = vmatpush.msra.mxu0 0.0
      %3685 = vmatpush.msra.mxu0 %v3462
      %3686 = vmatmul.f32.gmra.mxu0 %v3668
      %v3687 = vpop.f32.mrf.mxu0
      %v3688 = vadd.f32 0.0, %v3687
      %3689 = vdwg.mxu0
      %v3691 = vsel %vm1525, %v3620, 0
      %3693 = vmatpush.msra.mxu0 0.0
      %3694 = vmatpush.msra.mxu0 0.0
      %3695 = vmatpush.msra.mxu0 0.0
      %3696 = vmatpush.msra.mxu0 0.0
      %3697 = vmatpush.msra.mxu0 0.0
      %3698 = vmatpush.msra.mxu0 0.0
      %3699 = vmatpush.msra.mxu0 0.0
      %3700 = vmatpush.msra.mxu0 0.0
      %3701 = vmatpush.msra.mxu0 0.0
      %3702 = vmatpush.msra.mxu0 0.0
      %3703 = vmatpush.msra.mxu0 0.0
      %3704 = vmatpush.msra.mxu0 0.0
      %3705 = vmatpush.msra.mxu0 0.0
      %3706 = vmatpush.msra.mxu0 0.0
      %3707 = vmatpush.msra.mxu0 0.0
      %3708 = vmatpush.msra.mxu0 %v3464
      %3709 = vmatmul.f32.gmra.mxu0 %v3691
      %v3710 = vpop.f32.mrf.mxu0
      %v3711 = vadd.f32 0.0, %v3710
      %3712 = vdwg.mxu0
      %v3713 = vrot.slane %v3688, 4
      %v3714 = vsel %vm1062, %v3713, %v3642
      %v3715 = vrot.slane %v3642, 4
      %v3716 = vsel %vm1062, %v3688, %v3715
      %v3718 = vunpack.c.l.s4 1983009808
      %v3719 = vunpack.c.0.s8 %v3718
      %v3720 = vperm.slane %v3714, %v3719
      %v3722 = vunpack.c.l.s4 1983009808
      %v3723 = vunpack.c.0.s8 %v3722
      %v3724 = vperm.slane %v3716, %v3723
      %v3725 = vrot.slane %v3711, 4
      %v3726 = vsel %vm1062, %v3725, %v3665
      %v3727 = vrot.slane %v3665, 4
      %v3728 = vsel %vm1062, %v3711, %v3727
      %v3730 = vunpack.c.l.s4 1983009808
      %v3731 = vunpack.c.0.s8 %v3730
      %v3732 = vperm.slane %v3726, %v3731
      %v3734 = vunpack.c.l.s4 1983009808
      %v3735 = vunpack.c.0.s8 %v3734
      %v3736 = vperm.slane %v3728, %v3735
      %v3737 = vrot.slane %v3732, 4
      %v3738 = vsel %vm1062, %v3737, %v3720
      %v3739 = vrot.slane %v3720, 4
      %v3740 = vsel %vm1062, %v3732, %v3739
      %v3742 = vunpack.c.l.s4 1934713408
      %v3743 = vunpack.c.0.s8 %v3742
      %v3744 = vperm.slane %v3738, %v3743
      %v3746 = vunpack.c.l.s4 1934713408
      %v3747 = vunpack.c.0.s8 %v3746
      %v3748 = vperm.slane %v3740, %v3747
      %v3749 = vrot.slane %v3736, 4
      %v3750 = vsel %vm1062, %v3749, %v3724
      %v3751 = vrot.slane %v3724, 4
      %v3752 = vsel %vm1062, %v3736, %v3751
      %v3754 = vunpack.c.l.s4 1934713408
      %v3755 = vunpack.c.0.s8 %v3754
      %v3756 = vperm.slane %v3750, %v3755
      %v3758 = vunpack.c.l.s4 1934713408
      %v3759 = vunpack.c.0.s8 %v3758
      %v3760 = vperm.slane %v3752, %v3759
      %v3761 = vrot.slane %v3744, 4
      %v3762 = vsel %vm1062, 0.0, %v3761
      %v3763 = vrot.slane %v3748, 4
      %v3764 = vsel %vm1062, 0.0, %v3763
      %v3765 = vrot.slane %v3756, 4
      %v3766 = vsel %vm1062, 0.0, %v3765
      %v3767 = vrot.slane %v3760, 4
      %v3768 = vsel %vm1062, 0.0, %v3767
      %v3769 = vsel %vm1062, %v3763, %v3744
      %v3771 = vunpack.c.l.s4 1983009808
      %v3772 = vunpack.c.0.s8 %v3771
      %v3773 = vperm.slane %v3769, %v3772
      %v3774 = vrot.slane %v3764, 4
      %v3775 = vsel %vm1062, %v3774, %v3762
      %v3777 = vunpack.c.l.s4 1983009808
      %v3778 = vunpack.c.0.s8 %v3777
      %v3779 = vperm.slane %v3775, %v3778
      %v3780 = vsel %vm1062, %v3767, %v3756
      %v3782 = vunpack.c.l.s4 1983009808
      %v3783 = vunpack.c.0.s8 %v3782
      %v3784 = vperm.slane %v3780, %v3783
      %v3785 = vrot.slane %v3768, 4
      %v3786 = vsel %vm1062, %v3785, %v3766
      %v3788 = vunpack.c.l.s4 1983009808
      %v3789 = vunpack.c.0.s8 %v3788
      %v3790 = vperm.slane %v3786, %v3789
      %v3791 = vrot.slane %v3779, 4
      %v3792 = vsel %vm1062, %v3791, %v3773
      %v3793 = vrot.slane %v3773, 4
      %v3794 = vsel %vm1062, %v3779, %v3793
      %v3796 = vunpack.c.l.s4 1934713408
      %v3797 = vunpack.c.0.s8 %v3796
      %v3798 = vperm.slane %v3792, %v3797
      %v3800 = vunpack.c.l.s4 1934713408
      %v3801 = vunpack.c.0.s8 %v3800
      %v3802 = vperm.slane %v3794, %v3801
      %v3803 = vrot.slane %v3790, 4
      %v3804 = vsel %vm1062, %v3803, %v3784
      %v3805 = vrot.slane %v3784, 4
      %v3806 = vsel %vm1062, %v3790, %v3805
      %v3808 = vunpack.c.l.s4 1934713408
      %v3809 = vunpack.c.0.s8 %v3808
      %v3810 = vperm.slane %v3804, %v3809
      %v3812 = vunpack.c.l.s4 1934713408
      %v3813 = vunpack.c.0.s8 %v3812
      %v3814 = vperm.slane %v3806, %v3813
      %v3815 = vrot.slane %v3810, 4
      %v3816 = vsel %vm1062, %v3815, %v3798
      %v3817 = vrot.slane %v3798, 4
      %v3818 = vsel %vm1062, %v3810, %v3817
      %v3819 = vrot.slane %v3814, 4
      %v3820 = vsel %vm1062, %v3819, %v3802
      %v3821 = vrot.slane %v3802, 4
      %v3822 = vsel %vm1062, %v3814, %v3821
      %3824 = vrot.lane.b32.xlu0 %v3818, 32
      %v3825 = vpop.permute.xlu0 %3824
      %3828 = vrot.lane.b32.xlu0 %v3820, 64
      %v3829 = vpop.permute.xlu0 %3828
      %3832 = vrot.lane.b32.xlu0 %v3822, 96
      %v3833 = vpop.permute.xlu0 %3832
      %v3835 = vsel %vm1412, %v3816, %v3825
      %v3836 = vsel %vm1785, %v3835, %v3829
      %v3837 = vsel %vm1787, %v3836, %v3833
      %3839 = vrot.lane.b32.xlu0 %v3057, 96
      %v3840 = vpop.permute.xlu0 %3839
      %3842 = vrot.lane.b32.xlu0 %v3057, 64
      %v3843 = vpop.permute.xlu0 %3842
      %3845 = vrot.lane.b32.xlu0 %v3057, 32
      %v3846 = vpop.permute.xlu0 %3845
      %v3848 = vrot.slane %v3843, 4
      %v3849 = vsel %vm1062, %v3848, %v3057
      %v3850 = vrot.slane %v3057, 4
      %v3851 = vsel %vm1062, %v3843, %v3850
      %v3853 = vunpack.c.l.s4 1983009808
      %v3854 = vunpack.c.0.s8 %v3853
      %v3855 = vperm.slane %v3849, %v3854
      %v3857 = vunpack.c.l.s4 1983009808
      %v3858 = vunpack.c.0.s8 %v3857
      %v3859 = vperm.slane %v3851, %v3858
      %v3860 = vrot.slane %v3846, 4
      %v3861 = vsel %vm1062, %v3860, %v3840
      %v3862 = vrot.slane %v3840, 4
      %v3863 = vsel %vm1062, %v3846, %v3862
      %v3865 = vunpack.c.l.s4 1983009808
      %v3866 = vunpack.c.0.s8 %v3865
      %v3867 = vperm.slane %v3861, %v3866
      %v3869 = vunpack.c.l.s4 1983009808
      %v3870 = vunpack.c.0.s8 %v3869
      %v3871 = vperm.slane %v3863, %v3870
      %v3872 = vrot.slane %v3867, 4
      %v3873 = vsel %vm1062, %v3872, %v3855
      %v3874 = vrot.slane %v3855, 4
      %v3875 = vsel %vm1062, %v3867, %v3874
      %v3877 = vunpack.c.l.s4 1934713408
      %v3878 = vunpack.c.0.s8 %v3877
      %v3879 = vperm.slane %v3873, %v3878
      %v3881 = vunpack.c.l.s4 1934713408
      %v3882 = vunpack.c.0.s8 %v3881
      %v3883 = vperm.slane %v3875, %v3882
      %v3884 = vrot.slane %v3871, 4
      %v3885 = vsel %vm1062, %v3884, %v3859
      %v3886 = vrot.slane %v3859, 4
      %v3887 = vsel %vm1062, %v3871, %v3886
      %v3889 = vunpack.c.l.s4 1934713408
      %v3890 = vunpack.c.0.s8 %v3889
      %v3891 = vperm.slane %v3885, %v3890
      %v3893 = vunpack.c.l.s4 1934713408
      %v3894 = vunpack.c.0.s8 %v3893
      %v3895 = vperm.slane %v3887, %v3894
      %v3896 = vrot.slane %v3879, 4
      %v3897 = vsel %vm1062, 0.0, %v3896
      %v3898 = vrot.slane %v3883, 4
      %v3899 = vsel %vm1062, 0.0, %v3898
      %v3900 = vrot.slane %v3891, 4
      %v3901 = vsel %vm1062, 0.0, %v3900
      %v3902 = vrot.slane %v3895, 4
      %v3903 = vsel %vm1062, 0.0, %v3902
      %3905 = vrot.lane.b32.xlu0 %v3080, 96
      %v3906 = vpop.permute.xlu0 %3905
      %3908 = vrot.lane.b32.xlu0 %v3080, 64
      %v3909 = vpop.permute.xlu0 %3908
      %3911 = vrot.lane.b32.xlu0 %v3080, 32
      %v3912 = vpop.permute.xlu0 %3911
      %v3914 = vrot.slane %v3909, 4
      %v3915 = vsel %vm1062, %v3914, %v3080
      %v3916 = vrot.slane %v3080, 4
      %v3917 = vsel %vm1062, %v3909, %v3916
      %v3919 = vunpack.c.l.s4 1983009808
      %v3920 = vunpack.c.0.s8 %v3919
      %v3921 = vperm.slane %v3915, %v3920
      %v3923 = vunpack.c.l.s4 1983009808
      %v3924 = vunpack.c.0.s8 %v3923
      %v3925 = vperm.slane %v3917, %v3924
      %v3926 = vrot.slane %v3912, 4
      %v3927 = vsel %vm1062, %v3926, %v3906
      %v3928 = vrot.slane %v3906, 4
      %v3929 = vsel %vm1062, %v3912, %v3928
      %v3931 = vunpack.c.l.s4 1983009808
      %v3932 = vunpack.c.0.s8 %v3931
      %v3933 = vperm.slane %v3927, %v3932
      %v3935 = vunpack.c.l.s4 1983009808
      %v3936 = vunpack.c.0.s8 %v3935
      %v3937 = vperm.slane %v3929, %v3936
      %v3938 = vrot.slane %v3933, 4
      %v3939 = vsel %vm1062, %v3938, %v3921
      %v3940 = vrot.slane %v3921, 4
      %v3941 = vsel %vm1062, %v3933, %v3940
      %v3943 = vunpack.c.l.s4 1934713408
      %v3944 = vunpack.c.0.s8 %v3943
      %v3945 = vperm.slane %v3939, %v3944
      %v3947 = vunpack.c.l.s4 1934713408
      %v3948 = vunpack.c.0.s8 %v3947
      %v3949 = vperm.slane %v3941, %v3948
      %v3950 = vrot.slane %v3937, 4
      %v3951 = vsel %vm1062, %v3950, %v3925
      %v3952 = vrot.slane %v3925, 4
      %v3953 = vsel %vm1062, %v3937, %v3952
      %v3955 = vunpack.c.l.s4 1934713408
      %v3956 = vunpack.c.0.s8 %v3955
      %v3957 = vperm.slane %v3951, %v3956
      %v3959 = vunpack.c.l.s4 1934713408
      %v3960 = vunpack.c.0.s8 %v3959
      %v3961 = vperm.slane %v3953, %v3960
      %v3962 = vrot.slane %v3945, 4
      %v3963 = vsel %vm1062, 0.0, %v3962
      %v3964 = vrot.slane %v3949, 4
      %v3965 = vsel %vm1062, 0.0, %v3964
      %v3966 = vrot.slane %v3957, 4
      %v3967 = vsel %vm1062, 0.0, %v3966
      %v3968 = vrot.slane %v3961, 4
      %v3969 = vsel %vm1062, 0.0, %v3968
      %3971 = vrot.lane.b32.xlu0 %v3103, 96
      %v3972 = vpop.permute.xlu0 %3971
      %3974 = vrot.lane.b32.xlu0 %v3103, 64
      %v3975 = vpop.permute.xlu0 %3974
      %3977 = vrot.lane.b32.xlu0 %v3103, 32
      %v3978 = vpop.permute.xlu0 %3977
      %v3980 = vrot.slane %v3975, 4
      %v3981 = vsel %vm1062, %v3980, %v3103
      %v3982 = vrot.slane %v3103, 4
      %v3983 = vsel %vm1062, %v3975, %v3982
      %v3985 = vunpack.c.l.s4 1983009808
      %v3986 = vunpack.c.0.s8 %v3985
      %v3987 = vperm.slane %v3981, %v3986
      %v3989 = vunpack.c.l.s4 1983009808
      %v3990 = vunpack.c.0.s8 %v3989
      %v3991 = vperm.slane %v3983, %v3990
      %v3992 = vrot.slane %v3978, 4
      %v3993 = vsel %vm1062, %v3992, %v3972
      %v3994 = vrot.slane %v3972, 4
      %v3995 = vsel %vm1062, %v3978, %v3994
      %v3997 = vunpack.c.l.s4 1983009808
      %v3998 = vunpack.c.0.s8 %v3997
      %v3999 = vperm.slane %v3993, %v3998
      %v4001 = vunpack.c.l.s4 1983009808
      %v4002 = vunpack.c.0.s8 %v4001
      %v4003 = vperm.slane %v3995, %v4002
      %v4004 = vrot.slane %v3999, 4
      %v4005 = vsel %vm1062, %v4004, %v3987
      %v4006 = vrot.slane %v3987, 4
      %v4007 = vsel %vm1062, %v3999, %v4006
      %v4009 = vunpack.c.l.s4 1934713408
      %v4010 = vunpack.c.0.s8 %v4009
      %v4011 = vperm.slane %v4005, %v4010
      %v4013 = vunpack.c.l.s4 1934713408
      %v4014 = vunpack.c.0.s8 %v4013
      %v4015 = vperm.slane %v4007, %v4014
      %v4016 = vrot.slane %v4003, 4
      %v4017 = vsel %vm1062, %v4016, %v3991
      %v4018 = vrot.slane %v3991, 4
      %v4019 = vsel %vm1062, %v4003, %v4018
      %v4021 = vunpack.c.l.s4 1934713408
      %v4022 = vunpack.c.0.s8 %v4021
      %v4023 = vperm.slane %v4017, %v4022
      %v4025 = vunpack.c.l.s4 1934713408
      %v4026 = vunpack.c.0.s8 %v4025
      %v4027 = vperm.slane %v4019, %v4026
      %v4028 = vrot.slane %v4011, 4
      %v4029 = vsel %vm1062, 0.0, %v4028
      %v4030 = vrot.slane %v4015, 4
      %v4031 = vsel %vm1062, 0.0, %v4030
      %v4032 = vrot.slane %v4023, 4
      %v4033 = vsel %vm1062, 0.0, %v4032
      %v4034 = vrot.slane %v4027, 4
      %v4035 = vsel %vm1062, 0.0, %v4034
      %v4036 = vsel %vm1062, %v3898, %v3879
      %v4038 = vunpack.c.l.s4 1983009808
      %v4039 = vunpack.c.0.s8 %v4038
      %v4040 = vperm.slane %v4036, %v4039
      %v4041 = vrot.slane %v3899, 4
      %v4042 = vsel %vm1062, %v4041, %v3897
      %v4044 = vunpack.c.l.s4 1983009808
      %v4045 = vunpack.c.0.s8 %v4044
      %v4046 = vperm.slane %v4042, %v4045
      %v4047 = vsel %vm1062, %v3902, %v3891
      %v4049 = vunpack.c.l.s4 1983009808
      %v4050 = vunpack.c.0.s8 %v4049
      %v4051 = vperm.slane %v4047, %v4050
      %v4052 = vrot.slane %v3903, 4
      %v4053 = vsel %vm1062, %v4052, %v3901
      %v4055 = vunpack.c.l.s4 1983009808
      %v4056 = vunpack.c.0.s8 %v4055
      %v4057 = vperm.slane %v4053, %v4056
      %v4058 = vrot.slane %v4046, 4
      %v4059 = vsel %vm1062, %v4058, %v4040
      %v4060 = vrot.slane %v4040, 4
      %v4061 = vsel %vm1062, %v4046, %v4060
      %v4063 = vunpack.c.l.s4 1934713408
      %v4064 = vunpack.c.0.s8 %v4063
      %v4065 = vperm.slane %v4059, %v4064
      %v4067 = vunpack.c.l.s4 1934713408
      %v4068 = vunpack.c.0.s8 %v4067
      %v4069 = vperm.slane %v4061, %v4068
      %v4070 = vrot.slane %v4057, 4
      %v4071 = vsel %vm1062, %v4070, %v4051
      %v4072 = vrot.slane %v4051, 4
      %v4073 = vsel %vm1062, %v4057, %v4072
      %v4075 = vunpack.c.l.s4 1934713408
      %v4076 = vunpack.c.0.s8 %v4075
      %v4077 = vperm.slane %v4071, %v4076
      %v4079 = vunpack.c.l.s4 1934713408
      %v4080 = vunpack.c.0.s8 %v4079
      %v4081 = vperm.slane %v4073, %v4080
      %v4082 = vrot.slane %v4077, 4
      %v4083 = vsel %vm1062, %v4082, %v4065
      %v4084 = vrot.slane %v4065, 4
      %v4085 = vsel %vm1062, %v4077, %v4084
      %v4086 = vrot.slane %v4081, 4
      %v4087 = vsel %vm1062, %v4086, %v4069
      %v4088 = vrot.slane %v4069, 4
      %v4089 = vsel %vm1062, %v4081, %v4088
      %v4090 = vsel %vm1062, %v3964, %v3945
      %v4092 = vunpack.c.l.s4 1983009808
      %v4093 = vunpack.c.0.s8 %v4092
      %v4094 = vperm.slane %v4090, %v4093
      %v4095 = vrot.slane %v3965, 4
      %v4096 = vsel %vm1062, %v4095, %v3963
      %v4098 = vunpack.c.l.s4 1983009808
      %v4099 = vunpack.c.0.s8 %v4098
      %v4100 = vperm.slane %v4096, %v4099
      %v4101 = vsel %vm1062, %v3968, %v3957
      %v4103 = vunpack.c.l.s4 1983009808
      %v4104 = vunpack.c.0.s8 %v4103
      %v4105 = vperm.slane %v4101, %v4104
      %v4106 = vrot.slane %v3969, 4
      %v4107 = vsel %vm1062, %v4106, %v3967
      %v4109 = vunpack.c.l.s4 1983009808
      %v4110 = vunpack.c.0.s8 %v4109
      %v4111 = vperm.slane %v4107, %v4110
      %v4112 = vrot.slane %v4100, 4
      %v4113 = vsel %vm1062, %v4112, %v4094
      %v4114 = vrot.slane %v4094, 4
      %v4115 = vsel %vm1062, %v4100, %v4114
      %v4117 = vunpack.c.l.s4 1934713408
      %v4118 = vunpack.c.0.s8 %v4117
      %v4119 = vperm.slane %v4113, %v4118
      %v4121 = vunpack.c.l.s4 1934713408
      %v4122 = vunpack.c.0.s8 %v4121
      %v4123 = vperm.slane %v4115, %v4122
      %v4124 = vrot.slane %v4111, 4
      %v4125 = vsel %vm1062, %v4124, %v4105
      %v4126 = vrot.slane %v4105, 4
      %v4127 = vsel %vm1062, %v4111, %v4126
      %v4129 = vunpack.c.l.s4 1934713408
      %v4130 = vunpack.c.0.s8 %v4129
      %v4131 = vperm.slane %v4125, %v4130
      %v4133 = vunpack.c.l.s4 1934713408
      %v4134 = vunpack.c.0.s8 %v4133
      %v4135 = vperm.slane %v4127, %v4134
      %v4136 = vrot.slane %v4131, 4
      %v4137 = vsel %vm1062, %v4136, %v4119
      %v4138 = vrot.slane %v4119, 4
      %v4139 = vsel %vm1062, %v4131, %v4138
      %v4140 = vrot.slane %v4135, 4
      %v4141 = vsel %vm1062, %v4140, %v4123
      %v4142 = vrot.slane %v4123, 4
      %v4143 = vsel %vm1062, %v4135, %v4142
      %v4144 = vsel %vm1062, %v4030, %v4011
      %v4146 = vunpack.c.l.s4 1983009808
      %v4147 = vunpack.c.0.s8 %v4146
      %v4148 = vperm.slane %v4144, %v4147
      %v4149 = vrot.slane %v4031, 4
      %v4150 = vsel %vm1062, %v4149, %v4029
      %v4152 = vunpack.c.l.s4 1983009808
      %v4153 = vunpack.c.0.s8 %v4152
      %v4154 = vperm.slane %v4150, %v4153
      %v4155 = vsel %vm1062, %v4034, %v4023
      %v4157 = vunpack.c.l.s4 1983009808
      %v4158 = vunpack.c.0.s8 %v4157
      %v4159 = vperm.slane %v4155, %v4158
      %v4160 = vrot.slane %v4035, 4
      %v4161 = vsel %vm1062, %v4160, %v4033
      %v4163 = vunpack.c.l.s4 1983009808
      %v4164 = vunpack.c.0.s8 %v4163
      %v4165 = vperm.slane %v4161, %v4164
      %v4166 = vrot.slane %v4154, 4
      %v4167 = vsel %vm1062, %v4166, %v4148
      %v4168 = vrot.slane %v4148, 4
      %v4169 = vsel %vm1062, %v4154, %v4168
      %v4171 = vunpack.c.l.s4 1934713408
      %v4172 = vunpack.c.0.s8 %v4171
      %v4173 = vperm.slane %v4167, %v4172
      %v4175 = vunpack.c.l.s4 1934713408
      %v4176 = vunpack.c.0.s8 %v4175
      %v4177 = vperm.slane %v4169, %v4176
      %v4178 = vrot.slane %v4165, 4
      %v4179 = vsel %vm1062, %v4178, %v4159
      %v4180 = vrot.slane %v4159, 4
      %v4181 = vsel %vm1062, %v4165, %v4180
      %v4183 = vunpack.c.l.s4 1934713408
      %v4184 = vunpack.c.0.s8 %v4183
      %v4185 = vperm.slane %v4179, %v4184
      %v4187 = vunpack.c.l.s4 1934713408
      %v4188 = vunpack.c.0.s8 %v4187
      %v4189 = vperm.slane %v4181, %v4188
      %v4190 = vrot.slane %v4185, 4
      %v4191 = vsel %vm1062, %v4190, %v4173
      %v4192 = vrot.slane %v4173, 4
      %v4193 = vsel %vm1062, %v4185, %v4192
      %v4194 = vrot.slane %v4189, 4
      %v4195 = vsel %vm1062, %v4194, %v4177
      %v4196 = vrot.slane %v4177, 4
      %v4197 = vsel %vm1062, %v4189, %v4196
      %v4199 = vsel %vm1412, %v4083, 0
      %v4202 = vsel %vm1412, %v4137, 0
      %4204 = vmatpush.xpose.msra.mxu0 0.0
      %4205 = vmatpush.xpose.msra.mxu0 0.0
      %4206 = vmatpush.xpose.msra.mxu0 0.0
      %4207 = vmatpush.xpose.msra.mxu0 0.0
      %4208 = vmatpush.xpose.msra.mxu0 0.0
      %4209 = vmatpush.xpose.msra.mxu0 0.0
      %4210 = vmatpush.xpose.msra.mxu0 0.0
      %4211 = vmatpush.xpose.msra.mxu0 0.0
      %4212 = vmatpush.xpose.msra.mxu0 0.0
      %4213 = vmatpush.xpose.msra.mxu0 0.0
      %4214 = vmatpush.xpose.msra.mxu0 0.0
      %4215 = vmatpush.xpose.msra.mxu0 0.0
      %4216 = vmatpush.xpose.msra.mxu0 0.0
      %4217 = vmatpush.xpose.msra.mxu0 0.0
      %4218 = vmatpush.xpose.msra.mxu0 0.0
      %4219 = vmatpush.xpose.msra.mxu0 %v4202
      %4220 = vmatmul.f32.gmra.mxu0 %v4199
      %v4221 = vpop.f32.mrf.mxu0
      %v4222 = vadd.f32 0.0, %v4221
      %4223 = vdwg.mxu0
      %v4225 = vsel %vm1412, %v4085, 0
      %v4228 = vsel %vm1412, %v4139, 0
      %4230 = vmatpush.xpose.msra.mxu0 0.0
      %4231 = vmatpush.xpose.msra.mxu0 0.0
      %4232 = vmatpush.xpose.msra.mxu0 0.0
      %4233 = vmatpush.xpose.msra.mxu0 0.0
      %4234 = vmatpush.xpose.msra.mxu0 0.0
      %4235 = vmatpush.xpose.msra.mxu0 0.0
      %4236 = vmatpush.xpose.msra.mxu0 0.0
      %4237 = vmatpush.xpose.msra.mxu0 0.0
      %4238 = vmatpush.xpose.msra.mxu0 0.0
      %4239 = vmatpush.xpose.msra.mxu0 0.0
      %4240 = vmatpush.xpose.msra.mxu0 0.0
      %4241 = vmatpush.xpose.msra.mxu0 0.0
      %4242 = vmatpush.xpose.msra.mxu0 0.0
      %4243 = vmatpush.xpose.msra.mxu0 0.0
      %4244 = vmatpush.xpose.msra.mxu0 0.0
      %4245 = vmatpush.xpose.msra.mxu0 %v4228
      %4246 = vmatmul.f32.gmra.mxu0 %v4225
      %v4247 = vpop.f32.mrf.mxu0
      %v4248 = vadd.f32 0.0, %v4247
      %4249 = vdwg.mxu0
      %v4251 = vsel %vm1412, %v4087, 0
      %v4254 = vsel %vm1412, %v4141, 0
      %4256 = vmatpush.xpose.msra.mxu0 0.0
      %4257 = vmatpush.xpose.msra.mxu0 0.0
      %4258 = vmatpush.xpose.msra.mxu0 0.0
      %4259 = vmatpush.xpose.msra.mxu0 0.0
      %4260 = vmatpush.xpose.msra.mxu0 0.0
      %4261 = vmatpush.xpose.msra.mxu0 0.0
      %4262 = vmatpush.xpose.msra.mxu0 0.0
      %4263 = vmatpush.xpose.msra.mxu0 0.0
      %4264 = vmatpush.xpose.msra.mxu0 0.0
      %4265 = vmatpush.xpose.msra.mxu0 0.0
      %4266 = vmatpush.xpose.msra.mxu0 0.0
      %4267 = vmatpush.xpose.msra.mxu0 0.0
      %4268 = vmatpush.xpose.msra.mxu0 0.0
      %4269 = vmatpush.xpose.msra.mxu0 0.0
      %4270 = vmatpush.xpose.msra.mxu0 0.0
      %4271 = vmatpush.xpose.msra.mxu0 %v4254
      %4272 = vmatmul.f32.gmra.mxu0 %v4251
      %v4273 = vpop.f32.mrf.mxu0
      %v4274 = vadd.f32 0.0, %v4273
      %4275 = vdwg.mxu0
      %v4277 = vsel %vm1412, %v4089, 0
      %v4280 = vsel %vm1412, %v4143, 0
      %4282 = vmatpush.xpose.msra.mxu0 0.0
      %4283 = vmatpush.xpose.msra.mxu0 0.0
      %4284 = vmatpush.xpose.msra.mxu0 0.0
      %4285 = vmatpush.xpose.msra.mxu0 0.0
      %4286 = vmatpush.xpose.msra.mxu0 0.0
      %4287 = vmatpush.xpose.msra.mxu0 0.0
      %4288 = vmatpush.xpose.msra.mxu0 0.0
      %4289 = vmatpush.xpose.msra.mxu0 0.0
      %4290 = vmatpush.xpose.msra.mxu0 0.0
      %4291 = vmatpush.xpose.msra.mxu0 0.0
      %4292 = vmatpush.xpose.msra.mxu0 0.0
      %4293 = vmatpush.xpose.msra.mxu0 0.0
      %4294 = vmatpush.xpose.msra.mxu0 0.0
      %4295 = vmatpush.xpose.msra.mxu0 0.0
      %4296 = vmatpush.xpose.msra.mxu0 0.0
      %4297 = vmatpush.xpose.msra.mxu0 %v4280
      %4298 = vmatmul.f32.gmra.mxu0 %v4277
      %v4299 = vpop.f32.mrf.mxu0
      %v4300 = vadd.f32 0.0, %v4299
      %4301 = vdwg.mxu0
      %v4302 = vmul.f32 %v4222, 0.17677669
      %v4303 = vmul.f32 %v4248, 0.17677669
      %v4304 = vmul.f32 %v4274, 0.17677669
      %v4305 = vmul.f32 %v4300, 0.17677669
      %v4306 = vadd.f32 %v4302, %v878
      %v4307 = vadd.f32 %v4303, %v878
      %v4308 = vadd.f32 %v4304, %v878
      %v4309 = vadd.f32 %v4305, %v878
      %v4310 = vsel %vm1525, %v4306, -inf
      %4311 = vmax.xlane.f32.xlu0 %v4310
      %v4312 = vpop.xlane.xlu0 %4311
      %v4313 = vsel %vm1525, %v4307, -inf
      %4314 = vmax.xlane.f32.xlu0 %v4313
      %v4315 = vpop.xlane.xlu0 %4314
      %v4316 = vsel %vm1525, %v4308, -inf
      %4317 = vmax.xlane.f32.xlu0 %v4316
      %v4318 = vpop.xlane.xlu0 %4317
      %v4319 = vsel %vm1525, %v4309, -inf
      %4320 = vmax.xlane.f32.xlu0 %v4319
      %v4321 = vpop.xlane.xlu0 %4320
      %v4322 = vsub.f32 %v4306, %v4312
      %v4323 = vsub.f32 %v4307, %v4315
      %v4324 = vsub.f32 %v4308, %v4318
      %v4325 = vsub.f32 %v4309, %v4321
      %v4326 = vmul.f32 %v4322, 1.442695
      %v4327 = vpow.pop %v4326
      %v4328 = vmul.f32 %v4323, 1.442695
      %v4329 = vpow.pop %v4328
      %v4330 = vmul.f32 %v4324, 1.442695
      %v4331 = vpow.pop %v4330
      %v4332 = vmul.f32 %v4325, 1.442695
      %v4333 = vpow.pop %v4332
      %v4334 = vsel %vm1525, %v4327, 0.0
      %4335 = vadd.xlane.f32.xlu0 %v4334
      %v4336 = vpop.xlane.xlu0 %4335
      %v4337 = vsel %vm1525, %v4329, 0.0
      %4338 = vadd.xlane.f32.xlu0 %v4337
      %v4339 = vpop.xlane.xlu0 %4338
      %v4340 = vsel %vm1525, %v4331, 0.0
      %4341 = vadd.xlane.f32.xlu0 %v4340
      %v4342 = vpop.xlane.xlu0 %4341
      %v4343 = vsel %vm1525, %v4333, 0.0
      %4344 = vadd.xlane.f32.xlu0 %v4343
      %v4345 = vpop.xlane.xlu0 %4344
      %v4346 = vrcp.pop %v4336
      %v4347 = vrcp.pop %v4339
      %v4348 = vrcp.pop %v4342
      %v4349 = vrcp.pop %v4345
      %v4350 = vmul.f32 %v4327, %v4346
      %v4351 = vmul.f32 %v4329, %v4347
      %v4352 = vmul.f32 %v4331, %v4348
      %v4353 = vmul.f32 %v4333, %v4349
      %v4355 = vsel %vm1525, %v4350, 0
      %4357 = vmatpush.msra.mxu0 0.0
      %4358 = vmatpush.msra.mxu0 0.0
      %4359 = vmatpush.msra.mxu0 0.0
      %4360 = vmatpush.msra.mxu0 0.0
      %4361 = vmatpush.msra.mxu0 0.0
      %4362 = vmatpush.msra.mxu0 0.0
      %4363 = vmatpush.msra.mxu0 0.0
      %4364 = vmatpush.msra.mxu0 0.0
      %4365 = vmatpush.msra.mxu0 0.0
      %4366 = vmatpush.msra.mxu0 0.0
      %4367 = vmatpush.msra.mxu0 0.0
      %4368 = vmatpush.msra.mxu0 0.0
      %4369 = vmatpush.msra.mxu0 0.0
      %4370 = vmatpush.msra.mxu0 0.0
      %4371 = vmatpush.msra.mxu0 0.0
      %4372 = vmatpush.msra.mxu0 %v4191
      %4373 = vmatmul.f32.gmra.mxu0 %v4355
      %v4374 = vpop.f32.mrf.mxu0
      %v4375 = vadd.f32 0.0, %v4374
      %4376 = vdwg.mxu0
      %v4378 = vsel %vm1525, %v4351, 0
      %4380 = vmatpush.msra.mxu0 0.0
      %4381 = vmatpush.msra.mxu0 0.0
      %4382 = vmatpush.msra.mxu0 0.0
      %4383 = vmatpush.msra.mxu0 0.0
      %4384 = vmatpush.msra.mxu0 0.0
      %4385 = vmatpush.msra.mxu0 0.0
      %4386 = vmatpush.msra.mxu0 0.0
      %4387 = vmatpush.msra.mxu0 0.0
      %4388 = vmatpush.msra.mxu0 0.0
      %4389 = vmatpush.msra.mxu0 0.0
      %4390 = vmatpush.msra.mxu0 0.0
      %4391 = vmatpush.msra.mxu0 0.0
      %4392 = vmatpush.msra.mxu0 0.0
      %4393 = vmatpush.msra.mxu0 0.0
      %4394 = vmatpush.msra.mxu0 0.0
      %4395 = vmatpush.msra.mxu0 %v4193
      %4396 = vmatmul.f32.gmra.mxu0 %v4378
      %v4397 = vpop.f32.mrf.mxu0
      %v4398 = vadd.f32 0.0, %v4397
      %4399 = vdwg.mxu0
      %v4401 = vsel %vm1525, %v4352, 0
      %4403 = vmatpush.msra.mxu0 0.0
      %4404 = vmatpush.msra.mxu0 0.0
      %4405 = vmatpush.msra.mxu0 0.0
      %4406 = vmatpush.msra.mxu0 0.0
      %4407 = vmatpush.msra.mxu0 0.0
      %4408 = vmatpush.msra.mxu0 0.0
      %4409 = vmatpush.msra.mxu0 0.0
      %4410 = vmatpush.msra.mxu0 0.0
      %4411 = vmatpush.msra.mxu0 0.0
      %4412 = vmatpush.msra.mxu0 0.0
      %4413 = vmatpush.msra.mxu0 0.0
      %4414 = vmatpush.msra.mxu0 0.0
      %4415 = vmatpush.msra.mxu0 0.0
      %4416 = vmatpush.msra.mxu0 0.0
      %4417 = vmatpush.msra.mxu0 0.0
      %4418 = vmatpush.msra.mxu0 %v4195
      %4419 = vmatmul.f32.gmra.mxu0 %v4401
      %v4420 = vpop.f32.mrf.mxu0
      %v4421 = vadd.f32 0.0, %v4420
      %4422 = vdwg.mxu0
      %v4424 = vsel %vm1525, %v4353, 0
      %4426 = vmatpush.msra.mxu0 0.0
      %4427 = vmatpush.msra.mxu0 0.0
      %4428 = vmatpush.msra.mxu0 0.0
      %4429 = vmatpush.msra.mxu0 0.0
      %4430 = vmatpush.msra.mxu0 0.0
      %4431 = vmatpush.msra.mxu0 0.0
      %4432 = vmatpush.msra.mxu0 0.0
      %4433 = vmatpush.msra.mxu0 0.0
      %4434 = vmatpush.msra.mxu0 0.0
      %4435 = vmatpush.msra.mxu0 0.0
      %4436 = vmatpush.msra.mxu0 0.0
      %4437 = vmatpush.msra.mxu0 0.0
      %4438 = vmatpush.msra.mxu0 0.0
      %4439 = vmatpush.msra.mxu0 0.0
      %4440 = vmatpush.msra.mxu0 0.0
      %4441 = vmatpush.msra.mxu0 %v4197
      %4442 = vmatmul.f32.gmra.mxu0 %v4424
      %v4443 = vpop.f32.mrf.mxu0
      %v4444 = vadd.f32 0.0, %v4443
      %4445 = vdwg.mxu0
      %v4446 = vrot.slane %v4421, 4
      %v4447 = vsel %vm1062, %v4446, %v4375
      %v4448 = vrot.slane %v4375, 4
      %v4449 = vsel %vm1062, %v4421, %v4448
      %v4451 = vunpack.c.l.s4 1983009808
      %v4452 = vunpack.c.0.s8 %v4451
      %v4453 = vperm.slane %v4447, %v4452
      %v4455 = vunpack.c.l.s4 1983009808
      %v4456 = vunpack.c.0.s8 %v4455
      %v4457 = vperm.slane %v4449, %v4456
      %v4458 = vrot.slane %v4444, 4
      %v4459 = vsel %vm1062, %v4458, %v4398
      %v4460 = vrot.slane %v4398, 4
      %v4461 = vsel %vm1062, %v4444, %v4460
      %v4463 = vunpack.c.l.s4 1983009808
      %v4464 = vunpack.c.0.s8 %v4463
      %v4465 = vperm.slane %v4459, %v4464
      %v4467 = vunpack.c.l.s4 1983009808
      %v4468 = vunpack.c.0.s8 %v4467
      %v4469 = vperm.slane %v4461, %v4468
      %v4470 = vrot.slane %v4465, 4
      %v4471 = vsel %vm1062, %v4470, %v4453
      %v4472 = vrot.slane %v4453, 4
      %v4473 = vsel %vm1062, %v4465, %v4472
      %v4475 = vunpack.c.l.s4 1934713408
      %v4476 = vunpack.c.0.s8 %v4475
      %v4477 = vperm.slane %v4471, %v4476
      %v4479 = vunpack.c.l.s4 1934713408
      %v4480 = vunpack.c.0.s8 %v4479
      %v4481 = vperm.slane %v4473, %v4480
      %v4482 = vrot.slane %v4469, 4
      %v4483 = vsel %vm1062, %v4482, %v4457
      %v4484 = vrot.slane %v4457, 4
      %v4485 = vsel %vm1062, %v4469, %v4484
      %v4487 = vunpack.c.l.s4 1934713408
      %v4488 = vunpack.c.0.s8 %v4487
      %v4489 = vperm.slane %v4483, %v4488
      %v4491 = vunpack.c.l.s4 1934713408
      %v4492 = vunpack.c.0.s8 %v4491
      %v4493 = vperm.slane %v4485, %v4492
      %v4494 = vrot.slane %v4477, 4
      %v4495 = vsel %vm1062, 0.0, %v4494
      %v4496 = vrot.slane %v4481, 4
      %v4497 = vsel %vm1062, 0.0, %v4496
      %v4498 = vrot.slane %v4489, 4
      %v4499 = vsel %vm1062, 0.0, %v4498
      %v4500 = vrot.slane %v4493, 4
      %v4501 = vsel %vm1062, 0.0, %v4500
      %v4502 = vsel %vm1062, %v4496, %v4477
      %v4504 = vunpack.c.l.s4 1983009808
      %v4505 = vunpack.c.0.s8 %v4504
      %v4506 = vperm.slane %v4502, %v4505
      %v4507 = vrot.slane %v4497, 4
      %v4508 = vsel %vm1062, %v4507, %v4495
      %v4510 = vunpack.c.l.s4 1983009808
      %v4511 = vunpack.c.0.s8 %v4510
      %v4512 = vperm.slane %v4508, %v4511
      %v4513 = vsel %vm1062, %v4500, %v4489
      %v4515 = vunpack.c.l.s4 1983009808
      %v4516 = vunpack.c.0.s8 %v4515
      %v4517 = vperm.slane %v4513, %v4516
      %v4518 = vrot.slane %v4501, 4
      %v4519 = vsel %vm1062, %v4518, %v4499
      %v4521 = vunpack.c.l.s4 1983009808
      %v4522 = vunpack.c.0.s8 %v4521
      %v4523 = vperm.slane %v4519, %v4522
      %v4524 = vrot.slane %v4512, 4
      %v4525 = vsel %vm1062, %v4524, %v4506
      %v4526 = vrot.slane %v4506, 4
      %v4527 = vsel %vm1062, %v4512, %v4526
      %v4529 = vunpack.c.l.s4 1934713408
      %v4530 = vunpack.c.0.s8 %v4529
      %v4531 = vperm.slane %v4525, %v4530
      %v4533 = vunpack.c.l.s4 1934713408
      %v4534 = vunpack.c.0.s8 %v4533
      %v4535 = vperm.slane %v4527, %v4534
      %v4536 = vrot.slane %v4523, 4
      %v4537 = vsel %vm1062, %v4536, %v4517
      %v4538 = vrot.slane %v4517, 4
      %v4539 = vsel %vm1062, %v4523, %v4538
      %v4541 = vunpack.c.l.s4 1934713408
      %v4542 = vunpack.c.0.s8 %v4541
      %v4543 = vperm.slane %v4537, %v4542
      %v4545 = vunpack.c.l.s4 1934713408
      %v4546 = vunpack.c.0.s8 %v4545
      %v4547 = vperm.slane %v4539, %v4546
      %v4548 = vrot.slane %v4543, 4
      %v4549 = vsel %vm1062, %v4548, %v4531
      %v4550 = vrot.slane %v4531, 4
      %v4551 = vsel %vm1062, %v4543, %v4550
      %v4552 = vrot.slane %v4547, 4
      %v4553 = vsel %vm1062, %v4552, %v4535
      %v4554 = vrot.slane %v4535, 4
      %v4555 = vsel %vm1062, %v4547, %v4554
      %4557 = vrot.lane.b32.xlu0 %v4551, 32
      %v4558 = vpop.permute.xlu0 %4557
      %4561 = vrot.lane.b32.xlu0 %v4553, 64
      %v4562 = vpop.permute.xlu0 %4561
      %4565 = vrot.lane.b32.xlu0 %v4555, 96
      %v4566 = vpop.permute.xlu0 %4565
      %v4568 = vsel %vm1412, %v4549, %v4558
      %v4569 = vsel %vm1785, %v4568, %v4562
      %v4570 = vsel %vm1787, %v4569, %v4566
      %s4571 = scalar_lea.vmem %s6, 128
      %v4572 = vld [vmem:[%s4571] sm:$0xff]
      %v4573 = vld [vmem:[%s4571 + $0x8] sm:$0xff]
      %v4574 = vld [vmem:[%s4571 + $0x10] sm:$0xff]
      %v4575 = vld [vmem:[%s4571 + $0x18] sm:$0xff]
      %v4576 = vld [vmem:[%s4571 + $0x20] sm:$0xff]
      %v4577 = vld [vmem:[%s4571 + $0x28] sm:$0xff]
      %v4578 = vld [vmem:[%s4571 + $0x30] sm:$0xff]
      %v4579 = vld [vmem:[%s4571 + $0x38] sm:$0xff]
      %v4580 = vld [vmem:[%s4571 + $0x40] sm:$0xff]
      %v4581 = vld [vmem:[%s4571 + $0x48] sm:$0xff]
      %v4582 = vld [vmem:[%s4571 + $0x50] sm:$0xff]
      %v4583 = vld [vmem:[%s4571 + $0x58] sm:$0xff]
      %v4584 = vld [vmem:[%s4571 + $0x60] sm:$0xff]
      %v4585 = vld [vmem:[%s4571 + $0x68] sm:$0xff]
      %v4586 = vld [vmem:[%s4571 + $0x70] sm:$0xff]
      %v4587 = vld [vmem:[%s4571 + $0x78] sm:$0xff]
      %v4588 = vld [vmem:[%s7 + $0x1] sm:$0x1]
      %v4589 = vperm.slane %v4588, 0
      %4590 = vmatpush.msra.mxu0 %v4587
      %4591 = vmatpush.msra.mxu0 %v4586
      %4592 = vmatpush.msra.mxu0 %v4585
      %4593 = vmatpush.msra.mxu0 %v4584
      %4594 = vmatpush.msra.mxu0 %v4583
      %4595 = vmatpush.msra.mxu0 %v4582
      %4596 = vmatpush.msra.mxu0 %v4581
      %4597 = vmatpush.msra.mxu0 %v4580
      %4598 = vmatpush.msra.mxu0 %v4579
      %4599 = vmatpush.msra.mxu0 %v4578
      %4600 = vmatpush.msra.mxu0 %v4577
      %4601 = vmatpush.msra.mxu0 %v4576
      %4602 = vmatpush.msra.mxu0 %v4575
      %4603 = vmatpush.msra.mxu0 %v4574
      %4604 = vmatpush.msra.mxu0 %v4573
      %4605 = vmatpush.msra.mxu0 %v4572
      %4606 = vmatmul.f32.gmra.mxu0 %v3837
      %v4607 = vpop.f32.mrf.mxu0
      %v4608 = vadd.f32 %v4589, %v4607
      %4609 = vmatmul.f32.gmra.mxu0 %v4570
      %v4610 = vpop.f32.mrf.mxu0
      %v4611 = vadd.f32 %v4589, %v4610
      %4612 = vdwg.mxu0
      %v4613 = vadd.f32 %v2937, %v4608
      %v4614 = vadd.f32 %v2938, %v4611
      %v4615 = vld [vmem:[%s8 + $0x1] sm:$0x1]
      %v4616 = vld [vmem:[%s9 + $0x1] sm:$0x1]
      %4617 = vadd.xlane.f32.xlu0 %v4613
      %v4618 = vpop.xlane.xlu0 %4617
      %4619 = vadd.xlane.f32.xlu0 %v4614
      %v4620 = vpop.xlane.xlu0 %4619
      %v4621 = vmul.f32 %v4618, %v891
      %v4622 = vmul.f32 %v4620, %v891
      %v4623 = vsub.f32 %v4613, %v4621
      %v4624 = vsub.f32 %v4614, %v4622
      %v4625 = vmul.f32 %v4623, %v4623
      %v4626 = vmul.f32 %v4624, %v4624
      %4627 = vadd.xlane.f32.xlu0 %v4625
      %v4628 = vpop.xlane.xlu0 %4627
      %4629 = vadd.xlane.f32.xlu0 %v4626
      %v4630 = vpop.xlane.xlu0 %4629
      %v4631 = vmul.f32 %v4628, %v891
      %v4632 = vmul.f32 %v4630, %v891
      %v4633 = vadd.f32 %v4631, 1e-05
      %v4634 = vadd.f32 %v4632, 1e-05
      %v4635 = vrsqrt.pop %v4633
      %v4636 = vmul.f32 %v4635, %v4633
      %v4637 = vmul.f32 %v4636, %v4635
      %v4638 = vmul.f32 0.5, %v4637
      %v4639 = vsub.f32 1.5, %v4638
      %v4640 = vmul.f32 %v4635, %v4639
      %vm4641 = vweird.f32 %v4633
      %vm4642 = vweird.f32 %v4635
      %vm4643 = vmor %vm4641, %vm4642
      %v4644 = vsel %vm4643, %v4635, %v4640
      %v4645 = vrsqrt.pop %v4634
      %v4646 = vmul.f32 %v4645, %v4634
      %v4647 = vmul.f32 %v4646, %v4645
      %v4648 = vmul.f32 0.5, %v4647
      %v4649 = vsub.f32 1.5, %v4648
      %v4650 = vmul.f32 %v4645, %v4649
      %vm4651 = vweird.f32 %v4634
      %vm4652 = vweird.f32 %v4645
      %vm4653 = vmor %vm4651, %vm4652
      %v4654 = vsel %vm4653, %v4645, %v4650
      %v4655 = vmul.f32 %v4623, %v4644
      %v4656 = vmul.f32 %v4624, %v4654
      %v4657 = vperm.slane %v4615, 0
      %v4658 = vmul.f32 %v4655, %v4657
      %v4659 = vmul.f32 %v4656, %v4657
      %v4660 = vperm.slane %v4616, 0
      %v4661 = vadd.f32 %v4658, %v4660
      %v4662 = vadd.f32 %v4659, %v4660
      %s4663 = scalar_lea.vmem %s10, 256
      %v4664 = vld [vmem:[%s4663] sm:$0xff]
      %v4665 = vld [vmem:[%s4663 + $0x8] sm:$0xff]
      %v4666 = vld [vmem:[%s4663 + $0x10] sm:$0xff]
      %v4667 = vld [vmem:[%s4663 + $0x18] sm:$0xff]
      %v4668 = vld [vmem:[%s4663 + $0x20] sm:$0xff]
      %v4669 = vld [vmem:[%s4663 + $0x28] sm:$0xff]
      %v4670 = vld [vmem:[%s4663 + $0x30] sm:$0xff]
      %v4671 = vld [vmem:[%s4663 + $0x38] sm:$0xff]
      %v4672 = vld [vmem:[%s4663 + $0x40] sm:$0xff]
      %v4673 = vld [vmem:[%s4663 + $0x48] sm:$0xff]
      %v4674 = vld [vmem:[%s4663 + $0x50] sm:$0xff]
      %v4675 = vld [vmem:[%s4663 + $0x58] sm:$0xff]
      %v4676 = vld [vmem:[%s4663 + $0x60] sm:$0xff]
      %v4677 = vld [vmem:[%s4663 + $0x68] sm:$0xff]
      %v4678 = vld [vmem:[%s4663 + $0x70] sm:$0xff]
      %v4679 = vld [vmem:[%s4663 + $0x78] sm:$0xff]
      %v4680 = vld [vmem:[%s4663 + $0x80] sm:$0xff]
      %v4681 = vld [vmem:[%s4663 + $0x88] sm:$0xff]
      %v4682 = vld [vmem:[%s4663 + $0x90] sm:$0xff]
      %v4683 = vld [vmem:[%s4663 + $0x98] sm:$0xff]
      %v4684 = vld [vmem:[%s4663 + $0xa0] sm:$0xff]
      %v4685 = vld [vmem:[%s4663 + $0xa8] sm:$0xff]
      %v4686 = vld [vmem:[%s4663 + $0xb0] sm:$0xff]
      %v4687 = vld [vmem:[%s4663 + $0xb8] sm:$0xff]
      %v4688 = vld [vmem:[%s4663 + $0xc0] sm:$0xff]
      %v4689 = vld [vmem:[%s4663 + $0xc8] sm:$0xff]
      %v4690 = vld [vmem:[%s4663 + $0xd0] sm:$0xff]
      %v4691 = vld [vmem:[%s4663 + $0xd8] sm:$0xff]
      %v4692 = vld [vmem:[%s4663 + $0xe0] sm:$0xff]
      %v4693 = vld [vmem:[%s4663 + $0xe8] sm:$0xff]
      %v4694 = vld [vmem:[%s4663 + $0xf0] sm:$0xff]
      %v4695 = vld [vmem:[%s4663 + $0xf8] sm:$0xff]
      %s4696 = scalar_lea.vmem %s11, 1
      %v4697 = vld [vmem:[%s4696] ss:$2 sm:$0x3]
      %v4699 = vperm.slane %v4697, 0
      %v4700 = vperm.slane %v4697, 1
      %4703 = vmatpush.msra.mxu0 %v4694
      %4704 = vmatpush.msra.mxu0 %v4692
      %4705 = vmatpush.msra.mxu0 %v4690
      %4706 = vmatpush.msra.mxu0 %v4688
      %4707 = vmatpush.msra.mxu0 %v4686
      %4708 = vmatpush.msra.mxu0 %v4684
      %4709 = vmatpush.msra.mxu0 %v4682
      %4710 = vmatpush.msra.mxu0 %v4680
      %4711 = vmatpush.msra.mxu0 %v4678
      %4712 = vmatpush.msra.mxu0 %v4676
      %4713 = vmatpush.msra.mxu0 %v4674
      %4714 = vmatpush.msra.mxu0 %v4672
      %4715 = vmatpush.msra.mxu0 %v4670
      %4716 = vmatpush.msra.mxu0 %v4668
      %4717 = vmatpush.msra.mxu0 %v4666
      %4718 = vmatpush.msra.mxu0 %v4664
      %4719 = vmatmul.f32.gmra.mxu0 %v4661
      %v4720 = vpop.f32.mrf.mxu0
      %v4721 = vadd.f32 %v4699, %v4720
      %4722 = vmatmul.f32.gmra.mxu0 %v4662
      %v4723 = vpop.f32.mrf.mxu0
      %v4724 = vadd.f32 %v4699, %v4723
      %4725 = vdwg.mxu0
      %4726 = vmatpush.msra.mxu0 %v4695
      %4727 = vmatpush.msra.mxu0 %v4693
      %4728 = vmatpush.msra.mxu0 %v4691
      %4729 = vmatpush.msra.mxu0 %v4689
      %4730 = vmatpush.msra.mxu0 %v4687
      %4731 = vmatpush.msra.mxu0 %v4685
      %4732 = vmatpush.msra.mxu0 %v4683
      %4733 = vmatpush.msra.mxu0 %v4681
      %4734 = vmatpush.msra.mxu0 %v4679
      %4735 = vmatpush.msra.mxu0 %v4677
      %4736 = vmatpush.msra.mxu0 %v4675
      %4737 = vmatpush.msra.mxu0 %v4673
      %4738 = vmatpush.msra.mxu0 %v4671
      %4739 = vmatpush.msra.mxu0 %v4669
      %4740 = vmatpush.msra.mxu0 %v4667
      %4741 = vmatpush.msra.mxu0 %v4665
      %4742 = vmatmul.f32.gmra.mxu0 %v4661
      %v4743 = vpop.f32.mrf.mxu0
      %v4744 = vadd.f32 %v4700, %v4743
      %4745 = vmatmul.f32.gmra.mxu0 %v4662
      %v4746 = vpop.f32.mrf.mxu0
      %v4747 = vadd.f32 %v4700, %v4746
      %4748 = vdwg.mxu0
      %v4749 = vmul.f32 %v4721, 0.5
      %v4750 = vmul.f32 %v4744, 0.5
      %v4751 = vmul.f32 %v4724, 0.5
      %v4752 = vmul.f32 %v4747, 0.5
      %v4753 = vmul.f32 %v4721, 0.70710677
      %v4754 = vmul.f32 %v4744, 0.70710677
      %v4755 = vmul.f32 %v4724, 0.70710677
      %v4756 = vmul.f32 %v4747, 0.70710677
      %v4757 = vand.u32 2147483647, %v4753
      %v4758 = vand.u32 2147483647, %v4754
      %v4759 = vand.u32 2147483647, %v4755
      %v4760 = vand.u32 2147483647, %v4756
      %v4761 = vmul.f32 %v4757, 0.3275911
      %v4762 = vmul.f32 %v4758, 0.3275911
      %v4763 = vmul.f32 %v4759, 0.3275911
      %v4764 = vmul.f32 %v4760, 0.3275911
      %v4765 = vadd.f32 %v4761, 1.0
      %v4766 = vadd.f32 %v4762, 1.0
      %v4767 = vadd.f32 %v4763, 1.0
      %v4768 = vadd.f32 %v4764, 1.0
      %v4769 = vrcp.pop %v4765
      %v4770 = vmul.f32 %v4765, %v4769
      %v4771 = vsub.f32 1.0, %v4770
      %v4772 = vmul.f32 %v4769, %v4771
      %v4773 = vadd.f32 %v4769, %v4772
      %vm4774 = vweird.f32 %v4765
      %vm4775 = vweird.f32 %v4769
      %vm4776 = vmor %vm4774, %vm4775
      %v4777 = vsel %vm4776, %v4769, %v4773
      %v4778 = vand.u32 2147483647, %v4765
      %vm4779 = vcmp.eq.f32.partialorder %v4778, 8.507059e+37
      %v4780 = vand.u32 %v4765, 2147483648
      %v4781 = vor.u32 1.1754944e-38, %v4780
      %v4782 = vsel %vm4779, %v4781, %v4777
      %v4783 = vmul.f32 1.0, %v4782
      %v4784 = vrcp.pop %v4766
      %v4785 = vmul.f32 %v4766, %v4784
      %v4786 = vsub.f32 1.0, %v4785
      %v4787 = vmul.f32 %v4784, %v4786
      %v4788 = vadd.f32 %v4784, %v4787
      %vm4789 = vweird.f32 %v4766
      %vm4790 = vweird.f32 %v4784
      %vm4791 = vmor %vm4789, %vm4790
      %v4792 = vsel %vm4791, %v4784, %v4788
      %v4793 = vand.u32 2147483647, %v4766
      %vm4794 = vcmp.eq.f32.partialorder %v4793, 8.507059e+37
      %v4795 = vand.u32 %v4766, 2147483648
      %v4796 = vor.u32 1.1754944e-38, %v4795
      %v4797 = vsel %vm4794, %v4796, %v4792
      %v4798 = vmul.f32 1.0, %v4797
      %v4799 = vrcp.pop %v4767
      %v4800 = vmul.f32 %v4767, %v4799
      %v4801 = vsub.f32 1.0, %v4800
      %v4802 = vmul.f32 %v4799, %v4801
      %v4803 = vadd.f32 %v4799, %v4802
      %vm4804 = vweird.f32 %v4767
      %vm4805 = vweird.f32 %v4799
      %vm4806 = vmor %vm4804, %vm4805
      %v4807 = vsel %vm4806, %v4799, %v4803
      %v4808 = vand.u32 2147483647, %v4767
      %vm4809 = vcmp.eq.f32.partialorder %v4808, 8.507059e+37
      %v4810 = vand.u32 %v4767, 2147483648
      %v4811 = vor.u32 1.1754944e-38, %v4810
      %v4812 = vsel %vm4809, %v4811, %v4807
      %v4813 = vmul.f32 1.0, %v4812
      %v4814 = vrcp.pop %v4768
      %v4815 = vmul.f32 %v4768, %v4814
      %v4816 = vsub.f32 1.0, %v4815
      %v4817 = vmul.f32 %v4814, %v4816
      %v4818 = vadd.f32 %v4814, %v4817
      %vm4819 = vweird.f32 %v4768
      %vm4820 = vweird.f32 %v4814
      %vm4821 = vmor %vm4819, %vm4820
      %v4822 = vsel %vm4821, %v4814, %v4818
      %v4823 = vand.u32 2147483647, %v4768
      %vm4824 = vcmp.eq.f32.partialorder %v4823, 8.507059e+37
      %v4825 = vand.u32 %v4768, 2147483648
      %v4826 = vor.u32 1.1754944e-38, %v4825
      %v4827 = vsel %vm4824, %v4826, %v4822
      %v4828 = vmul.f32 1.0, %v4827
      %v4829 = vmul.f32 %v4783, 1.0614054
      %v4830 = vmul.f32 %v4798, 1.0614054
      %v4831 = vmul.f32 %v4813, 1.0614054
      %v4832 = vmul.f32 %v4828, 1.0614054
      %v4833 = vadd.f32 %v4829, -1.4531521
      %v4834 = vadd.f32 %v4830, -1.4531521
      %v4835 = vadd.f32 %v4831, -1.4531521
      %v4836 = vadd.f32 %v4832, -1.4531521
      %v4837 = vmul.f32 %v4833, %v4783
      %v4838 = vmul.f32 %v4834, %v4798
      %v4839 = vmul.f32 %v4835, %v4813
      %v4840 = vmul.f32 %v4836, %v4828
      %v4841 = vadd.f32 %v4837, 1.4214138
      %v4842 = vadd.f32 %v4838, 1.4214138
      %v4843 = vadd.f32 %v4839, 1.4214138
      %v4844 = vadd.f32 %v4840, 1.4214138
      %v4845 = vmul.f32 %v4841, %v4783
      %v4846 = vmul.f32 %v4842, %v4798
      %v4847 = vmul.f32 %v4843, %v4813
      %v4848 = vmul.f32 %v4844, %v4828
      %v4849 = vadd.f32 %v4845, -0.28449672
      %v4850 = vadd.f32 %v4846, -0.28449672
      %v4851 = vadd.f32 %v4847, -0.28449672
      %v4852 = vadd.f32 %v4848, -0.28449672
      %v4853 = vmul.f32 %v4849, %v4783
      %v4854 = vmul.f32 %v4850, %v4798
      %v4855 = vmul.f32 %v4851, %v4813
      %v4856 = vmul.f32 %v4852, %v4828
      %v4857 = vadd.f32 %v4853, 0.2548296
      %v4858 = vadd.f32 %v4854, 0.2548296
      %v4859 = vadd.f32 %v4855, 0.2548296
      %v4860 = vadd.f32 %v4856, 0.2548296
      %v4861 = vmul.f32 %v4857, %v4783
      %v4862 = vmul.f32 %v4858, %v4798
      %v4863 = vmul.f32 %v4859, %v4813
      %v4864 = vmul.f32 %v4860, %v4828
      %v4865 = vsub.f32 0.0, %v4757
      %v4866 = vsub.f32 0.0, %v4758
      %v4867 = vsub.f32 0.0, %v4759
      %v4868 = vsub.f32 0.0, %v4760
      %v4869 = vmul.f32 %v4865, %v4757
      %v4870 = vmul.f32 %v4866, %v4758
      %v4871 = vmul.f32 %v4867, %v4759
      %v4872 = vmul.f32 %v4868, %v4760
      %v4873 = vmul.f32 %v4869, 1.442695
      %v4874 = vpow.pop %v4873
      %v4875 = vmul.f32 %v4870, 1.442695
      %v4876 = vpow.pop %v4875
      %v4877 = vmul.f32 %v4871, 1.442695
      %v4878 = vpow.pop %v4877
      %v4879 = vmul.f32 %v4872, 1.442695
      %v4880 = vpow.pop %v4879
      %v4881 = vmul.f32 %v4861, %v4874
      %v4882 = vmul.f32 %v4862, %v4876
      %v4883 = vmul.f32 %v4863, %v4878
      %v4884 = vmul.f32 %v4864, %v4880
      %v4885 = vsub.f32 1.0, %v4881
      %v4886 = vsub.f32 1.0, %v4882
      %v4887 = vsub.f32 1.0, %v4883
      %v4888 = vsub.f32 1.0, %v4884
      %vm4889 = vcmp.ge.f32.partialorder %v4753, 0.0
      %vm4890 = vcmp.ge.f32.partialorder %v4754, 0.0
      %vm4891 = vcmp.ge.f32.partialorder %v4755, 0.0
      %vm4892 = vcmp.ge.f32.partialorder %v4756, 0.0
      %v4893 = vsub.f32 0.0, %v4885
      %v4894 = vsub.f32 0.0, %v4886
      %v4895 = vsub.f32 0.0, %v4887
      %v4896 = vsub.f32 0.0, %v4888
      %v4897 = vsel %vm4889, %v4885, %v4893
      %v4898 = vsel %vm4890, %v4886, %v4894
      %v4899 = vsel %vm4891, %v4887, %v4895
      %v4900 = vsel %vm4892, %v4888, %v4896
      %v4901 = vadd.f32 %v4897, 1.0
      %v4902 = vadd.f32 %v4898, 1.0
      %v4903 = vadd.f32 %v4899, 1.0
      %v4904 = vadd.f32 %v4900, 1.0
      %v4905 = vmul.f32 %v4749, %v4901
      %v4906 = vmul.f32 %v4750, %v4902
      %v4907 = vmul.f32 %v4751, %v4903
      %v4908 = vmul.f32 %v4752, %v4904
      %s4909 = scalar_lea.vmem %s12, 256
      %v4910 = vld [vmem:[%s4909] sm:$0xff]
      %v4911 = vld [vmem:[%s4909 + $0x8] sm:$0xff]
      %v4912 = vld [vmem:[%s4909 + $0x10] sm:$0xff]
      %v4913 = vld [vmem:[%s4909 + $0x18] sm:$0xff]
      %v4914 = vld [vmem:[%s4909 + $0x20] sm:$0xff]
      %v4915 = vld [vmem:[%s4909 + $0x28] sm:$0xff]
      %v4916 = vld [vmem:[%s4909 + $0x30] sm:$0xff]
      %v4917 = vld [vmem:[%s4909 + $0x38] sm:$0xff]
      %v4918 = vld [vmem:[%s4909 + $0x40] sm:$0xff]
      %v4919 = vld [vmem:[%s4909 + $0x48] sm:$0xff]
      %v4920 = vld [vmem:[%s4909 + $0x50] sm:$0xff]
      %v4921 = vld [vmem:[%s4909 + $0x58] sm:$0xff]
      %v4922 = vld [vmem:[%s4909 + $0x60] sm:$0xff]
      %v4923 = vld [vmem:[%s4909 + $0x68] sm:$0xff]
      %v4924 = vld [vmem:[%s4909 + $0x70] sm:$0xff]
      %v4925 = vld [vmem:[%s4909 + $0x78] sm:$0xff]
      %v4926 = vld [vmem:[%s4909 + $0x80] sm:$0xff]
      %v4927 = vld [vmem:[%s4909 + $0x88] sm:$0xff]
      %v4928 = vld [vmem:[%s4909 + $0x90] sm:$0xff]
      %v4929 = vld [vmem:[%s4909 + $0x98] sm:$0xff]
      %v4930 = vld [vmem:[%s4909 + $0xa0] sm:$0xff]
      %v4931 = vld [vmem:[%s4909 + $0xa8] sm:$0xff]
      %v4932 = vld [vmem:[%s4909 + $0xb0] sm:$0xff]
      %v4933 = vld [vmem:[%s4909 + $0xb8] sm:$0xff]
      %v4934 = vld [vmem:[%s4909 + $0xc0] sm:$0xff]
      %v4935 = vld [vmem:[%s4909 + $0xc8] sm:$0xff]
      %v4936 = vld [vmem:[%s4909 + $0xd0] sm:$0xff]
      %v4937 = vld [vmem:[%s4909 + $0xd8] sm:$0xff]
      %v4938 = vld [vmem:[%s4909 + $0xe0] sm:$0xff]
      %v4939 = vld [vmem:[%s4909 + $0xe8] sm:$0xff]
      %v4940 = vld [vmem:[%s4909 + $0xf0] sm:$0xff]
      %v4941 = vld [vmem:[%s4909 + $0xf8] sm:$0xff]
      %v4942 = vld [vmem:[%s13 + $0x1] sm:$0x1]
      %v4943 = vperm.slane %v4942, 0
      %4944 = vmatpush.msra.mxu0 %v4925
      %4945 = vmatpush.msra.mxu0 %v4924
      %4946 = vmatpush.msra.mxu0 %v4923
      %4947 = vmatpush.msra.mxu0 %v4922
      %4948 = vmatpush.msra.mxu0 %v4921
      %4949 = vmatpush.msra.mxu0 %v4920
      %4950 = vmatpush.msra.mxu0 %v4919
      %4951 = vmatpush.msra.mxu0 %v4918
      %4952 = vmatpush.msra.mxu0 %v4917
      %4953 = vmatpush.msra.mxu0 %v4916
      %4954 = vmatpush.msra.mxu0 %v4915
      %4955 = vmatpush.msra.mxu0 %v4914
      %4956 = vmatpush.msra.mxu0 %v4913
      %4957 = vmatpush.msra.mxu0 %v4912
      %4958 = vmatpush.msra.mxu0 %v4911
      %4959 = vmatpush.msra.mxu0 %v4910
      %4960 = vmatmul.f32.gmra.mxu0 %v4905
      %v4961 = vpop.f32.mrf.mxu0
      %v4962 = vadd.f32 %v4943, %v4961
      %4963 = vmatmul.f32.gmra.mxu0 %v4907
      %v4964 = vpop.f32.mrf.mxu0
      %v4965 = vadd.f32 %v4943, %v4964
      %4966 = vdwg.mxu0
      %4967 = vmatpush.msra.mxu0 %v4941
      %4968 = vmatpush.msra.mxu0 %v4940
      %4969 = vmatpush.msra.mxu0 %v4939
      %4970 = vmatpush.msra.mxu0 %v4938
      %4971 = vmatpush.msra.mxu0 %v4937
      %4972 = vmatpush.msra.mxu0 %v4936
      %4973 = vmatpush.msra.mxu0 %v4935
      %4974 = vmatpush.msra.mxu0 %v4934
      %4975 = vmatpush.msra.mxu0 %v4933
      %4976 = vmatpush.msra.mxu0 %v4932
      %4977 = vmatpush.msra.mxu0 %v4931
      %4978 = vmatpush.msra.mxu0 %v4930
      %4979 = vmatpush.msra.mxu0 %v4929
      %4980 = vmatpush.msra.mxu0 %v4928
      %4981 = vmatpush.msra.mxu0 %v4927
      %4982 = vmatpush.msra.mxu0 %v4926
      %4983 = vmatmul.f32.gmra.mxu0 %v4906
      %v4984 = vpop.f32.mrf.mxu0
      %v4985 = vadd.f32 %v4962, %v4984
      %4986 = vmatmul.f32.gmra.mxu0 %v4908
      %v4987 = vpop.f32.mrf.mxu0
      %v4988 = vadd.f32 %v4965, %v4987
      %4989 = vdwg.mxu0
      %v4990 = vadd.f32 %v4613, %v4985
      %v4991 = vadd.f32 %v4614, %v4988
      %v4992 = vld [vmem:[%s14] sm:$0x3]
      %v4993 = vld [vmem:[%s15] sm:$0x3]
      %vm4994 = vcmask 1040384
      %v4995 = vsel %vm4994, %v4990, 0.0
      %v4996 = vsel %vm4994, %v4991, 0.0
      %v4997 = vadd.f32 %v4995, %v4996
      %4998 = vadd.xlane.f32.xlu0 %v4997
      %v4999 = vpop.xlane.xlu0 %4998
      %v5000 = vrcp.pop 256.0
      %v5001 = vmul.f32 256.0, %v5000
      %v5002 = vsub.f32 1.0, %v5001
      %v5003 = vmul.f32 %v5000, %v5002
      %v5004 = vadd.f32 %v5000, %v5003
      %vm5005 = vweird.f32 %v5000
      %v5006 = vsel %vm5005, %v5000, %v5004
      %v5007 = vmul.f32 %v4999, %v5006
      %v5008 = vsub.f32 %v4990, %v5007
      %v5009 = vsub.f32 %v4991, %v5007
      %v5010 = vmul.f32 %v5008, %v5008
      %v5011 = vmul.f32 %v5009, %v5009
      %v5012 = vsel %vm4994, %v5010, 0.0
      %v5013 = vsel %vm4994, %v5011, 0.0
      %v5014 = vadd.f32 %v5012, %v5013
      %5015 = vadd.xlane.f32.xlu0 %v5014
      %v5016 = vpop.xlane.xlu0 %5015
      %v5017 = vmul.f32 %v5016, %v5006
      %v5018 = vadd.f32 %v5017, 1e-05
      %v5019 = vrsqrt.pop %v5018
      %v5020 = vmul.f32 %v5019, %v5018
      %v5021 = vmul.f32 %v5020, %v5019
      %v5022 = vmul.f32 0.5, %v5021
      %v5023 = vsub.f32 1.5, %v5022
      %v5024 = vmul.f32 %v5019, %v5023
      %vm5025 = vweird.f32 %v5018
      %vm5026 = vweird.f32 %v5019
      %vm5027 = vmor %vm5025, %vm5026
      %v5028 = vsel %vm5027, %v5019, %v5024
      %v5029 = vmul.f32 %v5008, %v5028
      %v5030 = vmul.f32 %v5009, %v5028
      %v5032 = vperm.slane %v4992, 0
      %v5033 = vperm.slane %v4992, 1
      %v5036 = vmul.f32 %v5029, %v5032
      %v5037 = vmul.f32 %v5030, %v5033
      %v5039 = vperm.slane %v4993, 0
      %v5040 = vperm.slane %v4993, 1
      %v5043 = vadd.f32 %v5036, %v5039
      %v5044 = vadd.f32 %v5037, %v5040
      %v5045 = vld [vmem:[%s16] sm:$0xff]
      %v5046 = vld [vmem:[%s16 + $0x8] sm:$0xff]
      %v5047 = vld [vmem:[%s16 + $0x10] sm:$0xff]
      %v5048 = vld [vmem:[%s16 + $0x18] sm:$0xff]
      %v5049 = vld [vmem:[%s16 + $0x20] sm:$0xff]
      %v5050 = vld [vmem:[%s16 + $0x28] sm:$0xff]
      %v5051 = vld [vmem:[%s16 + $0x30] sm:$0xff]
      %v5052 = vld [vmem:[%s16 + $0x38] sm:$0xff]
      %v5053 = vld [vmem:[%s16 + $0x40] sm:$0xff]
      %v5054 = vld [vmem:[%s16 + $0x48] sm:$0xff]
      %v5055 = vld [vmem:[%s16 + $0x50] sm:$0xff]
      %v5056 = vld [vmem:[%s16 + $0x58] sm:$0xff]
      %v5057 = vld [vmem:[%s16 + $0x60] sm:$0xff]
      %v5058 = vld [vmem:[%s16 + $0x68] sm:$0xff]
      %v5059 = vld [vmem:[%s16 + $0x70] sm:$0xff]
      %v5060 = vld [vmem:[%s16 + $0x78] sm:$0xff]
      %v5061 = vld [vmem:[%s16 + $0x80] sm:$0xff]
      %v5062 = vld [vmem:[%s16 + $0x88] sm:$0xff]
      %v5063 = vld [vmem:[%s16 + $0x90] sm:$0xff]
      %v5064 = vld [vmem:[%s16 + $0x98] sm:$0xff]
      %v5065 = vld [vmem:[%s16 + $0xa0] sm:$0xff]
      %v5066 = vld [vmem:[%s16 + $0xa8] sm:$0xff]
      %v5067 = vld [vmem:[%s16 + $0xb0] sm:$0xff]
      %v5068 = vld [vmem:[%s16 + $0xb8] sm:$0xff]
      %v5069 = vld [vmem:[%s16 + $0xc0] sm:$0xff]
      %v5070 = vld [vmem:[%s16 + $0xc8] sm:$0xff]
      %v5071 = vld [vmem:[%s16 + $0xd0] sm:$0xff]
      %v5072 = vld [vmem:[%s16 + $0xd8] sm:$0xff]
      %v5073 = vld [vmem:[%s16 + $0xe0] sm:$0xff]
      %v5074 = vld [vmem:[%s16 + $0xe8] sm:$0xff]
      %v5075 = vld [vmem:[%s16 + $0xf0] sm:$0xff]
      %v5076 = vld [vmem:[%s16 + $0xf8] sm:$0xff]
      %v5077 = vld [vmem:[%s16 + $0x100] sm:$0xff]
      %v5078 = vld [vmem:[%s16 + $0x108] sm:$0xff]
      %v5079 = vld [vmem:[%s16 + $0x110] sm:$0xff]
      %v5080 = vld [vmem:[%s16 + $0x118] sm:$0xff]
      %v5081 = vld [vmem:[%s16 + $0x120] sm:$0xff]
      %v5082 = vld [vmem:[%s16 + $0x128] sm:$0xff]
      %v5083 = vld [vmem:[%s16 + $0x130] sm:$0xff]
      %v5084 = vld [vmem:[%s16 + $0x138] sm:$0xff]
      %v5085 = vld [vmem:[%s16 + $0x140] sm:$0xff]
      %v5086 = vld [vmem:[%s16 + $0x148] sm:$0xff]
      %v5087 = vld [vmem:[%s16 + $0x150] sm:$0xff]
      %v5088 = vld [vmem:[%s16 + $0x158] sm:$0xff]
      %v5089 = vld [vmem:[%s16 + $0x160] sm:$0xff]
      %v5090 = vld [vmem:[%s16 + $0x168] sm:$0xff]
      %v5091 = vld [vmem:[%s16 + $0x170] sm:$0xff]
      %v5092 = vld [vmem:[%s16 + $0x178] sm:$0xff]
      %v5093 = vld [vmem:[%s16 + $0x180] sm:$0xff]
      %v5094 = vld [vmem:[%s16 + $0x188] sm:$0xff]
      %v5095 = vld [vmem:[%s16 + $0x190] sm:$0xff]
      %v5096 = vld [vmem:[%s16 + $0x198] sm:$0xff]
      %v5097 = vld [vmem:[%s16 + $0x1a0] sm:$0xff]
      %v5098 = vld [vmem:[%s16 + $0x1a8] sm:$0xff]
      %v5099 = vld [vmem:[%s16 + $0x1b0] sm:$0xff]
      %v5100 = vld [vmem:[%s16 + $0x1b8] sm:$0xff]
      %v5101 = vld [vmem:[%s16 + $0x1c0] sm:$0xff]
      %v5102 = vld [vmem:[%s16 + $0x1c8] sm:$0xff]
      %v5103 = vld [vmem:[%s16 + $0x1d0] sm:$0xff]
      %v5104 = vld [vmem:[%s16 + $0x1d8] sm:$0xff]
      %v5105 = vld [vmem:[%s16 + $0x1e0] sm:$0xff]
      %v5106 = vld [vmem:[%s16 + $0x1e8] sm:$0xff]
      %v5107 = vld [vmem:[%s16 + $0x1f0] sm:$0xff]
      %v5108 = vld [vmem:[%s16 + $0x1f8] sm:$0xff]
      %v5109 = vld [vmem:[%s17] sm:$0x3]
      %v5111 = vperm.slane %v5109, 0
      %v5112 = vperm.slane %v5109, 1
      %5115 = vmatpush.msra.mxu0 %v5075
      %5116 = vmatpush.msra.mxu0 %v5073
      %5117 = vmatpush.msra.mxu0 %v5071
      %5118 = vmatpush.msra.mxu0 %v5069
      %5119 = vmatpush.msra.mxu0 %v5067
      %5120 = vmatpush.msra.mxu0 %v5065
      %5121 = vmatpush.msra.mxu0 %v5063
      %5122 = vmatpush.msra.mxu0 %v5061
      %5123 = vmatpush.msra.mxu0 %v5059
      %5124 = vmatpush.msra.mxu0 %v5057
      %5125 = vmatpush.msra.mxu0 %v5055
      %5126 = vmatpush.msra.mxu0 %v5053
      %5127 = vmatpush.msra.mxu0 %v5051
      %5128 = vmatpush.msra.mxu0 %v5049
      %5129 = vmatpush.msra.mxu0 %v5047
      %5130 = vmatpush.msra.mxu0 %v5045
      %5131 = vmatmul.f32.gmra.mxu0 %v5043
      %v5132 = vpop.f32.mrf.mxu0
      %v5133 = vadd.f32 %v5111, %v5132
      %5134 = vdwg.mxu0
      %5135 = vmatpush.msra.mxu0 %v5107
      %5136 = vmatpush.msra.mxu0 %v5105
      %5137 = vmatpush.msra.mxu0 %v5103
      %5138 = vmatpush.msra.mxu0 %v5101
      %5139 = vmatpush.msra.mxu0 %v5099
      %5140 = vmatpush.msra.mxu0 %v5097
      %5141 = vmatpush.msra.mxu0 %v5095
      %5142 = vmatpush.msra.mxu0 %v5093
      %5143 = vmatpush.msra.mxu0 %v5091
      %5144 = vmatpush.msra.mxu0 %v5089
      %5145 = vmatpush.msra.mxu0 %v5087
      %5146 = vmatpush.msra.mxu0 %v5085
      %5147 = vmatpush.msra.mxu0 %v5083
      %5148 = vmatpush.msra.mxu0 %v5081
      %5149 = vmatpush.msra.mxu0 %v5079
      %5150 = vmatpush.msra.mxu0 %v5077
      %5151 = vmatmul.f32.gmra.mxu0 %v5044
      %v5152 = vpop.f32.mrf.mxu0
      %v5153 = vadd.f32 %v5133, %v5152
      %5154 = vdwg.mxu0
      %5155 = vmatpush.msra.mxu0 %v5076
      %5156 = vmatpush.msra.mxu0 %v5074
      %5157 = vmatpush.msra.mxu0 %v5072
      %5158 = vmatpush.msra.mxu0 %v5070
      %5159 = vmatpush.msra.mxu0 %v5068
      %5160 = vmatpush.msra.mxu0 %v5066
      %5161 = vmatpush.msra.mxu0 %v5064
      %5162 = vmatpush.msra.mxu0 %v5062
      %5163 = vmatpush.msra.mxu0 %v5060
      %5164 = vmatpush.msra.mxu0 %v5058
      %5165 = vmatpush.msra.mxu0 %v5056
      %5166 = vmatpush.msra.mxu0 %v5054
      %5167 = vmatpush.msra.mxu0 %v5052
      %5168 = vmatpush.msra.mxu0 %v5050
      %5169 = vmatpush.msra.mxu0 %v5048
      %5170 = vmatpush.msra.mxu0 %v5046
      %5171 = vmatmul.f32.gmra.mxu0 %v5043
      %v5172 = vpop.f32.mrf.mxu0
      %v5173 = vadd.f32 %v5112, %v5172
      %5174 = vdwg.mxu0
      %5175 = vmatpush.msra.mxu0 %v5108
      %5176 = vmatpush.msra.mxu0 %v5106
      %5177 = vmatpush.msra.mxu0 %v5104
      %5178 = vmatpush.msra.mxu0 %v5102
      %5179 = vmatpush.msra.mxu0 %v5100
      %5180 = vmatpush.msra.mxu0 %v5098
      %5181 = vmatpush.msra.mxu0 %v5096
      %5182 = vmatpush.msra.mxu0 %v5094
      %5183 = vmatpush.msra.mxu0 %v5092
      %5184 = vmatpush.msra.mxu0 %v5090
      %5185 = vmatpush.msra.mxu0 %v5088
      %5186 = vmatpush.msra.mxu0 %v5086
      %5187 = vmatpush.msra.mxu0 %v5084
      %5188 = vmatpush.msra.mxu0 %v5082
      %5189 = vmatpush.msra.mxu0 %v5080
      %5190 = vmatpush.msra.mxu0 %v5078
      %5191 = vmatmul.f32.gmra.mxu0 %v5044
      %v5192 = vpop.f32.mrf.mxu0
      %v5193 = vadd.f32 %v5173, %v5192
      %5194 = vdwg.mxu0
      %v5195 = vmax.f32 %v5153, 0.0
      %v5196 = vmax.f32 %v5193, 0.0
      %v5197 = vld [vmem:[%s18] sm:$0xff]
      %v5198 = vld [vmem:[%s18 + $0x8] sm:$0xff]
      %v5199 = vld [vmem:[%s18 + $0x10] sm:$0xff]
      %v5200 = vld [vmem:[%s18 + $0x18] sm:$0xff]
      %v5201 = vld [vmem:[%s18 + $0x20] sm:$0xff]
      %v5202 = vld [vmem:[%s18 + $0x28] sm:$0xff]
      %v5203 = vld [vmem:[%s18 + $0x30] sm:$0xff]
      %v5204 = vld [vmem:[%s18 + $0x38] sm:$0xff]
      %v5205 = vld [vmem:[%s18 + $0x40] sm:$0xff]
      %v5206 = vld [vmem:[%s18 + $0x48] sm:$0xff]
      %v5207 = vld [vmem:[%s18 + $0x50] sm:$0xff]
      %v5208 = vld [vmem:[%s18 + $0x58] sm:$0xff]
      %v5209 = vld [vmem:[%s18 + $0x60] sm:$0xff]
      %v5210 = vld [vmem:[%s18 + $0x68] sm:$0xff]
      %v5211 = vld [vmem:[%s18 + $0x70] sm:$0xff]
      %v5212 = vld [vmem:[%s18 + $0x78] sm:$0xff]
      %v5213 = vld [vmem:[%s18 + $0x80] sm:$0xff]
      %v5214 = vld [vmem:[%s18 + $0x88] sm:$0xff]
      %v5215 = vld [vmem:[%s18 + $0x90] sm:$0xff]
      %v5216 = vld [vmem:[%s18 + $0x98] sm:$0xff]
      %v5217 = vld [vmem:[%s18 + $0xa0] sm:$0xff]
      %v5218 = vld [vmem:[%s18 + $0xa8] sm:$0xff]
      %v5219 = vld [vmem:[%s18 + $0xb0] sm:$0xff]
      %v5220 = vld [vmem:[%s18 + $0xb8] sm:$0xff]
      %v5221 = vld [vmem:[%s18 + $0xc0] sm:$0xff]
      %v5222 = vld [vmem:[%s18 + $0xc8] sm:$0xff]
      %v5223 = vld [vmem:[%s18 + $0xd0] sm:$0xff]
      %v5224 = vld [vmem:[%s18 + $0xd8] sm:$0xff]
      %v5225 = vld [vmem:[%s18 + $0xe0] sm:$0xff]
      %v5226 = vld [vmem:[%s18 + $0xe8] sm:$0xff]
      %v5227 = vld [vmem:[%s18 + $0xf0] sm:$0xff]
      %v5228 = vld [vmem:[%s18 + $0xf8] sm:$0xff]
      %v5229 = vld [vmem:[%s19] sm:$0x1]
      %5230 = vmatpush.msra.mxu0 %v5212
      %5231 = vmatpush.msra.mxu0 %v5211
      %5232 = vmatpush.msra.mxu0 %v5210
      %5233 = vmatpush.msra.mxu0 %v5209
      %5234 = vmatpush.msra.mxu0 %v5208
      %5235 = vmatpush.msra.mxu0 %v5207
      %5236 = vmatpush.msra.mxu0 %v5206
      %5237 = vmatpush.msra.mxu0 %v5205
      %5238 = vmatpush.msra.mxu0 %v5204
      %5239 = vmatpush.msra.mxu0 %v5203
      %5240 = vmatpush.msra.mxu0 %v5202
      %5241 = vmatpush.msra.mxu0 %v5201
      %5242 = vmatpush.msra.mxu0 %v5200
      %5243 = vmatpush.msra.mxu0 %v5199
      %5244 = vmatpush.msra.mxu0 %v5198
      %5245 = vmatpush.msra.mxu0 %v5197
      %5246 = vmatmul.f32.gmra.mxu0 %v5195
      %v5247 = vpop.f32.mrf.mxu0
      %v5248 = vadd.f32 %v5229, %v5247
      %5249 = vdwg.mxu0
      %5250 = vmatpush.msra.mxu0 %v5228
      %5251 = vmatpush.msra.mxu0 %v5227
      %5252 = vmatpush.msra.mxu0 %v5226
      %5253 = vmatpush.msra.mxu0 %v5225
      %5254 = vmatpush.msra.mxu0 %v5224
      %5255 = vmatpush.msra.mxu0 %v5223
      %5256 = vmatpush.msra.mxu0 %v5222
      %5257 = vmatpush.msra.mxu0 %v5221
      %5258 = vmatpush.msra.mxu0 %v5220
      %5259 = vmatpush.msra.mxu0 %v5219
      %5260 = vmatpush.msra.mxu0 %v5218
      %5261 = vmatpush.msra.mxu0 %v5217
      %5262 = vmatpush.msra.mxu0 %v5216
      %5263 = vmatpush.msra.mxu0 %v5215
      %5264 = vmatpush.msra.mxu0 %v5214
      %5265 = vmatpush.msra.mxu0 %v5213
      %5266 = vmatmul.f32.gmra.mxu0 %v5196
      %v5267 = vpop.f32.mrf.mxu0
      %v5268 = vadd.f32 %v5248, %v5267
      %5269 = vdwg.mxu0
      %v5270 = vsub.f32 0.0, %v5268
      %v5271 = vmul.f32 %v5270, 1.442695
      %v5272 = vpow.pop %v5271
      %v5273 = vadd.f32 %v5272, 1.0
      %v5274 = vrcp.pop %v5273
      %v5275 = vmul.f32 %v5273, %v5274
      %v5276 = vsub.f32 1.0, %v5275
      %v5277 = vmul.f32 %v5274, %v5276
      %v5278 = vadd.f32 %v5274, %v5277
      %vm5279 = vweird.f32 %v5273
      %vm5280 = vweird.f32 %v5274
      %vm5281 = vmor %vm5279, %vm5280
      %v5282 = vsel %vm5281, %v5274, %v5278
      %v5283 = vand.u32 2147483647, %v5273
      %vm5284 = vcmp.eq.f32.partialorder %v5283, 8.507059e+37
      %v5285 = vand.u32 %v5273, 2147483648
      %v5286 = vor.u32 1.1754944e-38, %v5285
      %v5287 = vsel %vm5284, %v5286, %v5282
      %v5288 = vmul.f32 1.0, %v5287
      %5289 = vst [vmem:[%s625] sm:$0x1] %v5288
      %p5290 = scmp.lt.s32.totalorder %s31, 1
      %s5291 = scalar_select %p5290, %s31, 1
      %s5292 = scalar_lea.vmem %s20, %s5291
      // Predicated region
      $region101: #{siamese_forward.1} parent=99 // pred_check
        %p5293 = pneg %p474
      $region102: #{siamese_forward.1} parent=99 // pred_check_branch
        %5295 = sbr.rel (%p5293) target = $region104
      $region103: #{siamese_forward.1} parent=99 // pred_region
        _
      $region104: #{siamese_forward.1} parent=99 // pred_fallthru
        _
    $region100: #{siamese_forward.1} parent=5 // pred_fallthru
      _
    %p5296 = scmp.le.s32.totalorder 2, %s26
    // Predicated region
    $region105: #{siamese_forward.1} parent=5 // pred_check
      %p5297 = pneg %p5296
    $region106: #{siamese_forward.1} parent=5 // pred_check_branch
      %5299 = sbr.rel (%p5297) target = $region108
    $region107: #{siamese_forward.1} parent=5 // pred_region
      %s5300 = ssub.s32 %s26, 2
      // Predicated region
      $region109: #{siamese_forward.1} parent=107 // pred_check
        %p5301 = pneg %p480
      $region110: #{siamese_forward.1} parent=107 // pred_check_branch
        %5303 = sbr.rel (%p5301) target = $region112
      $region111: #{siamese_forward.1} parent=107 // pred_region
        %p5304 = scmp.lt.s32.totalorder %s32, 1
        %s5305 = scalar_select %p5304, %s32, 1
        %s5306 = scalar_lea.vmem %s20, %s5305
      $region112: #{siamese_forward.1} parent=107 // pred_fallthru
        _
    $region108: #{siamese_forward.1} parent=5 // pred_fallthru
      _
  $region6: #{siamese_forward.1} parent=0 // loop_footer
    %s30 = sadd.s32 1, %s26
  $region7: #{siamese_forward.1} parent=0 // loop_footer_branch
    %25 = sbr.rel target = $region3
  $region8: #{siamese_forward.1} parent=0 // loop_exit
    _

</llo_original>
